<compile_context>
chip_gen: v6e
topology: v6e:2x2x1
jax: 0.10.0
libtpu: 0.0.40
codegen_flags: <defaults>
</compile_context>

<pallas_src>
import functools
import math

import jax
import jax.numpy as jnp
from jax.experimental import pallas as pl
from jax.experimental.pallas import tpu as pltpu

EPS = 1e-5  # PyTorch BatchNorm2d default


def _round_up(x, m):
    return (x + m - 1) // m * m


def _cdiv(a, b):
    return -(-a // b)


# ----------------------------------------------------------------------------
# Pallas kernels
# ----------------------------------------------------------------------------
def _conv_relu_tile(x_ref, w_ref, b_ref, *, cin, c_big, keff, tr, c_dim, off):
    """Fused sub-pixel ConvTranspose + bias + ReLU for one (batch, row-block) tile.

    x_ref: (1, cin, Hp, Wp) zero-padded NCHW input (whole image resident in VMEM).
    w_ref: (keff*keff, c_big, cin) per-tap weights (structural zeros where a phase
           has no tap).
    b_ref: (c_big, 1) bias replicated over the s*s phases.
    Returns y: (c_big, tr*c_dim) f32, lane-dense over the flattened (row, col) axis.
    """
    t = pl.program_id(1)
    tile = tr * c_dim
    # Row band (with keff-1 halo rows) for this tile; VMEM-local slicing replaces the
    # HBM-materialized im2col of the previous version.
    band = x_ref[0, :, pl.ds(off + t * tr, tr + keff - 1), :]     # (cin, tr+keff-1, Wp)
    acc = jnp.zeros((c_big, tile), jnp.float32)
    for idx in range(keff * keff):
        i, j = divmod(idx, keff)
        win = band[:, i:i + tr, off + j:off + j + c_dim]          # (cin, tr, c_dim)
        acc = acc + jnp.dot(w_ref[idx], win.reshape(cin, tile),
                            preferred_element_type=jnp.float32)
    return jnp.maximum(acc + b_ref[...], 0.0)


def _stats_kernel(x_ref, w_ref, b_ref, sum_ref, sumsq_ref, *, cin, c_big, keff, tr,
                  c_dim, off):
    """Pass 1: per-(big-)channel sum / sum-of-squares, accumulated per batch element."""
    @pl.when(pl.program_id(1) == 0)
    def _init():
        sum_ref[...] = jnp.zeros_like(sum_ref)
        sumsq_ref[...] = jnp.zeros_like(sumsq_ref)

    y = _conv_relu_tile(x_ref, w_ref, b_ref, cin=cin, c_big=c_big, keff=keff, tr=tr,
                        c_dim=c_dim, off=off)
    tile = tr * c_dim
    # Per-lane partial sums (pure VPU adds, no in-loop cross-lane reduce / no mask);
    # the single 128-lane reduction happens once in the wrapper.
    ps = jnp.zeros((c_big, 128), jnp.float32)
    pss = jnp.zeros((c_big, 128), jnp.float32)
    for kc in range(tile // 128):
        blk = y[:, kc * 128:(kc + 1) * 128]
        ps = ps + blk
        pss = pss + blk * blk
    sum_ref[...] += ps[None]
    sumsq_ref[...] += pss[None]


def _apply_kernel(x_ref, w_ref, b_ref, scale_ref, shift_ref, o_ref, *, cin, c_big,
                  keff, tr, c_dim, off):
    """Pass 2: recompute conv+bias+ReLU and apply the affine BN; lane-dense store."""
    y = _conv_relu_tile(x_ref, w_ref, b_ref, cin=cin, c_big=c_big, keff=keff, tr=tr,
                        c_dim=c_dim, off=off)
    o_ref[...] = (y * scale_ref[...] + shift_ref[...])[None]


# ----------------------------------------------------------------------------
# ConvTransposeBlock forward
# ----------------------------------------------------------------------------
@functools.partial(jax.jit, static_argnames=("stride", "padding"))
def conv_transpose_block(x, w_t, bias, gamma, beta, *, stride, padding):
    """x: (N, Cin, H, W) NCHW.  w_t: (Cin, Cout, K, K) (PyTorch ConvTranspose2d layout)."""
    n, cin, h, w_in = x.shape
    _, cout, k, _ = w_t.shape
    s, p = stride, padding

    oh = (h - 1) * s - 2 * p + k
    ow = (w_in - 1) * s - 2 * p + k
    if oh % s != 0 or ow % s != 0:
        # TODO(synk): (K - 2*p) % s != 0 remainders need per-phase masking; not needed
        #   for this module's upsampling configs.
        raise NotImplementedError("requires (K - 2*padding) % stride == 0")
    r_dim, c_dim = oh // s, ow // s

    # Sub-pixel decomposition: out[n,co,s*r+ph,s*c+pw] =
    #   bias[co] + sum_{d,dw,ci} x[n,ci,r+d,c+dw] * W[ci,co, ph+p-s*d, pw+p-s*dw]
    taps = sorted({(ph + p - kh) // s
                   for ph in range(s) for kh in range(k) if (ph + p - kh) % s == 0})
    dmin, dmax = taps[0], taps[-1]
    keff = dmax - dmin + 1
    c_big = s * s * cout

    # --- row-tile sizing: lane-dense tiles (tr*c_dim % 128 == 0), VMEM-budget aware,
    #     minimal padding, >= 2 program instances when possible.
    g = 128 // math.gcd(c_dim, 128)
    r0 = _round_up(r_dim, g)
    pad_lo = max(0, -dmin)
    wp = pad_lo + w_in + max(0, (c_dim - 1) + dmax - (w_in - 1))
    hp_est = pad_lo + h + max(0, (r0 - 1) + dmax - (h - 1))
    vmem_budget = 24 * 1024 * 1024
    fixed = (2 * cin * hp_est * wp * 4
             + 2 * keff * keff * _round_up(c_big, 8) * _round_up(cin, 128) * 4)
    per_row = 6 * c_big * c_dim * 4 + cin * wp * 4
    tr_cap = max(g, (vmem_budget - fixed) // per_row // g * g)
    num_tiles = _cdiv(r0, tr_cap)
    if n * num_tiles < 2 and r0 >= 2 * g:     # keep both v7x TensorCores busy
        num_tiles = 2
    tr = _round_up(_cdiv(r0, num_tiles), g)
    r_pad = tr * num_tiles
    r_extra = r_pad - r_dim
    tile = tr * c_dim

    pad_hi_h = max(0, (r_pad - 1) + dmax - (h - 1))
    pad_hi_w = max(0, (c_dim - 1) + dmax - (w_in - 1))
    hp = pad_lo + h + pad_hi_h
    off = dmin + pad_lo                        # >= 0

    # --- the only wrapper-side data prep: zero-pad the NCHW input (no im2col).
    x_pad = jnp.pad(x.astype(jnp.float32),
                    ((0, 0), (0, 0), (pad_lo, pad_hi_h), (pad_lo, pad_hi_w)))

    # --- per-tap weights (keff*keff, c_big, cin); rows ordered (ph, pw, co).
    w_f32 = w_t.astype(jnp.float32)
    w_taps = jnp.zeros((keff * keff, c_big, cin), jnp.float32)
    for ph in range(s):
        for i in range(keff):
            kh = ph + p - s * (i + dmin)
            if not 0 <= kh < k:
                continue
            for pw_ in range(s):
                for j in range(keff):
                    kw = pw_ + p - s * (j + dmin)
                    if not 0 <= kw < k:
                        continue
                    row = (ph * s + pw_) * cout
                    w_taps = w_taps.at[i * keff + j, row:row + cout, :].set(
                        w_f32[:, :, kh, kw].T)

    bias_big = jnp.tile(bias.astype(jnp.float32), s * s).reshape(c_big, 1)

    kern_consts = dict(cin=cin, c_big=c_big, keff=keff, tr=tr, c_dim=c_dim, off=off)
    x_spec = pl.BlockSpec((1, cin, hp, wp), lambda nn, tt: (nn, 0, 0, 0))
    w_spec = pl.BlockSpec((keff * keff, c_big, cin), lambda nn, tt: (0, 0, 0))
    vec_spec = pl.BlockSpec((c_big, 1), lambda nn, tt: (0, 0))

    # --- pass 1: exact per-channel sum / sum-of-squares (per-batch accumulators).
    sum_out, sumsq_out = pl.pallas_call(
        functools.partial(_stats_kernel, **kern_consts),
        grid=(n, num_tiles),
        in_specs=[x_spec, w_spec, vec_spec],
        out_specs=[pl.BlockSpec((1, c_big, 128), lambda nn, tt: (nn, 0, 0)),
                   pl.BlockSpec((1, c_big, 128), lambda nn, tt: (nn, 0, 0))],
        out_shape=[jax.ShapeDtypeStruct((n, c_big, 128), jnp.float32),
                   jax.ShapeDtypeStruct((n, c_big, 128), jnp.float32)],
        compiler_params=pltpu.CompilerParams(
            dimension_semantics=("parallel", "arbitrary"),
            vmem_limit_bytes=32 * 1024 * 1024),
    )(x_pad, w_taps, bias_big)

    # --- finalize BN stats: fold lanes/batches, correct padded rows, fold phases.
    sums_big = jnp.sum(sum_out, axis=(0, 2))
    sumsqs_big = jnp.sum(sumsq_out, axis=(0, 2))
    if r_extra > 0:
        # Padded low-res rows see all-zero input -> y = relu(bias); subtract exactly.
        pad_cnt = float(n * r_extra * c_dim)
        rb = jnp.maximum(bias_big[:, 0], 0.0)
        sums_big = sums_big - pad_cnt * rb
        sumsqs_big = sumsqs_big - pad_cnt * rb * rb
    sums = sums_big.reshape(s * s, cout).sum(axis=0)
    sumsqs = sumsqs_big.reshape(s * s, cout).sum(axis=0)
    count = n * oh * ow
    mean = sums / count
    # TODO(synk): for very large N*OH*OW use a shifted/compensated sum-of-squares;
    #   E[x^2]-E[x]^2 can cancel.  Clamp guards tiny negative values.
    var = jnp.maximum(sumsqs / count - mean * mean, 0.0)
    inv = jax.lax.rsqrt(var + EPS)
    scale = gamma.astype(jnp.float32) * inv
    shift = beta.astype(jnp.float32) - mean * scale
    scale_big = jnp.tile(scale, s * s).reshape(c_big, 1)
    shift_big = jnp.tile(shift, s * s).reshape(c_big, 1)

    # --- pass 2: recompute epilogue + affine BN; lane-dense (c_big, tile) stores.
    out_t = pl.pallas_call(
        functools.partial(_apply_kernel, **kern_consts),
        grid=(n, num_tiles),
        in_specs=[x_spec, w_spec, vec_spec, vec_spec, vec_spec],
        out_specs=pl.BlockSpec((1, c_big, tile), lambda nn, tt: (nn, 0, tt)),
        out_shape=jax.ShapeDtypeStruct((n, c_big, r_pad * c_dim), jnp.float32),
        compiler_params=pltpu.CompilerParams(
            dimension_semantics=("parallel", "parallel"),
            vmem_limit_bytes=32 * 1024 * 1024),
    )(x_pad, w_taps, bias_big, scale_big, shift_big)

    # --- phase interleave (pixel shuffle) back to NCHW.
    out6 = out_t[:, :, :r_dim * c_dim].reshape(n, s, s, cout, r_dim, c_dim)
    return jnp.transpose(out6, (0, 3, 4, 1, 5, 2)).reshape(n, cout, oh, ow)


# ----------------------------------------------------------------------------
# Pure-JAX reference (for verification)
# ----------------------------------------------------------------------------
def reference(x, w_t, bias, gamma, beta, *, stride, padding):
    cin, cout, k, _ = w_t.shape
    q = k - 1 - padding
    w_oihw = jnp.transpose(w_t[:, :, ::-1, ::-1], (1, 0, 2, 3))  # (Cout, Cin, K, K)
    y = jax.lax.conv_general_dilated(
        x, w_oihw, window_strides=(1, 1),
        padding=[(q, q), (q, q)], lhs_dilation=(stride, stride),
        dimension_numbers=("NCHW", "OIHW", "NCHW"),
        precision=jax.lax.Precision.HIGHEST,
    ) + bias.reshape(1, cout, 1, 1)
    y = jnp.maximum(y, 0.0)
    mean = y.mean(axis=(0, 2, 3), keepdims=True)
    var = ((y - mean) ** 2).mean(axis=(0, 2, 3), keepdims=True)
    return (y - mean) / jnp.sqrt(var + EPS) * gamma.reshape(1, cout, 1, 1) \
        + beta.reshape(1, cout, 1, 1)


if __name__ == "__main__":
    # ConvTransposeBlock(in_channels=4, out_channels=8, kernel_size=4, stride=2, padding=1)
    N, CIN, H, W = 2, 4, 16, 16
    COUT, K, STRIDE, PAD = 8, 4, 2, 1

    key = jax.random.PRNGKey(0)
    kx, kw, kb, kg, kbeta = jax.random.split(key, 5)
    x = jax.random.normal(kx, (N, CIN, H, W), jnp.float32)
    w_t = jax.random.normal(kw, (CIN, COUT, K, K), jnp.float32) * 0.1   # (Cin, Cout, K, K)
    bias = jax.random.normal(kb, (COUT,), jnp.float32) * 0.1
    gamma = 1.0 + 0.1 * jax.random.normal(kg, (COUT,), jnp.float32)
    beta = 0.1 * jax.random.normal(kbeta, (COUT,), jnp.float32)

    out = conv_transpose_block(x, w_t, bias, gamma, beta, stride=STRIDE, padding=PAD)
    out = jax.block_until_ready(out)

    ref = reference(x, w_t, bias, gamma, beta, stride=STRIDE, padding=PAD)
    OH = (H - 1) * STRIDE - 2 * PAD + K
    OW = (W - 1) * STRIDE - 2 * PAD + K
    assert out.shape == (N, COUT, OH, OW), out.shape
    max_err = float(jnp.max(jnp.abs(out - ref)))
    # f32 everywhere; tolerance allows for MXU f32 matmul passes on real hardware.
    assert max_err < 5e-3, max_err

    print("KERNEL_OK")
</pallas_src>

<mosaic_0001>
module attributes {stable_mosaic.version = 11 : i64} {
  func.func @_apply_kernel(%arg0: i32, %arg1: i32, %arg2: memref<1x4x18x18xf32, #tpu.memory_space<vmem>>, %arg3: memref<9x32x4xf32, #tpu.memory_space<vmem>>, %arg4: memref<32x1xf32, #tpu.memory_space<vmem>>, %arg5: memref<32x1xf32, #tpu.memory_space<vmem>>, %arg6: memref<32x1xf32, #tpu.memory_space<vmem>>, %arg7: memref<1x32x256xf32, #tpu.memory_space<vmem>>) attributes {dimension_semantics = [#tpu.dimension_semantics<parallel>, #tpu.dimension_semantics<parallel>], iteration_bounds = array<i64: 2, 1>, scalar_prefetch = 0 : i64, scratch_operands = 0 : i64, tpu.core_type = #tpu.core_type<tc>, window_params = [{transform_indices = @transform_0, window_bounds = array<i64: 1, 4, 18, 18>}, {pipeline_mode = #tpu.pipeline_mode<synchronous>, transform_indices = @transform_1, window_bounds = array<i64: 9, 32, 4>}, {pipeline_mode = #tpu.pipeline_mode<synchronous>, transform_indices = @transform_2, window_bounds = array<i64: 32, 1>}, {pipeline_mode = #tpu.pipeline_mode<synchronous>, transform_indices = @transform_3, window_bounds = array<i64: 32, 1>}, {pipeline_mode = #tpu.pipeline_mode<synchronous>, transform_indices = @transform_4, window_bounds = array<i64: 32, 1>}, {transform_indices = @transform_5, window_bounds = array<i64: 1, 32, 256>}]} {
    %c16_i32 = arith.constant 16 : i32
    %0 = arith.muli %arg1, %c16_i32 : i32
    %c0_i32 = arith.constant 0 : i32
    %1 = arith.addi %c0_i32, %0 : i32
    %c0 = arith.constant 0 : index
    %c0_0 = arith.constant 0 : index
    %2 = arith.index_cast %1 : i32 to index
    %c0_1 = arith.constant 0 : index
    %3 = vector.load %arg2[%c0, %c0_0, %2, %c0_1] : memref<1x4x18x18xf32, #tpu.memory_space<vmem>>, vector<1x4x18x18xf32>
    %4 = vector.shape_cast %3 : vector<1x4x18x18xf32> to vector<4x18x18xf32>
    %cst = arith.constant 0.000000e+00 : f32
    %5 = vector.broadcast %cst : f32 to vector<32x256xf32>
    %6 = vector.extract_strided_slice %4 {offsets = [0, 0, 0], sizes = [4, 16, 16], strides = [1, 1, 1]} : vector<4x18x18xf32> to vector<4x16x16xf32>
    %c0_2 = arith.constant 0 : index
    %c0_3 = arith.constant 0 : index
    %c0_4 = arith.constant 0 : index
    %7 = vector.load %arg3[%c0_2, %c0_3, %c0_4] : memref<9x32x4xf32, #tpu.memory_space<vmem>>, vector<1x32x4xf32>
    %8 = vector.shape_cast %7 : vector<1x32x4xf32> to vector<32x4xf32>
    %9 = vector.shape_cast %6 : vector<4x16x16xf32> to vector<4x256xf32>
    %cst_5 = arith.constant dense<0.000000e+00> : vector<32x256xf32>
    %10 = tpu.matmul %8, %9, %cst_5 {dimension_numbers = #tpu.dot_dimension_numbers<[1], [0], [0], [1], [0, 0, 1, 1], [], []>} : vector<32x4xf32>, vector<4x256xf32>, vector<32x256xf32> -> vector<32x256xf32>
    %11 = arith.addf %5, %10 : vector<32x256xf32>
    %12 = vector.extract_strided_slice %4 {offsets = [0, 0, 1], sizes = [4, 16, 16], strides = [1, 1, 1]} : vector<4x18x18xf32> to vector<4x16x16xf32>
    %c1 = arith.constant 1 : index
    %c0_6 = arith.constant 0 : index
    %c0_7 = arith.constant 0 : index
    %13 = vector.load %arg3[%c1, %c0_6, %c0_7] : memref<9x32x4xf32, #tpu.memory_space<vmem>>, vector<1x32x4xf32>
    %14 = vector.shape_cast %13 : vector<1x32x4xf32> to vector<32x4xf32>
    %15 = vector.shape_cast %12 : vector<4x16x16xf32> to vector<4x256xf32>
    %cst_8 = arith.constant dense<0.000000e+00> : vector<32x256xf32>
    %16 = tpu.matmul %14, %15, %cst_8 {dimension_numbers = #tpu.dot_dimension_numbers<[1], [0], [0], [1], [0, 0, 1, 1], [], []>} : vector<32x4xf32>, vector<4x256xf32>, vector<32x256xf32> -> vector<32x256xf32>
    %17 = arith.addf %11, %16 : vector<32x256xf32>
    %18 = vector.extract_strided_slice %4 {offsets = [0, 0, 2], sizes = [4, 16, 16], strides = [1, 1, 1]} : vector<4x18x18xf32> to vector<4x16x16xf32>
    %c2 = arith.constant 2 : index
    %c0_9 = arith.constant 0 : index
    %c0_10 = arith.constant 0 : index
    %19 = vector.load %arg3[%c2, %c0_9, %c0_10] : memref<9x32x4xf32, #tpu.memory_space<vmem>>, vector<1x32x4xf32>
    %20 = vector.shape_cast %19 : vector<1x32x4xf32> to vector<32x4xf32>
    %21 = vector.shape_cast %18 : vector<4x16x16xf32> to vector<4x256xf32>
    %cst_11 = arith.constant dense<0.000000e+00> : vector<32x256xf32>
    %22 = tpu.matmul %20, %21, %cst_11 {dimension_numbers = #tpu.dot_dimension_numbers<[1], [0], [0], [1], [0, 0, 1, 1], [], []>} : vector<32x4xf32>, vector<4x256xf32>, vector<32x256xf32> -> vector<32x256xf32>
    %23 = arith.addf %17, %22 : vector<32x256xf32>
    %24 = vector.extract_strided_slice %4 {offsets = [0, 1, 0], sizes = [4, 16, 16], strides = [1, 1, 1]} : vector<4x18x18xf32> to vector<4x16x16xf32>
    %c3 = arith.constant 3 : index
    %c0_12 = arith.constant 0 : index
    %c0_13 = arith.constant 0 : index
    %25 = vector.load %arg3[%c3, %c0_12, %c0_13] : memref<9x32x4xf32, #tpu.memory_space<vmem>>, vector<1x32x4xf32>
    %26 = vector.shape_cast %25 : vector<1x32x4xf32> to vector<32x4xf32>
    %27 = vector.shape_cast %24 : vector<4x16x16xf32> to vector<4x256xf32>
    %cst_14 = arith.constant dense<0.000000e+00> : vector<32x256xf32>
    %28 = tpu.matmul %26, %27, %cst_14 {dimension_numbers = #tpu.dot_dimension_numbers<[1], [0], [0], [1], [0, 0, 1, 1], [], []>} : vector<32x4xf32>, vector<4x256xf32>, vector<32x256xf32> -> vector<32x256xf32>
    %29 = arith.addf %23, %28 : vector<32x256xf32>
    %30 = vector.extract_strided_slice %4 {offsets = [0, 1, 1], sizes = [4, 16, 16], strides = [1, 1, 1]} : vector<4x18x18xf32> to vector<4x16x16xf32>
    %c4 = arith.constant 4 : index
    %c0_15 = arith.constant 0 : index
    %c0_16 = arith.constant 0 : index
    %31 = vector.load %arg3[%c4, %c0_15, %c0_16] : memref<9x32x4xf32, #tpu.memory_space<vmem>>, vector<1x32x4xf32>
    %32 = vector.shape_cast %31 : vector<1x32x4xf32> to vector<32x4xf32>
    %33 = vector.shape_cast %30 : vector<4x16x16xf32> to vector<4x256xf32>
    %cst_17 = arith.constant dense<0.000000e+00> : vector<32x256xf32>
    %34 = tpu.matmul %32, %33, %cst_17 {dimension_numbers = #tpu.dot_dimension_numbers<[1], [0], [0], [1], [0, 0, 1, 1], [], []>} : vector<32x4xf32>, vector<4x256xf32>, vector<32x256xf32> -> vector<32x256xf32>
    %35 = arith.addf %29, %34 : vector<32x256xf32>
    %36 = vector.extract_strided_slice %4 {offsets = [0, 1, 2], sizes = [4, 16, 16], strides = [1, 1, 1]} : vector<4x18x18xf32> to vector<4x16x16xf32>
    %c5 = arith.constant 5 : index
    %c0_18 = arith.constant 0 : index
    %c0_19 = arith.constant 0 : index
    %37 = vector.load %arg3[%c5, %c0_18, %c0_19] : memref<9x32x4xf32, #tpu.memory_space<vmem>>, vector<1x32x4xf32>
    %38 = vector.shape_cast %37 : vector<1x32x4xf32> to vector<32x4xf32>
    %39 = vector.shape_cast %36 : vector<4x16x16xf32> to vector<4x256xf32>
    %cst_20 = arith.constant dense<0.000000e+00> : vector<32x256xf32>
    %40 = tpu.matmul %38, %39, %cst_20 {dimension_numbers = #tpu.dot_dimension_numbers<[1], [0], [0], [1], [0, 0, 1, 1], [], []>} : vector<32x4xf32>, vector<4x256xf32>, vector<32x256xf32> -> vector<32x256xf32>
    %41 = arith.addf %35, %40 : vector<32x256xf32>
    %42 = vector.extract_strided_slice %4 {offsets = [0, 2, 0], sizes = [4, 16, 16], strides = [1, 1, 1]} : vector<4x18x18xf32> to vector<4x16x16xf32>
    %c6 = arith.constant 6 : index
    %c0_21 = arith.constant 0 : index
    %c0_22 = arith.constant 0 : index
    %43 = vector.load %arg3[%c6, %c0_21, %c0_22] : memref<9x32x4xf32, #tpu.memory_space<vmem>>, vector<1x32x4xf32>
    %44 = vector.shape_cast %43 : vector<1x32x4xf32> to vector<32x4xf32>
    %45 = vector.shape_cast %42 : vector<4x16x16xf32> to vector<4x256xf32>
    %cst_23 = arith.constant dense<0.000000e+00> : vector<32x256xf32>
    %46 = tpu.matmul %44, %45, %cst_23 {dimension_numbers = #tpu.dot_dimension_numbers<[1], [0], [0], [1], [0, 0, 1, 1], [], []>} : vector<32x4xf32>, vector<4x256xf32>, vector<32x256xf32> -> vector<32x256xf32>
    %47 = arith.addf %41, %46 : vector<32x256xf32>
    %48 = vector.extract_strided_slice %4 {offsets = [0, 2, 1], sizes = [4, 16, 16], strides = [1, 1, 1]} : vector<4x18x18xf32> to vector<4x16x16xf32>
    %c7 = arith.constant 7 : index
    %c0_24 = arith.constant 0 : index
    %c0_25 = arith.constant 0 : index
    %49 = vector.load %arg3[%c7, %c0_24, %c0_25] : memref<9x32x4xf32, #tpu.memory_space<vmem>>, vector<1x32x4xf32>
    %50 = vector.shape_cast %49 : vector<1x32x4xf32> to vector<32x4xf32>
    %51 = vector.shape_cast %48 : vector<4x16x16xf32> to vector<4x256xf32>
    %cst_26 = arith.constant dense<0.000000e+00> : vector<32x256xf32>
    %52 = tpu.matmul %50, %51, %cst_26 {dimension_numbers = #tpu.dot_dimension_numbers<[1], [0], [0], [1], [0, 0, 1, 1], [], []>} : vector<32x4xf32>, vector<4x256xf32>, vector<32x256xf32> -> vector<32x256xf32>
    %53 = arith.addf %47, %52 : vector<32x256xf32>
    %54 = vector.extract_strided_slice %4 {offsets = [0, 2, 2], sizes = [4, 16, 16], strides = [1, 1, 1]} : vector<4x18x18xf32> to vector<4x16x16xf32>
    %c8 = arith.constant 8 : index
    %c0_27 = arith.constant 0 : index
    %c0_28 = arith.constant 0 : index
    %55 = vector.load %arg3[%c8, %c0_27, %c0_28] : memref<9x32x4xf32, #tpu.memory_space<vmem>>, vector<1x32x4xf32>
    %56 = vector.shape_cast %55 : vector<1x32x4xf32> to vector<32x4xf32>
    %57 = vector.shape_cast %54 : vector<4x16x16xf32> to vector<4x256xf32>
    %cst_29 = arith.constant dense<0.000000e+00> : vector<32x256xf32>
    %58 = tpu.matmul %56, %57, %cst_29 {dimension_numbers = #tpu.dot_dimension_numbers<[1], [0], [0], [1], [0, 0, 1, 1], [], []>} : vector<32x4xf32>, vector<4x256xf32>, vector<32x256xf32> -> vector<32x256xf32>
    %59 = arith.addf %53, %58 : vector<32x256xf32>
    %c0_30 = arith.constant 0 : index
    %c0_31 = arith.constant 0 : index
    %60 = vector.load %arg4[%c0_30, %c0_31] : memref<32x1xf32, #tpu.memory_space<vmem>>, vector<32x1xf32>
    %61 = vector.broadcast %60 : vector<32x1xf32> to vector<32x256xf32>
    %62 = arith.addf %59, %61 : vector<32x256xf32>
    %cst_32 = arith.constant 0.000000e+00 : f32
    %63 = vector.broadcast %cst_32 : f32 to vector<32x256xf32>
    %64 = arith.maximumf %62, %63 : vector<32x256xf32>
    %c0_33 = arith.constant 0 : index
    %c0_34 = arith.constant 0 : index
    %65 = vector.load %arg5[%c0_33, %c0_34] : memref<32x1xf32, #tpu.memory_space<vmem>>, vector<32x1xf32>
    %66 = vector.broadcast %65 : vector<32x1xf32> to vector<32x256xf32>
    %67 = arith.mulf %64, %66 : vector<32x256xf32>
    %c0_35 = arith.constant 0 : index
    %c0_36 = arith.constant 0 : index
    %68 = vector.load %arg6[%c0_35, %c0_36] : memref<32x1xf32, #tpu.memory_space<vmem>>, vector<32x1xf32>
    %69 = vector.broadcast %68 : vector<32x1xf32> to vector<32x256xf32>
    %70 = arith.addf %67, %69 : vector<32x256xf32>
    %71 = vector.shape_cast %70 : vector<32x256xf32> to vector<1x32x256xf32>
    %c0_37 = arith.constant 0 : index
    %c0_38 = arith.constant 0 : index
    %c0_39 = arith.constant 0 : index
    %72 = vector.load %arg7[%c0_37, %c0_38, %c0_39] : memref<1x32x256xf32, #tpu.memory_space<vmem>>, vector<1x32x256xf32>
    tpu.vector_store %arg7[%c0_37, %c0_38, %c0_39], %71 {strides = array<i32>} : memref<1x32x256xf32, #tpu.memory_space<vmem>>, vector<1x32x256xf32>,
    return
  }
  func.func @transform_0(%arg0: i32, %arg1: i32) -> (i32, i32, i32, i32) {
    %c0_i32 = arith.constant 0 : i32
    %c0_i32_0 = arith.constant 0 : i32
    %c0_i32_1 = arith.constant 0 : i32
    %c0_i32_2 = arith.constant 0 : i32
    return %arg0, %c0_i32, %c0_i32_0, %c0_i32_1 : i32, i32, i32, i32
  }
  func.func @transform_1(%arg0: i32, %arg1: i32) -> (i32, i32, i32) {
    %c0_i32 = arith.constant 0 : i32
    %c0_i32_0 = arith.constant 0 : i32
    %c0_i32_1 = arith.constant 0 : i32
    %c0_i32_2 = arith.constant 0 : i32
    return %c0_i32, %c0_i32_0, %c0_i32_1 : i32, i32, i32
  }
  func.func @transform_2(%arg0: i32, %arg1: i32) -> (i32, i32) {
    %c0_i32 = arith.constant 0 : i32
    %c0_i32_0 = arith.constant 0 : i32
    %c0_i32_1 = arith.constant 0 : i32
    return %c0_i32, %c0_i32_0 : i32, i32
  }
  func.func @transform_3(%arg0: i32, %arg1: i32) -> (i32, i32) {
    %c0_i32 = arith.constant 0 : i32
    %c0_i32_0 = arith.constant 0 : i32
    %c0_i32_1 = arith.constant 0 : i32
    return %c0_i32, %c0_i32_0 : i32, i32
  }
  func.func @transform_4(%arg0: i32, %arg1: i32) -> (i32, i32) {
    %c0_i32 = arith.constant 0 : i32
    %c0_i32_0 = arith.constant 0 : i32
    %c0_i32_1 = arith.constant 0 : i32
    return %c0_i32, %c0_i32_0 : i32, i32
  }
  func.func @transform_5(%arg0: i32, %arg1: i32) -> (i32, i32, i32) {
    %c0_i32 = arith.constant 0 : i32
    %c0_i32_0 = arith.constant 0 : i32
    return %arg0, %c0_i32, %arg1 : i32, i32, i32
  }
}

module attributes {stable_mosaic.version = 11 : i64} {
  func.func @_stats_kernel(%arg0: i32, %arg1: i32, %arg2: memref<1x4x18x18xf32, #tpu.memory_space<vmem>>, %arg3: memref<9x32x4xf32, #tpu.memory_space<vmem>>, %arg4: memref<32x1xf32, #tpu.memory_space<vmem>>, %arg5: memref<1x32x128xf32, #tpu.memory_space<vmem>>, %arg6: memref<1x32x128xf32, #tpu.memory_space<vmem>>) attributes {dimension_semantics = [#tpu.dimension_semantics<parallel>, #tpu.dimension_semantics<arbitrary>], iteration_bounds = array<i64: 2, 1>, scalar_prefetch = 0 : i64, scratch_operands = 0 : i64, tpu.core_type = #tpu.core_type<tc>, window_params = [{transform_indices = @transform_0, window_bounds = array<i64: 1, 4, 18, 18>}, {pipeline_mode = #tpu.pipeline_mode<synchronous>, transform_indices = @transform_1, window_bounds = array<i64: 9, 32, 4>}, {pipeline_mode = #tpu.pipeline_mode<synchronous>, transform_indices = @transform_2, window_bounds = array<i64: 32, 1>}, {transform_indices = @transform_3, window_bounds = array<i64: 1, 32, 128>}, {transform_indices = @transform_4, window_bounds = array<i64: 1, 32, 128>}]} {
    %c0_i32 = arith.constant 0 : i32
    %0 = arith.cmpi eq, %arg1, %c0_i32 : i32
    %1 = arith.extui %0 : i1 to i32
    %c0_i32_0 = arith.constant 0 : i32
    %2 = arith.cmpi ne, %1, %c0_i32_0 : i32
    scf.if %2 {
      %cst_49 = arith.constant 0.000000e+00 : f32
      %86 = vector.broadcast %cst_49 : f32 to vector<1x32x128xf32>
      %c0_50 = arith.constant 0 : index
      %c0_51 = arith.constant 0 : index
      %c0_52 = arith.constant 0 : index
      %87 = vector.load %arg5[%c0_50, %c0_51, %c0_52] : memref<1x32x128xf32, #tpu.memory_space<vmem>>, vector<1x32x128xf32>
      tpu.vector_store %arg5[%c0_50, %c0_51, %c0_52], %86 {strides = array<i32>} : memref<1x32x128xf32, #tpu.memory_space<vmem>>, vector<1x32x128xf32>,
      %cst_53 = arith.constant 0.000000e+00 : f32
      %88 = vector.broadcast %cst_53 : f32 to vector<1x32x128xf32>
      %c0_54 = arith.constant 0 : index
      %c0_55 = arith.constant 0 : index
      %c0_56 = arith.constant 0 : index
      %89 = vector.load %arg6[%c0_54, %c0_55, %c0_56] : memref<1x32x128xf32, #tpu.memory_space<vmem>>, vector<1x32x128xf32>
      tpu.vector_store %arg6[%c0_54, %c0_55, %c0_56], %88 {strides = array<i32>} : memref<1x32x128xf32, #tpu.memory_space<vmem>>, vector<1x32x128xf32>,
    } else {
    }
    %c16_i32 = arith.constant 16 : i32
    %3 = arith.muli %arg1, %c16_i32 : i32
    %c0_i32_1 = arith.constant 0 : i32
    %4 = arith.addi %c0_i32_1, %3 : i32
    %c0 = arith.constant 0 : index
    %c0_2 = arith.constant 0 : index
    %5 = arith.index_cast %4 : i32 to index
    %c0_3 = arith.constant 0 : index
    %6 = vector.load %arg2[%c0, %c0_2, %5, %c0_3] : memref<1x4x18x18xf32, #tpu.memory_space<vmem>>, vector<1x4x18x18xf32>
    %7 = vector.shape_cast %6 : vector<1x4x18x18xf32> to vector<4x18x18xf32>
    %cst = arith.constant 0.000000e+00 : f32
    %8 = vector.broadcast %cst : f32 to vector<32x256xf32>
    %9 = vector.extract_strided_slice %7 {offsets = [0, 0, 0], sizes = [4, 16, 16], strides = [1, 1, 1]} : vector<4x18x18xf32> to vector<4x16x16xf32>
    %c0_4 = arith.constant 0 : index
    %c0_5 = arith.constant 0 : index
    %c0_6 = arith.constant 0 : index
    %10 = vector.load %arg3[%c0_4, %c0_5, %c0_6] : memref<9x32x4xf32, #tpu.memory_space<vmem>>, vector<1x32x4xf32>
    %11 = vector.shape_cast %10 : vector<1x32x4xf32> to vector<32x4xf32>
    %12 = vector.shape_cast %9 : vector<4x16x16xf32> to vector<4x256xf32>
    %cst_7 = arith.constant dense<0.000000e+00> : vector<32x256xf32>
    %13 = tpu.matmul %11, %12, %cst_7 {dimension_numbers = #tpu.dot_dimension_numbers<[1], [0], [0], [1], [0, 0, 1, 1], [], []>} : vector<32x4xf32>, vector<4x256xf32>, vector<32x256xf32> -> vector<32x256xf32>
    %14 = arith.addf %8, %13 : vector<32x256xf32>
    %15 = vector.extract_strided_slice %7 {offsets = [0, 0, 1], sizes = [4, 16, 16], strides = [1, 1, 1]} : vector<4x18x18xf32> to vector<4x16x16xf32>
    %c1 = arith.constant 1 : index
    %c0_8 = arith.constant 0 : index
    %c0_9 = arith.constant 0 : index
    %16 = vector.load %arg3[%c1, %c0_8, %c0_9] : memref<9x32x4xf32, #tpu.memory_space<vmem>>, vector<1x32x4xf32>
    %17 = vector.shape_cast %16 : vector<1x32x4xf32> to vector<32x4xf32>
    %18 = vector.shape_cast %15 : vector<4x16x16xf32> to vector<4x256xf32>
    %cst_10 = arith.constant dense<0.000000e+00> : vector<32x256xf32>
    %19 = tpu.matmul %17, %18, %cst_10 {dimension_numbers = #tpu.dot_dimension_numbers<[1], [0], [0], [1], [0, 0, 1, 1], [], []>} : vector<32x4xf32>, vector<4x256xf32>, vector<32x256xf32> -> vector<32x256xf32>
    %20 = arith.addf %14, %19 : vector<32x256xf32>
    %21 = vector.extract_strided_slice %7 {offsets = [0, 0, 2], sizes = [4, 16, 16], strides = [1, 1, 1]} : vector<4x18x18xf32> to vector<4x16x16xf32>
    %c2 = arith.constant 2 : index
    %c0_11 = arith.constant 0 : index
    %c0_12 = arith.constant 0 : index
    %22 = vector.load %arg3[%c2, %c0_11, %c0_12] : memref<9x32x4xf32, #tpu.memory_space<vmem>>, vector<1x32x4xf32>
    %23 = vector.shape_cast %22 : vector<1x32x4xf32> to vector<32x4xf32>
    %24 = vector.shape_cast %21 : vector<4x16x16xf32> to vector<4x256xf32>
    %cst_13 = arith.constant dense<0.000000e+00> : vector<32x256xf32>
    %25 = tpu.matmul %23, %24, %cst_13 {dimension_numbers = #tpu.dot_dimension_numbers<[1], [0], [0], [1], [0, 0, 1, 1], [], []>} : vector<32x4xf32>, vector<4x256xf32>, vector<32x256xf32> -> vector<32x256xf32>
    %26 = arith.addf %20, %25 : vector<32x256xf32>
    %27 = vector.extract_strided_slice %7 {offsets = [0, 1, 0], sizes = [4, 16, 16], strides = [1, 1, 1]} : vector<4x18x18xf32> to vector<4x16x16xf32>
    %c3 = arith.constant 3 : index
    %c0_14 = arith.constant 0 : index
    %c0_15 = arith.constant 0 : index
    %28 = vector.load %arg3[%c3, %c0_14, %c0_15] : memref<9x32x4xf32, #tpu.memory_space<vmem>>, vector<1x32x4xf32>
    %29 = vector.shape_cast %28 : vector<1x32x4xf32> to vector<32x4xf32>
    %30 = vector.shape_cast %27 : vector<4x16x16xf32> to vector<4x256xf32>
    %cst_16 = arith.constant dense<0.000000e+00> : vector<32x256xf32>
    %31 = tpu.matmul %29, %30, %cst_16 {dimension_numbers = #tpu.dot_dimension_numbers<[1], [0], [0], [1], [0, 0, 1, 1], [], []>} : vector<32x4xf32>, vector<4x256xf32>, vector<32x256xf32> -> vector<32x256xf32>
    %32 = arith.addf %26, %31 : vector<32x256xf32>
    %33 = vector.extract_strided_slice %7 {offsets = [0, 1, 1], sizes = [4, 16, 16], strides = [1, 1, 1]} : vector<4x18x18xf32> to vector<4x16x16xf32>
    %c4 = arith.constant 4 : index
    %c0_17 = arith.constant 0 : index
    %c0_18 = arith.constant 0 : index
    %34 = vector.load %arg3[%c4, %c0_17, %c0_18] : memref<9x32x4xf32, #tpu.memory_space<vmem>>, vector<1x32x4xf32>
    %35 = vector.shape_cast %34 : vector<1x32x4xf32> to vector<32x4xf32>
    %36 = vector.shape_cast %33 : vector<4x16x16xf32> to vector<4x256xf32>
    %cst_19 = arith.constant dense<0.000000e+00> : vector<32x256xf32>
    %37 = tpu.matmul %35, %36, %cst_19 {dimension_numbers = #tpu.dot_dimension_numbers<[1], [0], [0], [1], [0, 0, 1, 1], [], []>} : vector<32x4xf32>, vector<4x256xf32>, vector<32x256xf32> -> vector<32x256xf32>
    %38 = arith.addf %32, %37 : vector<32x256xf32>
    %39 = vector.extract_strided_slice %7 {offsets = [0, 1, 2], sizes = [4, 16, 16], strides = [1, 1, 1]} : vector<4x18x18xf32> to vector<4x16x16xf32>
    %c5 = arith.constant 5 : index
    %c0_20 = arith.constant 0 : index
    %c0_21 = arith.constant 0 : index
    %40 = vector.load %arg3[%c5, %c0_20, %c0_21] : memref<9x32x4xf32, #tpu.memory_space<vmem>>, vector<1x32x4xf32>
    %41 = vector.shape_cast %40 : vector<1x32x4xf32> to vector<32x4xf32>
    %42 = vector.shape_cast %39 : vector<4x16x16xf32> to vector<4x256xf32>
    %cst_22 = arith.constant dense<0.000000e+00> : vector<32x256xf32>
    %43 = tpu.matmul %41, %42, %cst_22 {dimension_numbers = #tpu.dot_dimension_numbers<[1], [0], [0], [1], [0, 0, 1, 1], [], []>} : vector<32x4xf32>, vector<4x256xf32>, vector<32x256xf32> -> vector<32x256xf32>
    %44 = arith.addf %38, %43 : vector<32x256xf32>
    %45 = vector.extract_strided_slice %7 {offsets = [0, 2, 0], sizes = [4, 16, 16], strides = [1, 1, 1]} : vector<4x18x18xf32> to vector<4x16x16xf32>
    %c6 = arith.constant 6 : index
    %c0_23 = arith.constant 0 : index
    %c0_24 = arith.constant 0 : index
    %46 = vector.load %arg3[%c6, %c0_23, %c0_24] : memref<9x32x4xf32, #tpu.memory_space<vmem>>, vector<1x32x4xf32>
    %47 = vector.shape_cast %46 : vector<1x32x4xf32> to vector<32x4xf32>
    %48 = vector.shape_cast %45 : vector<4x16x16xf32> to vector<4x256xf32>
    %cst_25 = arith.constant dense<0.000000e+00> : vector<32x256xf32>
    %49 = tpu.matmul %47, %48, %cst_25 {dimension_numbers = #tpu.dot_dimension_numbers<[1], [0], [0], [1], [0, 0, 1, 1], [], []>} : vector<32x4xf32>, vector<4x256xf32>, vector<32x256xf32> -> vector<32x256xf32>
    %50 = arith.addf %44, %49 : vector<32x256xf32>
    %51 = vector.extract_strided_slice %7 {offsets = [0, 2, 1], sizes = [4, 16, 16], strides = [1, 1, 1]} : vector<4x18x18xf32> to vector<4x16x16xf32>
    %c7 = arith.constant 7 : index
    %c0_26 = arith.constant 0 : index
    %c0_27 = arith.constant 0 : index
    %52 = vector.load %arg3[%c7, %c0_26, %c0_27] : memref<9x32x4xf32, #tpu.memory_space<vmem>>, vector<1x32x4xf32>
    %53 = vector.shape_cast %52 : vector<1x32x4xf32> to vector<32x4xf32>
    %54 = vector.shape_cast %51 : vector<4x16x16xf32> to vector<4x256xf32>
    %cst_28 = arith.constant dense<0.000000e+00> : vector<32x256xf32>
    %55 = tpu.matmul %53, %54, %cst_28 {dimension_numbers = #tpu.dot_dimension_numbers<[1], [0], [0], [1], [0, 0, 1, 1], [], []>} : vector<32x4xf32>, vector<4x256xf32>, vector<32x256xf32> -> vector<32x256xf32>
    %56 = arith.addf %50, %55 : vector<32x256xf32>
    %57 = vector.extract_strided_slice %7 {offsets = [0, 2, 2], sizes = [4, 16, 16], strides = [1, 1, 1]} : vector<4x18x18xf32> to vector<4x16x16xf32>
    %c8 = arith.constant 8 : index
    %c0_29 = arith.constant 0 : index
    %c0_30 = arith.constant 0 : index
    %58 = vector.load %arg3[%c8, %c0_29, %c0_30] : memref<9x32x4xf32, #tpu.memory_space<vmem>>, vector<1x32x4xf32>
    %59 = vector.shape_cast %58 : vector<1x32x4xf32> to vector<32x4xf32>
    %60 = vector.shape_cast %57 : vector<4x16x16xf32> to vector<4x256xf32>
    %cst_31 = arith.constant dense<0.000000e+00> : vector<32x256xf32>
    %61 = tpu.matmul %59, %60, %cst_31 {dimension_numbers = #tpu.dot_dimension_numbers<[1], [0], [0], [1], [0, 0, 1, 1], [], []>} : vector<32x4xf32>, vector<4x256xf32>, vector<32x256xf32> -> vector<32x256xf32>
    %62 = arith.addf %56, %61 : vector<32x256xf32>
    %c0_32 = arith.constant 0 : index
    %c0_33 = arith.constant 0 : index
    %63 = vector.load %arg4[%c0_32, %c0_33] : memref<32x1xf32, #tpu.memory_space<vmem>>, vector<32x1xf32>
    %64 = vector.broadcast %63 : vector<32x1xf32> to vector<32x256xf32>
    %65 = arith.addf %62, %64 : vector<32x256xf32>
    %cst_34 = arith.constant 0.000000e+00 : f32
    %66 = vector.broadcast %cst_34 : f32 to vector<32x256xf32>
    %67 = arith.maximumf %65, %66 : vector<32x256xf32>
    %cst_35 = arith.constant 0.000000e+00 : f32
    %68 = vector.broadcast %cst_35 : f32 to vector<32x128xf32>
    %cst_36 = arith.constant 0.000000e+00 : f32
    %69 = vector.broadcast %cst_36 : f32 to vector<32x128xf32>
    %70 = vector.extract_strided_slice %67 {offsets = [0, 0], sizes = [32, 128], strides = [1, 1]} : vector<32x256xf32> to vector<32x128xf32>
    %71 = arith.addf %68, %70 : vector<32x128xf32>
    %72 = arith.mulf %70, %70 : vector<32x128xf32>
    %73 = arith.addf %69, %72 : vector<32x128xf32>
    %74 = vector.extract_strided_slice %67 {offsets = [0, 128], sizes = [32, 128], strides = [1, 1]} : vector<32x256xf32> to vector<32x128xf32>
    %75 = arith.addf %71, %74 : vector<32x128xf32>
    %76 = arith.mulf %74, %74 : vector<32x128xf32>
    %77 = arith.addf %73, %76 : vector<32x128xf32>
    %c0_37 = arith.constant 0 : index
    %c0_38 = arith.constant 0 : index
    %c0_39 = arith.constant 0 : index
    %78 = vector.load %arg5[%c0_37, %c0_38, %c0_39] : memref<1x32x128xf32, #tpu.memory_space<vmem>>, vector<1x32x128xf32>
    %79 = vector.shape_cast %75 : vector<32x128xf32> to vector<1x32x128xf32>
    %80 = arith.addf %78, %79 : vector<1x32x128xf32>
    %c0_40 = arith.constant 0 : index
    %c0_41 = arith.constant 0 : index
    %c0_42 = arith.constant 0 : index
    %81 = vector.load %arg5[%c0_40, %c0_41, %c0_42] : memref<1x32x128xf32, #tpu.memory_space<vmem>>, vector<1x32x128xf32>
    tpu.vector_store %arg5[%c0_40, %c0_41, %c0_42], %80 {strides = array<i32>} : memref<1x32x128xf32, #tpu.memory_space<vmem>>, vector<1x32x128xf32>,
    %c0_43 = arith.constant 0 : index
    %c0_44 = arith.constant 0 : index
    %c0_45 = arith.constant 0 : index
    %82 = vector.load %arg6[%c0_43, %c0_44, %c0_45] : memref<1x32x128xf32, #tpu.memory_space<vmem>>, vector<1x32x128xf32>
    %83 = vector.shape_cast %77 : vector<32x128xf32> to vector<1x32x128xf32>
    %84 = arith.addf %82, %83 : vector<1x32x128xf32>
    %c0_46 = arith.constant 0 : index
    %c0_47 = arith.constant 0 : index
    %c0_48 = arith.constant 0 : index
    %85 = vector.load %arg6[%c0_46, %c0_47, %c0_48] : memref<1x32x128xf32, #tpu.memory_space<vmem>>, vector<1x32x128xf32>
    tpu.vector_store %arg6[%c0_46, %c0_47, %c0_48], %84 {strides = array<i32>} : memref<1x32x128xf32, #tpu.memory_space<vmem>>, vector<1x32x128xf32>,
    return
  }
  func.func @transform_0(%arg0: i32, %arg1: i32) -> (i32, i32, i32, i32) {
    %c0_i32 = arith.constant 0 : i32
    %c0_i32_0 = arith.constant 0 : i32
    %c0_i32_1 = arith.constant 0 : i32
    %c0_i32_2 = arith.constant 0 : i32
    return %arg0, %c0_i32, %c0_i32_0, %c0_i32_1 : i32, i32, i32, i32
  }
  func.func @transform_1(%arg0: i32, %arg1: i32) -> (i32, i32, i32) {
    %c0_i32 = arith.constant 0 : i32
    %c0_i32_0 = arith.constant 0 : i32
    %c0_i32_1 = arith.constant 0 : i32
    %c0_i32_2 = arith.constant 0 : i32
    return %c0_i32, %c0_i32_0, %c0_i32_1 : i32, i32, i32
  }
  func.func @transform_2(%arg0: i32, %arg1: i32) -> (i32, i32) {
    %c0_i32 = arith.constant 0 : i32
    %c0_i32_0 = arith.constant 0 : i32
    %c0_i32_1 = arith.constant 0 : i32
    return %c0_i32, %c0_i32_0 : i32, i32
  }
  func.func @transform_3(%arg0: i32, %arg1: i32) -> (i32, i32, i32) {
    %c0_i32 = arith.constant 0 : i32
    %c0_i32_0 = arith.constant 0 : i32
    %c0_i32_1 = arith.constant 0 : i32
    return %arg0, %c0_i32, %c0_i32_0 : i32, i32, i32
  }
  func.func @transform_4(%arg0: i32, %arg1: i32) -> (i32, i32, i32) {
    %c0_i32 = arith.constant 0 : i32
    %c0_i32_0 = arith.constant 0 : i32
    %c0_i32_1 = arith.constant 0 : i32
    return %arg0, %c0_i32, %c0_i32_0 : i32, i32, i32
  }
}

</mosaic_0001>

<llo_original>
// kernel: tile.0
$region0: #{tile.0}
  %s0 = inlined_call_operand.vmem [shape: f32[4,8], index: 0, kind: input, shape index: {}]
  %s1 = inlined_call_operand.vmem [shape: f32[32,1], index: 1, kind: output, shape index: {}]
  $region1: #{tile.0} parent=0
    #allocation0 [shape = 'u8[4096]{0}', space=vmem, size = 0x1000, scoped, tag = 'scoped mem for input reshape']
    %s3 = sshll.u32 1, 4
    %s4 = ssub.s32 %s3, 1
    %v5 = vld [vmem:[%s0] sm:%s4]
    %6 = vst [vmem:[#allocation0] sm:%s4] %v5
    %v7 = vld [vmem:[#allocation0] sm:$0xf]
    %vm8 = vcmask 7168
    %9 = vst.msk [vmem:[%s1] ss:$8 sm:$0xf] %vm8, %v7
    %v10 = vld [vmem:[#allocation0] sm:$0xf]
    %11 = vrot.lane.b32.xlu0 %v10, 127
    %v12 = vpop.permute.xlu0 %11
    %vm13 = vcmask 7168
    %s14 = scalar_lea.vmem %s1, 1
    %15 = vst.msk [vmem:[%s14] ss:$8 sm:$0xf] %vm13, %v12
    %v16 = vld [vmem:[#allocation0] sm:$0xf]
    %17 = vrot.lane.b32.xlu0 %v16, 126
    %v18 = vpop.permute.xlu0 %17
    %vm19 = vcmask 7168
    %s20 = scalar_lea.vmem %s1, 2
    %21 = vst.msk [vmem:[%s20] ss:$8 sm:$0xf] %vm19, %v18
    %v22 = vld [vmem:[#allocation0] sm:$0xf]
    %23 = vrot.lane.b32.xlu0 %v22, 125
    %v24 = vpop.permute.xlu0 %23
    %vm25 = vcmask 7168
    %s26 = scalar_lea.vmem %s1, 3
    %27 = vst.msk [vmem:[%s26] ss:$8 sm:$0xf] %vm25, %v24
    %v28 = vld [vmem:[#allocation0] sm:$0xf]
    %29 = vrot.lane.b32.xlu0 %v28, 124
    %v30 = vpop.permute.xlu0 %29
    %vm31 = vcmask 7168
    %s32 = scalar_lea.vmem %s1, 4
    %33 = vst.msk [vmem:[%s32] ss:$8 sm:$0xf] %vm31, %v30
    %v34 = vld [vmem:[#allocation0] sm:$0xf]
    %35 = vrot.lane.b32.xlu0 %v34, 123
    %v36 = vpop.permute.xlu0 %35
    %vm37 = vcmask 7168
    %s38 = scalar_lea.vmem %s1, 5
    %39 = vst.msk [vmem:[%s38] ss:$8 sm:$0xf] %vm37, %v36
    %v40 = vld [vmem:[#allocation0] sm:$0xf]
    %41 = vrot.lane.b32.xlu0 %v40, 122
    %v42 = vpop.permute.xlu0 %41
    %vm43 = vcmask 7168
    %s44 = scalar_lea.vmem %s1, 6
    %45 = vst.msk [vmem:[%s44] ss:$8 sm:$0xf] %vm43, %v42
    %v46 = vld [vmem:[#allocation0] sm:$0xf]
    %47 = vrot.lane.b32.xlu0 %v46, 121
    %v48 = vpop.permute.xlu0 %47
    %vm49 = vcmask 7168
    %s50 = scalar_lea.vmem %s1, 7
    %51 = vst.msk [vmem:[%s50] ss:$8 sm:$0xf] %vm49, %v48

// kernel: tile.18
$region0: #{tile.18}
  #allocation0 [shape = 's32[1]{0}', space=sflag, size = 0x4, scoped, tag = 'scoped memory for tile.18']
  %s0 = inlined_call_operand.vmem [shape: f32[8], index: 0, kind: input, shape index: {}]
  %s1 = inlined_call_operand.vmem [shape: f32[4,8], index: 1, kind: output, shape index: {}]
  // Predicated region
  $region2: #{tile.18} parent=0 // pred_check
    _
  $region3: #{tile.18} parent=0 // pred_check_branch
    %3 = sbr.rel (0) target = $region5
  $region4: #{tile.18} parent=0 // pred_region
    _
  $region5: #{tile.18} parent=0 // pred_fallthru
    _
  %v4 = vld [vmem:[%s0] ss:$0 sm:$0xff]
  %5 = vst [vmem:[%s1] sm:$0xf] %v4

// kernel: conv_transpose_block.3
$region0: #{conv_transpose_block.3}
  #allocation0 [shape = 'u32[]', space=smem, size = 0x4, offset = 0x4, fixed_abs, tag = 'smem constant byte address 0x4 - core index']
  #allocation1 [shape = 'u32[144,128]{1,0:T(1,128)}', space=vmem, size = 0x12000, scoped, tag = 'internal scratch']
  %s0 = inlined_call_operand.vmem [shape: f32[2,4,18,18], index: 0, kind: input, shape index: {}]
  %s1 = inlined_call_operand.vmem [shape: f32[9,32,4], index: 1, kind: input, shape index: {}]
  %s2 = inlined_call_operand.vmem [shape: f32[32,1], index: 2, kind: input, shape index: {}]
  %s3 = inlined_call_operand.vmem [shape: f32[32,1], index: 3, kind: input, shape index: {}]
  %s4 = inlined_call_operand.vmem [shape: f32[32,1], index: 4, kind: input, shape index: {}]
  %s5 = inlined_call_operand.vmem [shape: f32[2,32,256], index: 5, kind: output, shape index: {}]
  %s6 = sld [smem:[#allocation0]]
  $region53: #{conv_transpose_block.3} parent=0
    _
  %s8 = ssub.s32 1, %s6
  %s9 = scalar_select 0, %s8, %s6
  loop: start=0, step=1, limit=4
  $region2: #{conv_transpose_block.3} parent=0 // loop_pre_header
    _
  $region3: #{conv_transpose_block.3} parent=0 // loop_header
    %s11 = sphi 0, %s15
    %p12 = scmp.ge.s32.totalorder %s11, 4
    %s18 = sphi 0, %s30
    %s19 = sphi 0, %s26
    %s20 = sphi 0, %s18
    %s21 = sphi 0, %s19
    %s22 = sphi 0, %s20
    %s23 = sphi 0, %s21
    %s33 = sphi 0, %s35
    %s36 = sphi 0, %s33
    %s37 = sphi 0, %s36
    %s53 = sphi 0, %s37
    %s57 = sphi 0, %s57
    %s59 = sphi 0, %s57
    %s60 = sphi 0, %s59
    %s74 = sphi 0, %s60
    %s78 = sphi 0, %s78
    %s80 = sphi 0, %s78
    %s81 = sphi 0, %s80
    %s95 = sphi 0, %s81
    %s99 = sphi 0, %s99
    %s101 = sphi 0, %s99
    %s102 = sphi 0, %s101
    %s116 = sphi 0, %s102
    %s120 = sphi 0, %s120
    %s122 = sphi 0, %s120
    %s123 = sphi 0, %s122
    %s137 = sphi 0, %s123
    %s145 = sphi 0, %s147
    %s148 = sphi 0, %s145
    %s149 = sphi 0, %s148
    %s165 = sphi 0, %s149
  $region4: #{conv_transpose_block.3} parent=0 // loop_header_branch
    %14 = sbr.rel (%p12) target = $region8
  $region5: #{conv_transpose_block.3} parent=0 // loop_body
    %s16 = ssub.s32 %s11, 1
    %s17 = ssub.s32 %s11, 2
    %s24 = sadd.s32 1, %s19
    %p25 = scmp.ge.s32.totalorder %s24, 1
    %s26 = scalar_select %p25, 0, %s24
    %s27 = sadd.s32 1, %s18
    %s28 = scalar_select %p25, %s27, %s18
    %p29 = scmp.ge.s32.totalorder %s28, 2
    %s30 = scalar_select %p29, 0, %s28
    %s31 = ssub.s32 %s18, %s30
    %p32 = scmp.eq.s32.totalorder %s31, 0
    %s34 = sadd.s32 %s33, 1
    %s35 = scalar_select %p32, %s33, %s34
    %p38 = pneg %p32
    %p39 = scmp.eq.s32.totalorder %s11, 1
    %p40 = por %p38, %p39
    %p41 = scmp.ne.s32.totalorder %s33, %s36
    %p42 = scmp.eq.s32.totalorder %s11, 0
    %p43 = por %p41, %p42
    %p44 = scmp.ne.s32.totalorder %s33, %s36
    %p45 = scmp.eq.s32.totalorder %s16, 1
    %p46 = por %p44, %p45
    %p47 = scmp.ne.s32.totalorder %s36, %s37
    %p48 = scmp.eq.s32.totalorder %s16, 0
    %p49 = por %p47, %p48
    %p50 = scmp.ne.s32.totalorder %s36, %s37
    %p51 = scmp.eq.s32.totalorder %s17, 1
    %p52 = por %p50, %p51
    %p54 = scmp.ne.s32.totalorder %s37, %s53
    %p55 = scmp.eq.s32.totalorder %s17, 0
    %p56 = por %p54, %p55
    %s58 = sadd.s32 %s57, 1
    %p61 = scmp.eq.s32.totalorder %s11, 1
    %p62 = scmp.ne.s32.totalorder %s57, %s59
    %p63 = scmp.eq.s32.totalorder %s11, 0
    %p64 = por %p62, %p63
    %p65 = scmp.ne.s32.totalorder %s57, %s59
    %p66 = scmp.eq.s32.totalorder %s16, 1
    %p67 = por %p65, %p66
    %p68 = scmp.ne.s32.totalorder %s59, %s60
    %p69 = scmp.eq.s32.totalorder %s16, 0
    %p70 = por %p68, %p69
    %p71 = scmp.ne.s32.totalorder %s59, %s60
    %p72 = scmp.eq.s32.totalorder %s17, 1
    %p73 = por %p71, %p72
    %p75 = scmp.ne.s32.totalorder %s60, %s74
    %p76 = scmp.eq.s32.totalorder %s17, 0
    %p77 = por %p75, %p76
    %s79 = sadd.s32 %s78, 1
    %p82 = scmp.eq.s32.totalorder %s11, 1
    %p83 = scmp.ne.s32.totalorder %s78, %s80
    %p84 = scmp.eq.s32.totalorder %s11, 0
    %p85 = por %p83, %p84
    %p86 = scmp.ne.s32.totalorder %s78, %s80
    %p87 = scmp.eq.s32.totalorder %s16, 1
    %p88 = por %p86, %p87
    %p89 = scmp.ne.s32.totalorder %s80, %s81
    %p90 = scmp.eq.s32.totalorder %s16, 0
    %p91 = por %p89, %p90
    %p92 = scmp.ne.s32.totalorder %s80, %s81
    %p93 = scmp.eq.s32.totalorder %s17, 1
    %p94 = por %p92, %p93
    %p96 = scmp.ne.s32.totalorder %s81, %s95
    %p97 = scmp.eq.s32.totalorder %s17, 0
    %p98 = por %p96, %p97
    %s100 = sadd.s32 %s99, 1
    %p103 = scmp.eq.s32.totalorder %s11, 1
    %p104 = scmp.ne.s32.totalorder %s99, %s101
    %p105 = scmp.eq.s32.totalorder %s11, 0
    %p106 = por %p104, %p105
    %p107 = scmp.ne.s32.totalorder %s99, %s101
    %p108 = scmp.eq.s32.totalorder %s16, 1
    %p109 = por %p107, %p108
    %p110 = scmp.ne.s32.totalorder %s101, %s102
    %p111 = scmp.eq.s32.totalorder %s16, 0
    %p112 = por %p110, %p111
    %p113 = scmp.ne.s32.totalorder %s101, %s102
    %p114 = scmp.eq.s32.totalorder %s17, 1
    %p115 = por %p113, %p114
    %p117 = scmp.ne.s32.totalorder %s102, %s116
    %p118 = scmp.eq.s32.totalorder %s17, 0
    %p119 = por %p117, %p118
    %s121 = sadd.s32 %s120, 1
    %p124 = scmp.eq.s32.totalorder %s11, 1
    %p125 = scmp.ne.s32.totalorder %s120, %s122
    %p126 = scmp.eq.s32.totalorder %s11, 0
    %p127 = por %p125, %p126
    %p128 = scmp.ne.s32.totalorder %s120, %s122
    %p129 = scmp.eq.s32.totalorder %s16, 1
    %p130 = por %p128, %p129
    %p131 = scmp.ne.s32.totalorder %s122, %s123
    %p132 = scmp.eq.s32.totalorder %s16, 0
    %p133 = por %p131, %p132
    %p134 = scmp.ne.s32.totalorder %s122, %s123
    %p135 = scmp.eq.s32.totalorder %s17, 1
    %p136 = por %p134, %p135
    %p138 = scmp.ne.s32.totalorder %s123, %s137
    %p139 = scmp.eq.s32.totalorder %s17, 0
    %p140 = por %p138, %p139
    %s141 = ssub.s32 %s18, %s30
    %s142 = ssub.s32 %s19, %s26
    %s143 = sor.u32 %s141, %s142
    %p144 = scmp.eq.s32.totalorder %s143, 0
    %s146 = sadd.s32 %s145, 1
    %s147 = scalar_select %p144, %s145, %s146
    %p150 = pneg %p144
    %p151 = scmp.eq.s32.totalorder %s11, 1
    %p152 = por %p150, %p151
    %p153 = scmp.ne.s32.totalorder %s145, %s148
    %p154 = scmp.eq.s32.totalorder %s11, 0
    %p155 = por %p153, %p154
    %p156 = scmp.ne.s32.totalorder %s145, %s148
    %p157 = scmp.eq.s32.totalorder %s16, 1
    %p158 = por %p156, %p157
    %p159 = scmp.ne.s32.totalorder %s148, %s149
    %p160 = scmp.eq.s32.totalorder %s16, 0
    %p161 = por %p159, %p160
    %p162 = scmp.ne.s32.totalorder %s148, %s149
    %p163 = scmp.eq.s32.totalorder %s17, 1
    %p164 = por %p162, %p163
    %p166 = scmp.ne.s32.totalorder %s149, %s165
    %p167 = scmp.eq.s32.totalorder %s17, 0
    %p168 = por %p166, %p167
    %p169 = scmp.le.s32.totalorder 1, %s11
    %p170 = scmp.lt.s32.totalorder %s11, 3
    %p171 = pnand %p169, %p170
    %p172 = pneg %p171
    // Predicated region
    $region9: #{conv_transpose_block.3} parent=5 // pred_check
      _
    $region10: #{conv_transpose_block.3} parent=5 // pred_check_branch
      %174 = sbr.rel (%p171) target = $region12
    $region11: #{conv_transpose_block.3} parent=5 // pred_region
      %s175 = ssub.s32 %s11, 1
      // Predicated region
      $region13: #{conv_transpose_block.3} parent=11 // pred_check
        %p176 = pneg %p70
      $region14: #{conv_transpose_block.3} parent=11 // pred_check_branch
        %178 = sbr.rel (%p176) target = $region16
      $region15: #{conv_transpose_block.3} parent=11 // pred_region
        _
      $region16: #{conv_transpose_block.3} parent=11 // pred_fallthru
        _
      // Predicated region
      $region17: #{conv_transpose_block.3} parent=11 // pred_check
        %p179 = pneg %p91
      $region18: #{conv_transpose_block.3} parent=11 // pred_check_branch
        %181 = sbr.rel (%p179) target = $region20
      $region19: #{conv_transpose_block.3} parent=11 // pred_region
        _
      $region20: #{conv_transpose_block.3} parent=11 // pred_fallthru
        _
      // Predicated region
      $region21: #{conv_transpose_block.3} parent=11 // pred_check
        %p182 = pneg %p112
      $region22: #{conv_transpose_block.3} parent=11 // pred_check_branch
        %184 = sbr.rel (%p182) target = $region24
      $region23: #{conv_transpose_block.3} parent=11 // pred_region
        _
      $region24: #{conv_transpose_block.3} parent=11 // pred_fallthru
        _
      // Predicated region
      $region25: #{conv_transpose_block.3} parent=11 // pred_check
        %p185 = pneg %p133
      $region26: #{conv_transpose_block.3} parent=11 // pred_check_branch
        %187 = sbr.rel (%p185) target = $region28
      $region27: #{conv_transpose_block.3} parent=11 // pred_region
        _
      $region28: #{conv_transpose_block.3} parent=11 // pred_fallthru
        _
    $region12: #{conv_transpose_block.3} parent=5 // pred_fallthru
      _
    %p188 = scmp.lt.s32.totalorder %s11, 2
    // Predicated region
    $region29: #{conv_transpose_block.3} parent=5 // pred_check
      %p189 = pneg %p188
    $region30: #{conv_transpose_block.3} parent=5 // pred_check_branch
      %191 = sbr.rel (%p189) target = $region32
    $region31: #{conv_transpose_block.3} parent=5 // pred_region
      // Predicated region
      $region33: #{conv_transpose_block.3} parent=31 // pred_check
        %p192 = pneg %p43
      $region34: #{conv_transpose_block.3} parent=31 // pred_check_branch
        %194 = sbr.rel (%p192) target = $region36
      $region35: #{conv_transpose_block.3} parent=31 // pred_region
        %p195 = scmp.lt.s32.totalorder %s18, 1
        %s196 = scalar_select %p195, %s18, 1
        %s197 = smul.addr %s196, 12
        %s198 = smul.addr %s197, 8
        %s199 = scalar_lea.vmem %s0, %s198
      $region36: #{conv_transpose_block.3} parent=31 // pred_fallthru
        _
    $region32: #{conv_transpose_block.3} parent=5 // pred_fallthru
      _
    %p200 = scmp.le.s32.totalorder 1, %s11
    %p201 = scmp.lt.s32.totalorder %s11, 3
    %p202 = pnand %p200, %p201
    %p203 = pneg %p202
    // Predicated region
    $region37: #{conv_transpose_block.3} parent=5 // pred_check
      _
    $region38: #{conv_transpose_block.3} parent=5 // pred_check_branch
      %205 = sbr.rel (%p202) target = $region40
    $region39: #{conv_transpose_block.3} parent=5 // pred_region
      %s206 = ssub.s32 %s11, 1
      %p207 = scmp.lt.s32.totalorder %s20, 1
      %s208 = scalar_select %p207, %s20, 1
      %s209 = smul.addr %s208, 12
      %s210 = smul.addr %s209, 8
      %s211 = scalar_lea.vmem %s0, %s210
      %p212 = pneg %p49
      %p213 = pneg %p46
      %p214 = pneg %p70
      %p215 = pneg %p67
      %p216 = pneg %p91
      %p217 = pneg %p88
      %p218 = pneg %p112
      %p219 = pneg %p109
      %p220 = pneg %p133
      %p221 = pneg %p130
      %p222 = pneg %p161
      %p223 = pneg %p158
      %s224 = smul.u32 2, %s21
      %p225 = scmp.lt.s32.totalorder %s20, 1
      %s226 = scalar_select %p225, %s20, 1
      %p227 = scmp.lt.s32.totalorder %s224, 1
      %s228 = scalar_select %p227, %s224, 1
      %s229 = smul.addr %s226, 8
      %s230 = sadd.s32 %s228, %s229
      %s231 = smul.addr %s230, 8
      %s232 = scalar_lea.vmem %s5, %s231
      %p233 = scmp.lt.s32.totalorder %s20, 1
      %s234 = scalar_select %p233, %s20, 1
      %s235 = smul.addr %s234, 12
      %s236 = smul.addr %s235, 8
      %s237 = scalar_lea.vmem %s0, %s236
      %s238 = smul.u32 2, %s21
      %p239 = scmp.lt.s32.totalorder %s20, 1
      %s240 = scalar_select %p239, %s20, 1
      %p241 = scmp.lt.s32.totalorder %s238, 1
      %s242 = scalar_select %p241, %s238, 1
      %s243 = smul.addr %s240, 8
      %s244 = sadd.s32 %s242, %s243
      %s245 = smul.addr %s244, 8
      %s246 = scalar_lea.vmem %s5, %s245
      %s247 = smul.u32 2, %s21
      %s248 = smul.u32 %s21, 16
      %s249 = scalar_lea.vmem %s237, %s248
      %v250 = vld [vmem:[%s249] sm:$0xff]
      %v251 = vld [vmem:[%s249 + $0x8] sm:$0xff]
      %v252 = vld [vmem:[%s249 + $0x10] sm:$0x3]
      %v253 = vld [vmem:[%s249 + $0x18] sm:$0xff]
      %v254 = vld [vmem:[%s249 + $0x20] sm:$0xff]
      %v255 = vld [vmem:[%s249 + $0x28] sm:$0x3]
      %v256 = vld [vmem:[%s249 + $0x30] sm:$0xff]
      %v257 = vld [vmem:[%s249 + $0x38] sm:$0xff]
      %v258 = vld [vmem:[%s249 + $0x40] sm:$0x3]
      %v259 = vld [vmem:[%s249 + $0x48] sm:$0xff]
      %v260 = vld [vmem:[%s249 + $0x50] sm:$0xff]
      %v261 = vld [vmem:[%s249 + $0x58] sm:$0x3]
      %v262 = vld [vmem:[%s1] sm:$0xff]
      %v263 = vld [vmem:[%s1 + $0x8] sm:$0xff]
      %v264 = vld [vmem:[%s1 + $0x10] sm:$0xff]
      %v265 = vld [vmem:[%s1 + $0x18] sm:$0xff]
      %v266 = vcombine.low %v250, %v256
      %v267 = vcombine.high %v250, %v256
      %v269 = vunpack.c.l.s4 1983009808
      %v270 = vunpack.c.0.s8 %v269
      %v271 = vlaneseq
      %v272 = vshrl.u32 %v271, 7
      %v273 = vsub.s32 %v270, %v272
      %v274 = vrot.slane %v266, %v273
      %v276 = vunpack.c.l.s4 1983009808
      %v277 = vunpack.c.0.s8 %v276
      %v278 = vlaneseq
      %v279 = vshrl.u32 %v278, 7
      %v280 = vsub.s32 %v277, %v279
      %v281 = vrot.slane %v267, %v280
      %v282 = vcombine.low %v253, %v259
      %v283 = vcombine.high %v253, %v259
      %v285 = vunpack.c.l.s4 1983009808
      %v286 = vunpack.c.0.s8 %v285
      %v287 = vlaneseq
      %v288 = vshrl.u32 %v287, 7
      %v289 = vsub.s32 %v286, %v288
      %v290 = vrot.slane %v282, %v289
      %v292 = vunpack.c.l.s4 1983009808
      %v293 = vunpack.c.0.s8 %v292
      %v294 = vlaneseq
      %v295 = vshrl.u32 %v294, 7
      %v296 = vsub.s32 %v293, %v295
      %v297 = vrot.slane %v283, %v296
      %v298 = vcombine.low %v274, %v290
      %v299 = vcombine.high %v274, %v290
      %v301 = vunpack.c.l.s4 1934713408
      %v302 = vunpack.c.0.s8 %v301
      %v303 = vlaneseq
      %v304 = vshrl.u32 %v303, 7
      %v305 = vsub.s32 %v302, %v304
      %v306 = vrot.slane %v298, %v305
      %v308 = vunpack.c.l.s4 1934713408
      %v309 = vunpack.c.0.s8 %v308
      %v310 = vlaneseq
      %v311 = vshrl.u32 %v310, 7
      %v312 = vsub.s32 %v309, %v311
      %v313 = vrot.slane %v299, %v312
      %v314 = vcombine.low %v281, %v297
      %v315 = vcombine.high %v281, %v297
      %v317 = vunpack.c.l.s4 1934713408
      %v318 = vunpack.c.0.s8 %v317
      %v319 = vlaneseq
      %v320 = vshrl.u32 %v319, 7
      %v321 = vsub.s32 %v318, %v320
      %v322 = vrot.slane %v314, %v321
      %v324 = vunpack.c.l.s4 1934713408
      %v325 = vunpack.c.0.s8 %v324
      %v326 = vlaneseq
      %v327 = vshrl.u32 %v326, 7
      %v328 = vsub.s32 %v325, %v327
      %v329 = vrot.slane %v315, %v328
      %v330 = vcombine.high %v306, 0.0
      %v331 = vcombine.high %v313, 0.0
      %v332 = vcombine.high %v322, 0.0
      %v333 = vcombine.high %v329, 0.0
      %v334 = vcombine.low %v251, %v257
      %v335 = vcombine.high %v251, %v257
      %v337 = vunpack.c.l.s4 1983009808
      %v338 = vunpack.c.0.s8 %v337
      %v339 = vlaneseq
      %v340 = vshrl.u32 %v339, 7
      %v341 = vsub.s32 %v338, %v340
      %v342 = vrot.slane %v334, %v341
      %v344 = vunpack.c.l.s4 1983009808
      %v345 = vunpack.c.0.s8 %v344
      %v346 = vlaneseq
      %v347 = vshrl.u32 %v346, 7
      %v348 = vsub.s32 %v345, %v347
      %v349 = vrot.slane %v335, %v348
      %v350 = vcombine.low %v254, %v260
      %v351 = vcombine.high %v254, %v260
      %v353 = vunpack.c.l.s4 1983009808
      %v354 = vunpack.c.0.s8 %v353
      %v355 = vlaneseq
      %v356 = vshrl.u32 %v355, 7
      %v357 = vsub.s32 %v354, %v356
      %v358 = vrot.slane %v350, %v357
      %v360 = vunpack.c.l.s4 1983009808
      %v361 = vunpack.c.0.s8 %v360
      %v362 = vlaneseq
      %v363 = vshrl.u32 %v362, 7
      %v364 = vsub.s32 %v361, %v363
      %v365 = vrot.slane %v351, %v364
      %v366 = vcombine.low %v342, %v358
      %v367 = vcombine.high %v342, %v358
      %v369 = vunpack.c.l.s4 1934713408
      %v370 = vunpack.c.0.s8 %v369
      %v371 = vlaneseq
      %v372 = vshrl.u32 %v371, 7
      %v373 = vsub.s32 %v370, %v372
      %v374 = vrot.slane %v366, %v373
      %v376 = vunpack.c.l.s4 1934713408
      %v377 = vunpack.c.0.s8 %v376
      %v378 = vlaneseq
      %v379 = vshrl.u32 %v378, 7
      %v380 = vsub.s32 %v377, %v379
      %v381 = vrot.slane %v367, %v380
      %v382 = vcombine.low %v349, %v365
      %v383 = vcombine.high %v349, %v365
      %v385 = vunpack.c.l.s4 1934713408
      %v386 = vunpack.c.0.s8 %v385
      %v387 = vlaneseq
      %v388 = vshrl.u32 %v387, 7
      %v389 = vsub.s32 %v386, %v388
      %v390 = vrot.slane %v382, %v389
      %v392 = vunpack.c.l.s4 1934713408
      %v393 = vunpack.c.0.s8 %v392
      %v394 = vlaneseq
      %v395 = vshrl.u32 %v394, 7
      %v396 = vsub.s32 %v393, %v395
      %v397 = vrot.slane %v383, %v396
      %v398 = vcombine.high %v374, 0.0
      %v399 = vcombine.high %v381, 0.0
      %v400 = vcombine.high %v390, 0.0
      %v401 = vcombine.high %v397, 0.0
      %403 = vrot.lane.b32.xlu0 %v330, 16
      %v404 = vpop.permute.xlu0 %403
      %407 = vrot.lane.b32.xlu0 %v313, 32
      %v408 = vpop.permute.xlu0 %407
      %411 = vrot.lane.b32.xlu0 %v331, 48
      %v412 = vpop.permute.xlu0 %411
      %415 = vrot.lane.b32.xlu0 %v322, 64
      %v416 = vpop.permute.xlu0 %415
      %419 = vrot.lane.b32.xlu0 %v332, 80
      %v420 = vpop.permute.xlu0 %419
      %423 = vrot.lane.b32.xlu0 %v329, 96
      %v424 = vpop.permute.xlu0 %423
      %427 = vrot.lane.b32.xlu0 %v333, 112
      %v428 = vpop.permute.xlu0 %427
      %431 = vrot.lane.b32.xlu0 %v398, 16
      %v432 = vpop.permute.xlu0 %431
      %435 = vrot.lane.b32.xlu0 %v381, 32
      %v436 = vpop.permute.xlu0 %435
      %439 = vrot.lane.b32.xlu0 %v399, 48
      %v440 = vpop.permute.xlu0 %439
      %443 = vrot.lane.b32.xlu0 %v390, 64
      %v444 = vpop.permute.xlu0 %443
      %447 = vrot.lane.b32.xlu0 %v400, 80
      %v448 = vpop.permute.xlu0 %447
      %451 = vrot.lane.b32.xlu0 %v397, 96
      %v452 = vpop.permute.xlu0 %451
      %455 = vrot.lane.b32.xlu0 %v401, 112
      %v456 = vpop.permute.xlu0 %455
      %vm458 = vcmask 130048
      %v459 = vsel %vm458, %v306, %v404
      %vm460 = vcmask 261120
      %v461 = vsel %vm460, %v459, %v408
      %vm462 = vcmask 392192
      %v463 = vsel %vm462, %v461, %v412
      %vm464 = vcmask 523264
      %v465 = vsel %vm464, %v463, %v416
      %vm466 = vcmask 654336
      %v467 = vsel %vm466, %v465, %v420
      %vm468 = vcmask 785408
      %v469 = vsel %vm468, %v467, %v424
      %vm470 = vcmask 916480
      %v471 = vsel %vm470, %v469, %v428
      %v472 = vsel %vm458, %v374, %v432
      %v473 = vsel %vm460, %v472, %v436
      %v474 = vsel %vm462, %v473, %v440
      %v475 = vsel %vm464, %v474, %v444
      %v476 = vsel %vm466, %v475, %v448
      %v477 = vsel %vm468, %v476, %v452
      %v478 = vsel %vm470, %v477, %v456
      %s479 = scalar_lea.vmem %s1, 32
      %v480 = vld [vmem:[%s479] sm:$0xff]
      %v481 = vld [vmem:[%s479 + $0x8] sm:$0xff]
      %v482 = vld [vmem:[%s479 + $0x10] sm:$0xff]
      %v483 = vld [vmem:[%s479 + $0x18] sm:$0xff]
      %492 = vrot.lane.b32.xlu0 %v250, 127
      %v493 = vpop.permute.xlu0 %492
      %494 = vrot.lane.b32.xlu0 %v251, 127
      %v495 = vpop.permute.xlu0 %494
      %496 = vrot.lane.b32.xlu0 %v253, 127
      %v497 = vpop.permute.xlu0 %496
      %498 = vrot.lane.b32.xlu0 %v254, 127
      %v499 = vpop.permute.xlu0 %498
      %500 = vrot.lane.b32.xlu0 %v256, 127
      %v501 = vpop.permute.xlu0 %500
      %502 = vrot.lane.b32.xlu0 %v257, 127
      %v503 = vpop.permute.xlu0 %502
      %504 = vrot.lane.b32.xlu0 %v259, 127
      %v505 = vpop.permute.xlu0 %504
      %506 = vrot.lane.b32.xlu0 %v260, 127
      %v507 = vpop.permute.xlu0 %506
      %v516 = vcombine.low %v493, %v501
      %v517 = vcombine.high %v493, %v501
      %v519 = vunpack.c.l.s4 1983009808
      %v520 = vunpack.c.0.s8 %v519
      %v521 = vlaneseq
      %v522 = vshrl.u32 %v521, 7
      %v523 = vsub.s32 %v520, %v522
      %v524 = vrot.slane %v516, %v523
      %v526 = vunpack.c.l.s4 1983009808
      %v527 = vunpack.c.0.s8 %v526
      %v528 = vlaneseq
      %v529 = vshrl.u32 %v528, 7
      %v530 = vsub.s32 %v527, %v529
      %v531 = vrot.slane %v517, %v530
      %v532 = vcombine.low %v497, %v505
      %v533 = vcombine.high %v497, %v505
      %v535 = vunpack.c.l.s4 1983009808
      %v536 = vunpack.c.0.s8 %v535
      %v537 = vlaneseq
      %v538 = vshrl.u32 %v537, 7
      %v539 = vsub.s32 %v536, %v538
      %v540 = vrot.slane %v532, %v539
      %v542 = vunpack.c.l.s4 1983009808
      %v543 = vunpack.c.0.s8 %v542
      %v544 = vlaneseq
      %v545 = vshrl.u32 %v544, 7
      %v546 = vsub.s32 %v543, %v545
      %v547 = vrot.slane %v533, %v546
      %v548 = vcombine.low %v524, %v540
      %v549 = vcombine.high %v524, %v540
      %v551 = vunpack.c.l.s4 1934713408
      %v552 = vunpack.c.0.s8 %v551
      %v553 = vlaneseq
      %v554 = vshrl.u32 %v553, 7
      %v555 = vsub.s32 %v552, %v554
      %v556 = vrot.slane %v548, %v555
      %v558 = vunpack.c.l.s4 1934713408
      %v559 = vunpack.c.0.s8 %v558
      %v560 = vlaneseq
      %v561 = vshrl.u32 %v560, 7
      %v562 = vsub.s32 %v559, %v561
      %v563 = vrot.slane %v549, %v562
      %v564 = vcombine.low %v531, %v547
      %v565 = vcombine.high %v531, %v547
      %v567 = vunpack.c.l.s4 1934713408
      %v568 = vunpack.c.0.s8 %v567
      %v569 = vlaneseq
      %v570 = vshrl.u32 %v569, 7
      %v571 = vsub.s32 %v568, %v570
      %v572 = vrot.slane %v564, %v571
      %v574 = vunpack.c.l.s4 1934713408
      %v575 = vunpack.c.0.s8 %v574
      %v576 = vlaneseq
      %v577 = vshrl.u32 %v576, 7
      %v578 = vsub.s32 %v575, %v577
      %v579 = vrot.slane %v565, %v578
      %v580 = vcombine.high %v556, 0.0
      %v581 = vcombine.high %v563, 0.0
      %v582 = vcombine.high %v572, 0.0
      %v583 = vcombine.high %v579, 0.0
      %v584 = vcombine.low %v495, %v503
      %v585 = vcombine.high %v495, %v503
      %v587 = vunpack.c.l.s4 1983009808
      %v588 = vunpack.c.0.s8 %v587
      %v589 = vlaneseq
      %v590 = vshrl.u32 %v589, 7
      %v591 = vsub.s32 %v588, %v590
      %v592 = vrot.slane %v584, %v591
      %v594 = vunpack.c.l.s4 1983009808
      %v595 = vunpack.c.0.s8 %v594
      %v596 = vlaneseq
      %v597 = vshrl.u32 %v596, 7
      %v598 = vsub.s32 %v595, %v597
      %v599 = vrot.slane %v585, %v598
      %v600 = vcombine.low %v499, %v507
      %v601 = vcombine.high %v499, %v507
      %v603 = vunpack.c.l.s4 1983009808
      %v604 = vunpack.c.0.s8 %v603
      %v605 = vlaneseq
      %v606 = vshrl.u32 %v605, 7
      %v607 = vsub.s32 %v604, %v606
      %v608 = vrot.slane %v600, %v607
      %v610 = vunpack.c.l.s4 1983009808
      %v611 = vunpack.c.0.s8 %v610
      %v612 = vlaneseq
      %v613 = vshrl.u32 %v612, 7
      %v614 = vsub.s32 %v611, %v613
      %v615 = vrot.slane %v601, %v614
      %v616 = vcombine.low %v592, %v608
      %v617 = vcombine.high %v592, %v608
      %v619 = vunpack.c.l.s4 1934713408
      %v620 = vunpack.c.0.s8 %v619
      %v621 = vlaneseq
      %v622 = vshrl.u32 %v621, 7
      %v623 = vsub.s32 %v620, %v622
      %v624 = vrot.slane %v616, %v623
      %v626 = vunpack.c.l.s4 1934713408
      %v627 = vunpack.c.0.s8 %v626
      %v628 = vlaneseq
      %v629 = vshrl.u32 %v628, 7
      %v630 = vsub.s32 %v627, %v629
      %v631 = vrot.slane %v617, %v630
      %v632 = vcombine.low %v599, %v615
      %v633 = vcombine.high %v599, %v615
      %v635 = vunpack.c.l.s4 1934713408
      %v636 = vunpack.c.0.s8 %v635
      %v637 = vlaneseq
      %v638 = vshrl.u32 %v637, 7
      %v639 = vsub.s32 %v636, %v638
      %v640 = vrot.slane %v632, %v639
      %v642 = vunpack.c.l.s4 1934713408
      %v643 = vunpack.c.0.s8 %v642
      %v644 = vlaneseq
      %v645 = vshrl.u32 %v644, 7
      %v646 = vsub.s32 %v643, %v645
      %v647 = vrot.slane %v633, %v646
      %v648 = vcombine.high %v624, 0.0
      %v649 = vcombine.high %v631, 0.0
      %v650 = vcombine.high %v640, 0.0
      %v651 = vcombine.high %v647, 0.0
      %653 = vrot.lane.b32.xlu0 %v580, 16
      %v654 = vpop.permute.xlu0 %653
      %657 = vrot.lane.b32.xlu0 %v563, 32
      %v658 = vpop.permute.xlu0 %657
      %661 = vrot.lane.b32.xlu0 %v581, 48
      %v662 = vpop.permute.xlu0 %661
      %665 = vrot.lane.b32.xlu0 %v572, 64
      %v666 = vpop.permute.xlu0 %665
      %669 = vrot.lane.b32.xlu0 %v582, 80
      %v670 = vpop.permute.xlu0 %669
      %673 = vrot.lane.b32.xlu0 %v579, 96
      %v674 = vpop.permute.xlu0 %673
      %677 = vrot.lane.b32.xlu0 %v583, 112
      %v678 = vpop.permute.xlu0 %677
      %681 = vrot.lane.b32.xlu0 %v648, 16
      %v682 = vpop.permute.xlu0 %681
      %685 = vrot.lane.b32.xlu0 %v631, 32
      %v686 = vpop.permute.xlu0 %685
      %689 = vrot.lane.b32.xlu0 %v649, 48
      %v690 = vpop.permute.xlu0 %689
      %693 = vrot.lane.b32.xlu0 %v640, 64
      %v694 = vpop.permute.xlu0 %693
      %697 = vrot.lane.b32.xlu0 %v650, 80
      %v698 = vpop.permute.xlu0 %697
      %701 = vrot.lane.b32.xlu0 %v647, 96
      %v702 = vpop.permute.xlu0 %701
      %705 = vrot.lane.b32.xlu0 %v651, 112
      %v706 = vpop.permute.xlu0 %705
      %v708 = vsel %vm458, %v556, %v654
      %v709 = vsel %vm460, %v708, %v658
      %v710 = vsel %vm462, %v709, %v662
      %v711 = vsel %vm464, %v710, %v666
      %v712 = vsel %vm466, %v711, %v670
      %v713 = vsel %vm468, %v712, %v674
      %v714 = vsel %vm470, %v713, %v678
      %v715 = vsel %vm458, %v624, %v682
      %v716 = vsel %vm460, %v715, %v686
      %v717 = vsel %vm462, %v716, %v690
      %v718 = vsel %vm464, %v717, %v694
      %v719 = vsel %vm466, %v718, %v698
      %v720 = vsel %vm468, %v719, %v702
      %v721 = vsel %vm470, %v720, %v706
      %vm722 = vcmask 31744
      %v724 = vsel %vm722, %v480, 0
      %v727 = vsel %vm722, %v481, 0
      %v730 = vsel %vm722, %v482, 0
      %v733 = vsel %vm722, %v483, 0
      %vm735 = vcmask 1043456
      %v737 = vsel %vm735, %v714, 0
      %v740 = vsel %vm735, %v721, 0
      %742 = vmatprep.subr.mxu0 0.0
      %743 = vmatpush1.msra.mxu0 0.0
      %744 = vmatprep.subr.mxu0 0.0
      %745 = vmatpush1.msra.mxu0 0.0
      %746 = vmatprep.subr.mxu0 0.0
      %747 = vmatpush1.msra.mxu0 0.0
      %748 = vmatprep.subr.mxu0 0.0
      %749 = vmatpush1.msra.mxu0 0.0
      %750 = vmatprep.subr.mxu0 0.0
      %751 = vmatpush1.msra.mxu0 0.0
      %752 = vmatprep.subr.mxu0 0.0
      %753 = vmatpush1.msra.mxu0 0.0
      %754 = vmatprep.subr.mxu0 0.0
      %755 = vmatpush1.msra.mxu0 0.0
      %756 = vmatprep.subr.mxu0 0.0
      %757 = vmatpush1.msra.mxu0 0.0
      %758 = vmatprep.subr.mxu0 0.0
      %759 = vmatpush1.msra.mxu0 0.0
      %760 = vmatprep.subr.mxu0 0.0
      %761 = vmatpush1.msra.mxu0 0.0
      %762 = vmatprep.subr.mxu0 0.0
      %763 = vmatpush1.msra.mxu0 0.0
      %764 = vmatprep.subr.mxu0 0.0
      %765 = vmatpush1.msra.mxu0 0.0
      %766 = vmatprep.subr.mxu0 0.0
      %767 = vmatpush1.msra.mxu0 0.0
      %768 = vmatprep.subr.mxu0 0.0
      %769 = vmatpush1.msra.mxu0 0.0
      %770 = vmatprep.subr.mxu0 0.0
      %771 = vmatpush1.msra.mxu0 0.0
      %772 = vmatprep.subr.mxu0 %v740
      %773 = vmatpush1.msra.mxu0 %v737
      %774 = vmatprep.subr.mxu0 0.0
      %775 = vmatpush2.msra.mxu0 0.0
      %776 = vmatprep.subr.mxu0 0.0
      %777 = vmatpush2.msra.mxu0 0.0
      %778 = vmatprep.subr.mxu0 0.0
      %779 = vmatpush2.msra.mxu0 0.0
      %780 = vmatprep.subr.mxu0 0.0
      %781 = vmatpush2.msra.mxu0 0.0
      %782 = vmatprep.subr.mxu0 0.0
      %783 = vmatpush2.msra.mxu0 0.0
      %784 = vmatprep.subr.mxu0 0.0
      %785 = vmatpush2.msra.mxu0 0.0
      %786 = vmatprep.subr.mxu0 0.0
      %787 = vmatpush2.msra.mxu0 0.0
      %788 = vmatprep.subr.mxu0 0.0
      %789 = vmatpush2.msra.mxu0 0.0
      %790 = vmatprep.subr.mxu0 0.0
      %791 = vmatpush2.msra.mxu0 0.0
      %792 = vmatprep.subr.mxu0 0.0
      %793 = vmatpush2.msra.mxu0 0.0
      %794 = vmatprep.subr.mxu0 0.0
      %795 = vmatpush2.msra.mxu0 0.0
      %796 = vmatprep.subr.mxu0 0.0
      %797 = vmatpush2.msra.mxu0 0.0
      %798 = vmatprep.subr.mxu0 0.0
      %799 = vmatpush2.msra.mxu0 0.0
      %800 = vmatprep.subr.mxu0 0.0
      %801 = vmatpush2.msra.mxu0 0.0
      %802 = vmatprep.subr.mxu0 0.0
      %803 = vmatpush2.msra.mxu0 0.0
      %804 = vmatprep.subr.mxu0 0.0
      %805 = vmatpush2.msra.mxu0 0.0
      %806 = vmatprep.mubr.f32.mxu0 0.0
      %807 = vmatmul.mubr.f32.gmra.mxu0 %v724
      %v808 = vpop.f32.mrf.mxu0
      %v809 = vadd.f32 0.0, %v808
      %v810 = vpop.f32.mrf.mxu0
      %v811 = vadd.f32 0.0, %v810
      %812 = vmatprep.mubr.f32.mxu0 0.0
      %813 = vmatmul.mubr.f32.gmra.mxu0 %v727
      %v814 = vpop.f32.mrf.mxu0
      %v815 = vadd.f32 0.0, %v814
      %v816 = vpop.f32.mrf.mxu0
      %v817 = vadd.f32 0.0, %v816
      %818 = vmatprep.mubr.f32.mxu0 0.0
      %819 = vmatmul.mubr.f32.gmra.mxu0 %v730
      %v820 = vpop.f32.mrf.mxu0
      %v821 = vadd.f32 0.0, %v820
      %v822 = vpop.f32.mrf.mxu0
      %v823 = vadd.f32 0.0, %v822
      %824 = vmatprep.mubr.f32.mxu0 0.0
      %825 = vmatmul.mubr.f32.gmra.mxu0 %v733
      %v826 = vpop.f32.mrf.mxu0
      %v827 = vadd.f32 0.0, %v826
      %v828 = vpop.f32.mrf.mxu0
      %v829 = vadd.f32 0.0, %v828
      %830 = vdwg.mxu0
      %v832 = vsel %vm722, %v262, 0
      %v835 = vsel %vm722, %v263, 0
      %v838 = vsel %vm722, %v264, 0
      %v841 = vsel %vm722, %v265, 0
      %v844 = vsel %vm735, %v471, 0
      %v847 = vsel %vm735, %v478, 0
      %849 = vmatprep.subr.mxu0 0.0
      %850 = vmatpush1.msra.mxu0 0.0
      %851 = vmatprep.subr.mxu0 0.0
      %852 = vmatpush1.msra.mxu0 0.0
      %853 = vmatprep.subr.mxu0 0.0
      %854 = vmatpush1.msra.mxu0 0.0
      %855 = vmatprep.subr.mxu0 0.0
      %856 = vmatpush1.msra.mxu0 0.0
      %857 = vmatprep.subr.mxu0 0.0
      %858 = vmatpush1.msra.mxu0 0.0
      %859 = vmatprep.subr.mxu0 0.0
      %860 = vmatpush1.msra.mxu0 0.0
      %861 = vmatprep.subr.mxu0 0.0
      %862 = vmatpush1.msra.mxu0 0.0
      %863 = vmatprep.subr.mxu0 0.0
      %864 = vmatpush1.msra.mxu0 0.0
      %865 = vmatprep.subr.mxu0 0.0
      %866 = vmatpush1.msra.mxu0 0.0
      %867 = vmatprep.subr.mxu0 0.0
      %868 = vmatpush1.msra.mxu0 0.0
      %869 = vmatprep.subr.mxu0 0.0
      %870 = vmatpush1.msra.mxu0 0.0
      %871 = vmatprep.subr.mxu0 0.0
      %872 = vmatpush1.msra.mxu0 0.0
      %873 = vmatprep.subr.mxu0 0.0
      %874 = vmatpush1.msra.mxu0 0.0
      %875 = vmatprep.subr.mxu0 0.0
      %876 = vmatpush1.msra.mxu0 0.0
      %877 = vmatprep.subr.mxu0 0.0
      %878 = vmatpush1.msra.mxu0 0.0
      %879 = vmatprep.subr.mxu0 %v847
      %880 = vmatpush1.msra.mxu0 %v844
      %881 = vmatprep.subr.mxu0 0.0
      %882 = vmatpush2.msra.mxu0 0.0
      %883 = vmatprep.subr.mxu0 0.0
      %884 = vmatpush2.msra.mxu0 0.0
      %885 = vmatprep.subr.mxu0 0.0
      %886 = vmatpush2.msra.mxu0 0.0
      %887 = vmatprep.subr.mxu0 0.0
      %888 = vmatpush2.msra.mxu0 0.0
      %889 = vmatprep.subr.mxu0 0.0
      %890 = vmatpush2.msra.mxu0 0.0
      %891 = vmatprep.subr.mxu0 0.0
      %892 = vmatpush2.msra.mxu0 0.0
      %893 = vmatprep.subr.mxu0 0.0
      %894 = vmatpush2.msra.mxu0 0.0
      %895 = vmatprep.subr.mxu0 0.0
      %896 = vmatpush2.msra.mxu0 0.0
      %897 = vmatprep.subr.mxu0 0.0
      %898 = vmatpush2.msra.mxu0 0.0
      %899 = vmatprep.subr.mxu0 0.0
      %900 = vmatpush2.msra.mxu0 0.0
      %901 = vmatprep.subr.mxu0 0.0
      %902 = vmatpush2.msra.mxu0 0.0
      %903 = vmatprep.subr.mxu0 0.0
      %904 = vmatpush2.msra.mxu0 0.0
      %905 = vmatprep.subr.mxu0 0.0
      %906 = vmatpush2.msra.mxu0 0.0
      %907 = vmatprep.subr.mxu0 0.0
      %908 = vmatpush2.msra.mxu0 0.0
      %909 = vmatprep.subr.mxu0 0.0
      %910 = vmatpush2.msra.mxu0 0.0
      %911 = vmatprep.subr.mxu0 0.0
      %912 = vmatpush2.msra.mxu0 0.0
      %913 = vmatprep.mubr.f32.mxu0 0.0
      %914 = vmatmul.mubr.f32.gmra.mxu0 %v832
      %v915 = vpop.f32.mrf.mxu0
      %v916 = vadd.f32 %v809, %v915
      %v917 = vpop.f32.mrf.mxu0
      %v918 = vadd.f32 %v811, %v917
      %919 = vmatprep.mubr.f32.mxu0 0.0
      %920 = vmatmul.mubr.f32.gmra.mxu0 %v835
      %v921 = vpop.f32.mrf.mxu0
      %v922 = vadd.f32 %v815, %v921
      %v923 = vpop.f32.mrf.mxu0
      %v924 = vadd.f32 %v817, %v923
      %925 = vmatprep.mubr.f32.mxu0 0.0
      %926 = vmatmul.mubr.f32.gmra.mxu0 %v838
      %v927 = vpop.f32.mrf.mxu0
      %v928 = vadd.f32 %v821, %v927
      %v929 = vpop.f32.mrf.mxu0
      %v930 = vadd.f32 %v823, %v929
      %931 = vmatprep.mubr.f32.mxu0 0.0
      %932 = vmatmul.mubr.f32.gmra.mxu0 %v841
      %v933 = vpop.f32.mrf.mxu0
      %v934 = vadd.f32 %v827, %v933
      %v935 = vpop.f32.mrf.mxu0
      %v936 = vadd.f32 %v829, %v935
      %937 = vdwg.mxu0
      %s938 = scalar_lea.vmem %s1, 64
      %v939 = vld [vmem:[%s938] sm:$0xff]
      %v940 = vld [vmem:[%s938 + $0x8] sm:$0xff]
      %v941 = vld [vmem:[%s938 + $0x10] sm:$0xff]
      %v942 = vld [vmem:[%s938 + $0x18] sm:$0xff]
      %943 = vrot.lane.b32.xlu0 %v250, 126
      %v944 = vpop.permute.xlu0 %943
      %945 = vrot.lane.b32.xlu0 %v251, 126
      %v946 = vpop.permute.xlu0 %945
      %947 = vrot.lane.b32.xlu0 %v253, 126
      %v948 = vpop.permute.xlu0 %947
      %949 = vrot.lane.b32.xlu0 %v254, 126
      %v950 = vpop.permute.xlu0 %949
      %951 = vrot.lane.b32.xlu0 %v256, 126
      %v952 = vpop.permute.xlu0 %951
      %953 = vrot.lane.b32.xlu0 %v257, 126
      %v954 = vpop.permute.xlu0 %953
      %955 = vrot.lane.b32.xlu0 %v259, 126
      %v956 = vpop.permute.xlu0 %955
      %957 = vrot.lane.b32.xlu0 %v260, 126
      %v958 = vpop.permute.xlu0 %957
      %v967 = vcombine.low %v944, %v952
      %v968 = vcombine.high %v944, %v952
      %v970 = vunpack.c.l.s4 1983009808
      %v971 = vunpack.c.0.s8 %v970
      %v972 = vlaneseq
      %v973 = vshrl.u32 %v972, 7
      %v974 = vsub.s32 %v971, %v973
      %v975 = vrot.slane %v967, %v974
      %v977 = vunpack.c.l.s4 1983009808
      %v978 = vunpack.c.0.s8 %v977
      %v979 = vlaneseq
      %v980 = vshrl.u32 %v979, 7
      %v981 = vsub.s32 %v978, %v980
      %v982 = vrot.slane %v968, %v981
      %v983 = vcombine.low %v948, %v956
      %v984 = vcombine.high %v948, %v956
      %v986 = vunpack.c.l.s4 1983009808
      %v987 = vunpack.c.0.s8 %v986
      %v988 = vlaneseq
      %v989 = vshrl.u32 %v988, 7
      %v990 = vsub.s32 %v987, %v989
      %v991 = vrot.slane %v983, %v990
      %v993 = vunpack.c.l.s4 1983009808
      %v994 = vunpack.c.0.s8 %v993
      %v995 = vlaneseq
      %v996 = vshrl.u32 %v995, 7
      %v997 = vsub.s32 %v994, %v996
      %v998 = vrot.slane %v984, %v997
      %v999 = vcombine.low %v975, %v991
      %v1000 = vcombine.high %v975, %v991
      %v1002 = vunpack.c.l.s4 1934713408
      %v1003 = vunpack.c.0.s8 %v1002
      %v1004 = vlaneseq
      %v1005 = vshrl.u32 %v1004, 7
      %v1006 = vsub.s32 %v1003, %v1005
      %v1007 = vrot.slane %v999, %v1006
      %v1009 = vunpack.c.l.s4 1934713408
      %v1010 = vunpack.c.0.s8 %v1009
      %v1011 = vlaneseq
      %v1012 = vshrl.u32 %v1011, 7
      %v1013 = vsub.s32 %v1010, %v1012
      %v1014 = vrot.slane %v1000, %v1013
      %v1015 = vcombine.low %v982, %v998
      %v1016 = vcombine.high %v982, %v998
      %v1018 = vunpack.c.l.s4 1934713408
      %v1019 = vunpack.c.0.s8 %v1018
      %v1020 = vlaneseq
      %v1021 = vshrl.u32 %v1020, 7
      %v1022 = vsub.s32 %v1019, %v1021
      %v1023 = vrot.slane %v1015, %v1022
      %v1025 = vunpack.c.l.s4 1934713408
      %v1026 = vunpack.c.0.s8 %v1025
      %v1027 = vlaneseq
      %v1028 = vshrl.u32 %v1027, 7
      %v1029 = vsub.s32 %v1026, %v1028
      %v1030 = vrot.slane %v1016, %v1029
      %v1031 = vcombine.high %v1007, 0.0
      %v1032 = vcombine.high %v1014, 0.0
      %v1033 = vcombine.high %v1023, 0.0
      %v1034 = vcombine.high %v1030, 0.0
      %v1035 = vcombine.low %v946, %v954
      %v1036 = vcombine.high %v946, %v954
      %v1038 = vunpack.c.l.s4 1983009808
      %v1039 = vunpack.c.0.s8 %v1038
      %v1040 = vlaneseq
      %v1041 = vshrl.u32 %v1040, 7
      %v1042 = vsub.s32 %v1039, %v1041
      %v1043 = vrot.slane %v1035, %v1042
      %v1045 = vunpack.c.l.s4 1983009808
      %v1046 = vunpack.c.0.s8 %v1045
      %v1047 = vlaneseq
      %v1048 = vshrl.u32 %v1047, 7
      %v1049 = vsub.s32 %v1046, %v1048
      %v1050 = vrot.slane %v1036, %v1049
      %v1051 = vcombine.low %v950, %v958
      %v1052 = vcombine.high %v950, %v958
      %v1054 = vunpack.c.l.s4 1983009808
      %v1055 = vunpack.c.0.s8 %v1054
      %v1056 = vlaneseq
      %v1057 = vshrl.u32 %v1056, 7
      %v1058 = vsub.s32 %v1055, %v1057
      %v1059 = vrot.slane %v1051, %v1058
      %v1061 = vunpack.c.l.s4 1983009808
      %v1062 = vunpack.c.0.s8 %v1061
      %v1063 = vlaneseq
      %v1064 = vshrl.u32 %v1063, 7
      %v1065 = vsub.s32 %v1062, %v1064
      %v1066 = vrot.slane %v1052, %v1065
      %v1067 = vcombine.low %v1043, %v1059
      %v1068 = vcombine.high %v1043, %v1059
      %v1070 = vunpack.c.l.s4 1934713408
      %v1071 = vunpack.c.0.s8 %v1070
      %v1072 = vlaneseq
      %v1073 = vshrl.u32 %v1072, 7
      %v1074 = vsub.s32 %v1071, %v1073
      %v1075 = vrot.slane %v1067, %v1074
      %v1077 = vunpack.c.l.s4 1934713408
      %v1078 = vunpack.c.0.s8 %v1077
      %v1079 = vlaneseq
      %v1080 = vshrl.u32 %v1079, 7
      %v1081 = vsub.s32 %v1078, %v1080
      %v1082 = vrot.slane %v1068, %v1081
      %v1083 = vcombine.low %v1050, %v1066
      %v1084 = vcombine.high %v1050, %v1066
      %v1086 = vunpack.c.l.s4 1934713408
      %v1087 = vunpack.c.0.s8 %v1086
      %v1088 = vlaneseq
      %v1089 = vshrl.u32 %v1088, 7
      %v1090 = vsub.s32 %v1087, %v1089
      %v1091 = vrot.slane %v1083, %v1090
      %v1093 = vunpack.c.l.s4 1934713408
      %v1094 = vunpack.c.0.s8 %v1093
      %v1095 = vlaneseq
      %v1096 = vshrl.u32 %v1095, 7
      %v1097 = vsub.s32 %v1094, %v1096
      %v1098 = vrot.slane %v1084, %v1097
      %v1099 = vcombine.high %v1075, 0.0
      %v1100 = vcombine.high %v1082, 0.0
      %v1101 = vcombine.high %v1091, 0.0
      %v1102 = vcombine.high %v1098, 0.0
      %1104 = vrot.lane.b32.xlu0 %v1031, 16
      %v1105 = vpop.permute.xlu0 %1104
      %1108 = vrot.lane.b32.xlu0 %v1014, 32
      %v1109 = vpop.permute.xlu0 %1108
      %1112 = vrot.lane.b32.xlu0 %v1032, 48
      %v1113 = vpop.permute.xlu0 %1112
      %1116 = vrot.lane.b32.xlu0 %v1023, 64
      %v1117 = vpop.permute.xlu0 %1116
      %1120 = vrot.lane.b32.xlu0 %v1033, 80
      %v1121 = vpop.permute.xlu0 %1120
      %1124 = vrot.lane.b32.xlu0 %v1030, 96
      %v1125 = vpop.permute.xlu0 %1124
      %1128 = vrot.lane.b32.xlu0 %v1034, 112
      %v1129 = vpop.permute.xlu0 %1128
      %1132 = vrot.lane.b32.xlu0 %v1099, 16
      %v1133 = vpop.permute.xlu0 %1132
      %1136 = vrot.lane.b32.xlu0 %v1082, 32
      %v1137 = vpop.permute.xlu0 %1136
      %1140 = vrot.lane.b32.xlu0 %v1100, 48
      %v1141 = vpop.permute.xlu0 %1140
      %1144 = vrot.lane.b32.xlu0 %v1091, 64
      %v1145 = vpop.permute.xlu0 %1144
      %1148 = vrot.lane.b32.xlu0 %v1101, 80
      %v1149 = vpop.permute.xlu0 %1148
      %1152 = vrot.lane.b32.xlu0 %v1098, 96
      %v1153 = vpop.permute.xlu0 %1152
      %1156 = vrot.lane.b32.xlu0 %v1102, 112
      %v1157 = vpop.permute.xlu0 %1156
      %v1159 = vsel %vm458, %v1007, %v1105
      %v1160 = vsel %vm460, %v1159, %v1109
      %v1161 = vsel %vm462, %v1160, %v1113
      %v1162 = vsel %vm464, %v1161, %v1117
      %v1163 = vsel %vm466, %v1162, %v1121
      %v1164 = vsel %vm468, %v1163, %v1125
      %v1165 = vsel %vm470, %v1164, %v1129
      %v1166 = vsel %vm458, %v1075, %v1133
      %v1167 = vsel %vm460, %v1166, %v1137
      %v1168 = vsel %vm462, %v1167, %v1141
      %v1169 = vsel %vm464, %v1168, %v1145
      %v1170 = vsel %vm466, %v1169, %v1149
      %v1171 = vsel %vm468, %v1170, %v1153
      %v1172 = vsel %vm470, %v1171, %v1157
      %v1174 = vsel %vm722, %v939, 0
      %v1177 = vsel %vm722, %v940, 0
      %v1180 = vsel %vm722, %v941, 0
      %v1183 = vsel %vm722, %v942, 0
      %v1186 = vsel %vm735, %v1165, 0
      %v1189 = vsel %vm735, %v1172, 0
      %1191 = vmatprep.subr.mxu0 0.0
      %1192 = vmatpush1.msra.mxu0 0.0
      %1193 = vmatprep.subr.mxu0 0.0
      %1194 = vmatpush1.msra.mxu0 0.0
      %1195 = vmatprep.subr.mxu0 0.0
      %1196 = vmatpush1.msra.mxu0 0.0
      %1197 = vmatprep.subr.mxu0 0.0
      %1198 = vmatpush1.msra.mxu0 0.0
      %1199 = vmatprep.subr.mxu0 0.0
      %1200 = vmatpush1.msra.mxu0 0.0
      %1201 = vmatprep.subr.mxu0 0.0
      %1202 = vmatpush1.msra.mxu0 0.0
      %1203 = vmatprep.subr.mxu0 0.0
      %1204 = vmatpush1.msra.mxu0 0.0
      %1205 = vmatprep.subr.mxu0 0.0
      %1206 = vmatpush1.msra.mxu0 0.0
      %1207 = vmatprep.subr.mxu0 0.0
      %1208 = vmatpush1.msra.mxu0 0.0
      %1209 = vmatprep.subr.mxu0 0.0
      %1210 = vmatpush1.msra.mxu0 0.0
      %1211 = vmatprep.subr.mxu0 0.0
      %1212 = vmatpush1.msra.mxu0 0.0
      %1213 = vmatprep.subr.mxu0 0.0
      %1214 = vmatpush1.msra.mxu0 0.0
      %1215 = vmatprep.subr.mxu0 0.0
      %1216 = vmatpush1.msra.mxu0 0.0
      %1217 = vmatprep.subr.mxu0 0.0
      %1218 = vmatpush1.msra.mxu0 0.0
      %1219 = vmatprep.subr.mxu0 0.0
      %1220 = vmatpush1.msra.mxu0 0.0
      %1221 = vmatprep.subr.mxu0 %v1189
      %1222 = vmatpush1.msra.mxu0 %v1186
      %1223 = vmatprep.subr.mxu0 0.0
      %1224 = vmatpush2.msra.mxu0 0.0
      %1225 = vmatprep.subr.mxu0 0.0
      %1226 = vmatpush2.msra.mxu0 0.0
      %1227 = vmatprep.subr.mxu0 0.0
      %1228 = vmatpush2.msra.mxu0 0.0
      %1229 = vmatprep.subr.mxu0 0.0
      %1230 = vmatpush2.msra.mxu0 0.0
      %1231 = vmatprep.subr.mxu0 0.0
      %1232 = vmatpush2.msra.mxu0 0.0
      %1233 = vmatprep.subr.mxu0 0.0
      %1234 = vmatpush2.msra.mxu0 0.0
      %1235 = vmatprep.subr.mxu0 0.0
      %1236 = vmatpush2.msra.mxu0 0.0
      %1237 = vmatprep.subr.mxu0 0.0
      %1238 = vmatpush2.msra.mxu0 0.0
      %1239 = vmatprep.subr.mxu0 0.0
      %1240 = vmatpush2.msra.mxu0 0.0
      %1241 = vmatprep.subr.mxu0 0.0
      %1242 = vmatpush2.msra.mxu0 0.0
      %1243 = vmatprep.subr.mxu0 0.0
      %1244 = vmatpush2.msra.mxu0 0.0
      %1245 = vmatprep.subr.mxu0 0.0
      %1246 = vmatpush2.msra.mxu0 0.0
      %1247 = vmatprep.subr.mxu0 0.0
      %1248 = vmatpush2.msra.mxu0 0.0
      %1249 = vmatprep.subr.mxu0 0.0
      %1250 = vmatpush2.msra.mxu0 0.0
      %1251 = vmatprep.subr.mxu0 0.0
      %1252 = vmatpush2.msra.mxu0 0.0
      %1253 = vmatprep.subr.mxu0 0.0
      %1254 = vmatpush2.msra.mxu0 0.0
      %1255 = vmatprep.mubr.f32.mxu0 0.0
      %1256 = vmatmul.mubr.f32.gmra.mxu0 %v1174
      %v1257 = vpop.f32.mrf.mxu0
      %v1258 = vadd.f32 0.0, %v1257
      %v1259 = vpop.f32.mrf.mxu0
      %v1260 = vadd.f32 0.0, %v1259
      %1261 = vmatprep.mubr.f32.mxu0 0.0
      %1262 = vmatmul.mubr.f32.gmra.mxu0 %v1177
      %v1263 = vpop.f32.mrf.mxu0
      %v1264 = vadd.f32 0.0, %v1263
      %v1265 = vpop.f32.mrf.mxu0
      %v1266 = vadd.f32 0.0, %v1265
      %1267 = vmatprep.mubr.f32.mxu0 0.0
      %1268 = vmatmul.mubr.f32.gmra.mxu0 %v1180
      %v1269 = vpop.f32.mrf.mxu0
      %v1270 = vadd.f32 0.0, %v1269
      %v1271 = vpop.f32.mrf.mxu0
      %v1272 = vadd.f32 0.0, %v1271
      %1273 = vmatprep.mubr.f32.mxu0 0.0
      %1274 = vmatmul.mubr.f32.gmra.mxu0 %v1183
      %v1275 = vpop.f32.mrf.mxu0
      %v1276 = vadd.f32 0.0, %v1275
      %v1277 = vpop.f32.mrf.mxu0
      %v1278 = vadd.f32 0.0, %v1277
      %1279 = vdwg.mxu0
      %v1280 = vadd.f32 %v916, %v1258
      %v1281 = vadd.f32 %v918, %v1260
      %v1282 = vadd.f32 %v922, %v1264
      %v1283 = vadd.f32 %v924, %v1266
      %v1284 = vadd.f32 %v928, %v1270
      %v1285 = vadd.f32 %v930, %v1272
      %v1286 = vadd.f32 %v934, %v1276
      %v1287 = vadd.f32 %v936, %v1278
      %s1288 = scalar_lea.vmem %s1, 96
      %v1289 = vld [vmem:[%s1288] sm:$0xff]
      %v1290 = vld [vmem:[%s1288 + $0x8] sm:$0xff]
      %v1291 = vld [vmem:[%s1288 + $0x10] sm:$0xff]
      %v1292 = vld [vmem:[%s1288 + $0x18] sm:$0xff]
      %vm1297 = vcmask 1046528
      %v1298 = vrot.slane %v250, 1
      %v1299 = vrot.slane %v251, 1
      %v1300 = vsel %vm1297, %v1298, %v1299
      %v1301 = vrot.slane %v252, 1
      %v1302 = vsel %vm1297, %v1299, %v1301
      %v1303 = vrot.slane %v253, 1
      %v1304 = vrot.slane %v254, 1
      %v1305 = vsel %vm1297, %v1303, %v1304
      %v1306 = vrot.slane %v255, 1
      %v1307 = vsel %vm1297, %v1304, %v1306
      %v1308 = vrot.slane %v256, 1
      %v1309 = vrot.slane %v257, 1
      %v1310 = vsel %vm1297, %v1308, %v1309
      %v1311 = vrot.slane %v258, 1
      %v1312 = vsel %vm1297, %v1309, %v1311
      %v1313 = vrot.slane %v259, 1
      %v1314 = vrot.slane %v260, 1
      %v1315 = vsel %vm1297, %v1313, %v1314
      %v1316 = vrot.slane %v261, 1
      %v1317 = vsel %vm1297, %v1314, %v1316
      %v1326 = vcombine.low %v1300, %v1310
      %v1327 = vcombine.high %v1300, %v1310
      %v1329 = vunpack.c.l.s4 1983009808
      %v1330 = vunpack.c.0.s8 %v1329
      %v1331 = vlaneseq
      %v1332 = vshrl.u32 %v1331, 7
      %v1333 = vsub.s32 %v1330, %v1332
      %v1334 = vrot.slane %v1326, %v1333
      %v1336 = vunpack.c.l.s4 1983009808
      %v1337 = vunpack.c.0.s8 %v1336
      %v1338 = vlaneseq
      %v1339 = vshrl.u32 %v1338, 7
      %v1340 = vsub.s32 %v1337, %v1339
      %v1341 = vrot.slane %v1327, %v1340
      %v1342 = vcombine.low %v1305, %v1315
      %v1343 = vcombine.high %v1305, %v1315
      %v1345 = vunpack.c.l.s4 1983009808
      %v1346 = vunpack.c.0.s8 %v1345
      %v1347 = vlaneseq
      %v1348 = vshrl.u32 %v1347, 7
      %v1349 = vsub.s32 %v1346, %v1348
      %v1350 = vrot.slane %v1342, %v1349
      %v1352 = vunpack.c.l.s4 1983009808
      %v1353 = vunpack.c.0.s8 %v1352
      %v1354 = vlaneseq
      %v1355 = vshrl.u32 %v1354, 7
      %v1356 = vsub.s32 %v1353, %v1355
      %v1357 = vrot.slane %v1343, %v1356
      %v1358 = vcombine.low %v1334, %v1350
      %v1359 = vcombine.high %v1334, %v1350
      %v1361 = vunpack.c.l.s4 1934713408
      %v1362 = vunpack.c.0.s8 %v1361
      %v1363 = vlaneseq
      %v1364 = vshrl.u32 %v1363, 7
      %v1365 = vsub.s32 %v1362, %v1364
      %v1366 = vrot.slane %v1358, %v1365
      %v1368 = vunpack.c.l.s4 1934713408
      %v1369 = vunpack.c.0.s8 %v1368
      %v1370 = vlaneseq
      %v1371 = vshrl.u32 %v1370, 7
      %v1372 = vsub.s32 %v1369, %v1371
      %v1373 = vrot.slane %v1359, %v1372
      %v1374 = vcombine.low %v1341, %v1357
      %v1375 = vcombine.high %v1341, %v1357
      %v1377 = vunpack.c.l.s4 1934713408
      %v1378 = vunpack.c.0.s8 %v1377
      %v1379 = vlaneseq
      %v1380 = vshrl.u32 %v1379, 7
      %v1381 = vsub.s32 %v1378, %v1380
      %v1382 = vrot.slane %v1374, %v1381
      %v1384 = vunpack.c.l.s4 1934713408
      %v1385 = vunpack.c.0.s8 %v1384
      %v1386 = vlaneseq
      %v1387 = vshrl.u32 %v1386, 7
      %v1388 = vsub.s32 %v1385, %v1387
      %v1389 = vrot.slane %v1375, %v1388
      %v1390 = vcombine.high %v1366, 0.0
      %v1391 = vcombine.high %v1373, 0.0
      %v1392 = vcombine.high %v1382, 0.0
      %v1393 = vcombine.high %v1389, 0.0
      %v1394 = vcombine.low %v1302, %v1312
      %v1395 = vcombine.high %v1302, %v1312
      %v1397 = vunpack.c.l.s4 1983009808
      %v1398 = vunpack.c.0.s8 %v1397
      %v1399 = vlaneseq
      %v1400 = vshrl.u32 %v1399, 7
      %v1401 = vsub.s32 %v1398, %v1400
      %v1402 = vrot.slane %v1394, %v1401
      %v1404 = vunpack.c.l.s4 1983009808
      %v1405 = vunpack.c.0.s8 %v1404
      %v1406 = vlaneseq
      %v1407 = vshrl.u32 %v1406, 7
      %v1408 = vsub.s32 %v1405, %v1407
      %v1409 = vrot.slane %v1395, %v1408
      %v1410 = vcombine.low %v1307, %v1317
      %v1411 = vcombine.high %v1307, %v1317
      %v1413 = vunpack.c.l.s4 1983009808
      %v1414 = vunpack.c.0.s8 %v1413
      %v1415 = vlaneseq
      %v1416 = vshrl.u32 %v1415, 7
      %v1417 = vsub.s32 %v1414, %v1416
      %v1418 = vrot.slane %v1410, %v1417
      %v1420 = vunpack.c.l.s4 1983009808
      %v1421 = vunpack.c.0.s8 %v1420
      %v1422 = vlaneseq
      %v1423 = vshrl.u32 %v1422, 7
      %v1424 = vsub.s32 %v1421, %v1423
      %v1425 = vrot.slane %v1411, %v1424
      %v1426 = vcombine.low %v1402, %v1418
      %v1427 = vcombine.high %v1402, %v1418
      %v1429 = vunpack.c.l.s4 1934713408
      %v1430 = vunpack.c.0.s8 %v1429
      %v1431 = vlaneseq
      %v1432 = vshrl.u32 %v1431, 7
      %v1433 = vsub.s32 %v1430, %v1432
      %v1434 = vrot.slane %v1426, %v1433
      %v1436 = vunpack.c.l.s4 1934713408
      %v1437 = vunpack.c.0.s8 %v1436
      %v1438 = vlaneseq
      %v1439 = vshrl.u32 %v1438, 7
      %v1440 = vsub.s32 %v1437, %v1439
      %v1441 = vrot.slane %v1427, %v1440
      %v1442 = vcombine.low %v1409, %v1425
      %v1443 = vcombine.high %v1409, %v1425
      %v1445 = vunpack.c.l.s4 1934713408
      %v1446 = vunpack.c.0.s8 %v1445
      %v1447 = vlaneseq
      %v1448 = vshrl.u32 %v1447, 7
      %v1449 = vsub.s32 %v1446, %v1448
      %v1450 = vrot.slane %v1442, %v1449
      %v1452 = vunpack.c.l.s4 1934713408
      %v1453 = vunpack.c.0.s8 %v1452
      %v1454 = vlaneseq
      %v1455 = vshrl.u32 %v1454, 7
      %v1456 = vsub.s32 %v1453, %v1455
      %v1457 = vrot.slane %v1443, %v1456
      %v1458 = vcombine.high %v1434, 0.0
      %v1459 = vcombine.high %v1441, 0.0
      %v1460 = vcombine.high %v1450, 0.0
      %v1461 = vcombine.high %v1457, 0.0
      %1463 = vrot.lane.b32.xlu0 %v1390, 16
      %v1464 = vpop.permute.xlu0 %1463
      %1467 = vrot.lane.b32.xlu0 %v1373, 32
      %v1468 = vpop.permute.xlu0 %1467
      %1471 = vrot.lane.b32.xlu0 %v1391, 48
      %v1472 = vpop.permute.xlu0 %1471
      %1475 = vrot.lane.b32.xlu0 %v1382, 64
      %v1476 = vpop.permute.xlu0 %1475
      %1479 = vrot.lane.b32.xlu0 %v1392, 80
      %v1480 = vpop.permute.xlu0 %1479
      %1483 = vrot.lane.b32.xlu0 %v1389, 96
      %v1484 = vpop.permute.xlu0 %1483
      %1487 = vrot.lane.b32.xlu0 %v1393, 112
      %v1488 = vpop.permute.xlu0 %1487
      %1491 = vrot.lane.b32.xlu0 %v1458, 16
      %v1492 = vpop.permute.xlu0 %1491
      %1495 = vrot.lane.b32.xlu0 %v1441, 32
      %v1496 = vpop.permute.xlu0 %1495
      %1499 = vrot.lane.b32.xlu0 %v1459, 48
      %v1500 = vpop.permute.xlu0 %1499
      %1503 = vrot.lane.b32.xlu0 %v1450, 64
      %v1504 = vpop.permute.xlu0 %1503
      %1507 = vrot.lane.b32.xlu0 %v1460, 80
      %v1508 = vpop.permute.xlu0 %1507
      %1511 = vrot.lane.b32.xlu0 %v1457, 96
      %v1512 = vpop.permute.xlu0 %1511
      %1515 = vrot.lane.b32.xlu0 %v1461, 112
      %v1516 = vpop.permute.xlu0 %1515
      %v1518 = vsel %vm458, %v1366, %v1464
      %v1519 = vsel %vm460, %v1518, %v1468
      %v1520 = vsel %vm462, %v1519, %v1472
      %v1521 = vsel %vm464, %v1520, %v1476
      %v1522 = vsel %vm466, %v1521, %v1480
      %v1523 = vsel %vm468, %v1522, %v1484
      %v1524 = vsel %vm470, %v1523, %v1488
      %v1525 = vsel %vm458, %v1434, %v1492
      %v1526 = vsel %vm460, %v1525, %v1496
      %v1527 = vsel %vm462, %v1526, %v1500
      %v1528 = vsel %vm464, %v1527, %v1504
      %v1529 = vsel %vm466, %v1528, %v1508
      %v1530 = vsel %vm468, %v1529, %v1512
      %v1531 = vsel %vm470, %v1530, %v1516
      %v1533 = vsel %vm722, %v1289, 0
      %v1536 = vsel %vm722, %v1290, 0
      %v1539 = vsel %vm722, %v1291, 0
      %v1542 = vsel %vm722, %v1292, 0
      %v1545 = vsel %vm735, %v1524, 0
      %v1548 = vsel %vm735, %v1531, 0
      %1550 = vmatprep.subr.mxu0 0.0
      %1551 = vmatpush1.msra.mxu0 0.0
      %1552 = vmatprep.subr.mxu0 0.0
      %1553 = vmatpush1.msra.mxu0 0.0
      %1554 = vmatprep.subr.mxu0 0.0
      %1555 = vmatpush1.msra.mxu0 0.0
      %1556 = vmatprep.subr.mxu0 0.0
      %1557 = vmatpush1.msra.mxu0 0.0
      %1558 = vmatprep.subr.mxu0 0.0
      %1559 = vmatpush1.msra.mxu0 0.0
      %1560 = vmatprep.subr.mxu0 0.0
      %1561 = vmatpush1.msra.mxu0 0.0
      %1562 = vmatprep.subr.mxu0 0.0
      %1563 = vmatpush1.msra.mxu0 0.0
      %1564 = vmatprep.subr.mxu0 0.0
      %1565 = vmatpush1.msra.mxu0 0.0
      %1566 = vmatprep.subr.mxu0 0.0
      %1567 = vmatpush1.msra.mxu0 0.0
      %1568 = vmatprep.subr.mxu0 0.0
      %1569 = vmatpush1.msra.mxu0 0.0
      %1570 = vmatprep.subr.mxu0 0.0
      %1571 = vmatpush1.msra.mxu0 0.0
      %1572 = vmatprep.subr.mxu0 0.0
      %1573 = vmatpush1.msra.mxu0 0.0
      %1574 = vmatprep.subr.mxu0 0.0
      %1575 = vmatpush1.msra.mxu0 0.0
      %1576 = vmatprep.subr.mxu0 0.0
      %1577 = vmatpush1.msra.mxu0 0.0
      %1578 = vmatprep.subr.mxu0 0.0
      %1579 = vmatpush1.msra.mxu0 0.0
      %1580 = vmatprep.subr.mxu0 %v1548
      %1581 = vmatpush1.msra.mxu0 %v1545
      %1582 = vmatprep.subr.mxu0 0.0
      %1583 = vmatpush2.msra.mxu0 0.0
      %1584 = vmatprep.subr.mxu0 0.0
      %1585 = vmatpush2.msra.mxu0 0.0
      %1586 = vmatprep.subr.mxu0 0.0
      %1587 = vmatpush2.msra.mxu0 0.0
      %1588 = vmatprep.subr.mxu0 0.0
      %1589 = vmatpush2.msra.mxu0 0.0
      %1590 = vmatprep.subr.mxu0 0.0
      %1591 = vmatpush2.msra.mxu0 0.0
      %1592 = vmatprep.subr.mxu0 0.0
      %1593 = vmatpush2.msra.mxu0 0.0
      %1594 = vmatprep.subr.mxu0 0.0
      %1595 = vmatpush2.msra.mxu0 0.0
      %1596 = vmatprep.subr.mxu0 0.0
      %1597 = vmatpush2.msra.mxu0 0.0
      %1598 = vmatprep.subr.mxu0 0.0
      %1599 = vmatpush2.msra.mxu0 0.0
      %1600 = vmatprep.subr.mxu0 0.0
      %1601 = vmatpush2.msra.mxu0 0.0
      %1602 = vmatprep.subr.mxu0 0.0
      %1603 = vmatpush2.msra.mxu0 0.0
      %1604 = vmatprep.subr.mxu0 0.0
      %1605 = vmatpush2.msra.mxu0 0.0
      %1606 = vmatprep.subr.mxu0 0.0
      %1607 = vmatpush2.msra.mxu0 0.0
      %1608 = vmatprep.subr.mxu0 0.0
      %1609 = vmatpush2.msra.mxu0 0.0
      %1610 = vmatprep.subr.mxu0 0.0
      %1611 = vmatpush2.msra.mxu0 0.0
      %1612 = vmatprep.subr.mxu0 0.0
      %1613 = vmatpush2.msra.mxu0 0.0
      %1614 = vmatprep.mubr.f32.mxu0 0.0
      %1615 = vmatmul.mubr.f32.gmra.mxu0 %v1533
      %v1616 = vpop.f32.mrf.mxu0
      %v1617 = vadd.f32 0.0, %v1616
      %v1618 = vpop.f32.mrf.mxu0
      %v1619 = vadd.f32 0.0, %v1618
      %1620 = vmatprep.mubr.f32.mxu0 0.0
      %1621 = vmatmul.mubr.f32.gmra.mxu0 %v1536
      %v1622 = vpop.f32.mrf.mxu0
      %v1623 = vadd.f32 0.0, %v1622
      %v1624 = vpop.f32.mrf.mxu0
      %v1625 = vadd.f32 0.0, %v1624
      %1626 = vmatprep.mubr.f32.mxu0 0.0
      %1627 = vmatmul.mubr.f32.gmra.mxu0 %v1539
      %v1628 = vpop.f32.mrf.mxu0
      %v1629 = vadd.f32 0.0, %v1628
      %v1630 = vpop.f32.mrf.mxu0
      %v1631 = vadd.f32 0.0, %v1630
      %1632 = vmatprep.mubr.f32.mxu0 0.0
      %1633 = vmatmul.mubr.f32.gmra.mxu0 %v1542
      %v1634 = vpop.f32.mrf.mxu0
      %v1635 = vadd.f32 0.0, %v1634
      %v1636 = vpop.f32.mrf.mxu0
      %v1637 = vadd.f32 0.0, %v1636
      %1638 = vdwg.mxu0
      %v1639 = vadd.f32 %v1280, %v1617
      %v1640 = vadd.f32 %v1281, %v1619
      %v1641 = vadd.f32 %v1282, %v1623
      %v1642 = vadd.f32 %v1283, %v1625
      %v1643 = vadd.f32 %v1284, %v1629
      %v1644 = vadd.f32 %v1285, %v1631
      %v1645 = vadd.f32 %v1286, %v1635
      %v1646 = vadd.f32 %v1287, %v1637
      %s1647 = scalar_lea.vmem %s1, 128
      %v1648 = vld [vmem:[%s1647] sm:$0xff]
      %v1649 = vld [vmem:[%s1647 + $0x8] sm:$0xff]
      %v1650 = vld [vmem:[%s1647 + $0x10] sm:$0xff]
      %v1651 = vld [vmem:[%s1647 + $0x18] sm:$0xff]
      %1652 = vrot.lane.b32.xlu0 %v1300, 127
      %v1653 = vpop.permute.xlu0 %1652
      %1654 = vrot.lane.b32.xlu0 %v1302, 127
      %v1655 = vpop.permute.xlu0 %1654
      %1656 = vrot.lane.b32.xlu0 %v1305, 127
      %v1657 = vpop.permute.xlu0 %1656
      %1658 = vrot.lane.b32.xlu0 %v1307, 127
      %v1659 = vpop.permute.xlu0 %1658
      %1660 = vrot.lane.b32.xlu0 %v1310, 127
      %v1661 = vpop.permute.xlu0 %1660
      %1662 = vrot.lane.b32.xlu0 %v1312, 127
      %v1663 = vpop.permute.xlu0 %1662
      %1664 = vrot.lane.b32.xlu0 %v1315, 127
      %v1665 = vpop.permute.xlu0 %1664
      %1666 = vrot.lane.b32.xlu0 %v1317, 127
      %v1667 = vpop.permute.xlu0 %1666
      %v1676 = vcombine.low %v1653, %v1661
      %v1677 = vcombine.high %v1653, %v1661
      %v1679 = vunpack.c.l.s4 1983009808
      %v1680 = vunpack.c.0.s8 %v1679
      %v1681 = vlaneseq
      %v1682 = vshrl.u32 %v1681, 7
      %v1683 = vsub.s32 %v1680, %v1682
      %v1684 = vrot.slane %v1676, %v1683
      %v1686 = vunpack.c.l.s4 1983009808
      %v1687 = vunpack.c.0.s8 %v1686
      %v1688 = vlaneseq
      %v1689 = vshrl.u32 %v1688, 7
      %v1690 = vsub.s32 %v1687, %v1689
      %v1691 = vrot.slane %v1677, %v1690
      %v1692 = vcombine.low %v1657, %v1665
      %v1693 = vcombine.high %v1657, %v1665
      %v1695 = vunpack.c.l.s4 1983009808
      %v1696 = vunpack.c.0.s8 %v1695
      %v1697 = vlaneseq
      %v1698 = vshrl.u32 %v1697, 7
      %v1699 = vsub.s32 %v1696, %v1698
      %v1700 = vrot.slane %v1692, %v1699
      %v1702 = vunpack.c.l.s4 1983009808
      %v1703 = vunpack.c.0.s8 %v1702
      %v1704 = vlaneseq
      %v1705 = vshrl.u32 %v1704, 7
      %v1706 = vsub.s32 %v1703, %v1705
      %v1707 = vrot.slane %v1693, %v1706
      %v1708 = vcombine.low %v1684, %v1700
      %v1709 = vcombine.high %v1684, %v1700
      %v1711 = vunpack.c.l.s4 1934713408
      %v1712 = vunpack.c.0.s8 %v1711
      %v1713 = vlaneseq
      %v1714 = vshrl.u32 %v1713, 7
      %v1715 = vsub.s32 %v1712, %v1714
      %v1716 = vrot.slane %v1708, %v1715
      %v1718 = vunpack.c.l.s4 1934713408
      %v1719 = vunpack.c.0.s8 %v1718
      %v1720 = vlaneseq
      %v1721 = vshrl.u32 %v1720, 7
      %v1722 = vsub.s32 %v1719, %v1721
      %v1723 = vrot.slane %v1709, %v1722
      %v1724 = vcombine.low %v1691, %v1707
      %v1725 = vcombine.high %v1691, %v1707
      %v1727 = vunpack.c.l.s4 1934713408
      %v1728 = vunpack.c.0.s8 %v1727
      %v1729 = vlaneseq
      %v1730 = vshrl.u32 %v1729, 7
      %v1731 = vsub.s32 %v1728, %v1730
      %v1732 = vrot.slane %v1724, %v1731
      %v1734 = vunpack.c.l.s4 1934713408
      %v1735 = vunpack.c.0.s8 %v1734
      %v1736 = vlaneseq
      %v1737 = vshrl.u32 %v1736, 7
      %v1738 = vsub.s32 %v1735, %v1737
      %v1739 = vrot.slane %v1725, %v1738
      %v1740 = vcombine.high %v1716, 0.0
      %v1741 = vcombine.high %v1723, 0.0
      %v1742 = vcombine.high %v1732, 0.0
      %v1743 = vcombine.high %v1739, 0.0
      %v1744 = vcombine.low %v1655, %v1663
      %v1745 = vcombine.high %v1655, %v1663
      %v1747 = vunpack.c.l.s4 1983009808
      %v1748 = vunpack.c.0.s8 %v1747
      %v1749 = vlaneseq
      %v1750 = vshrl.u32 %v1749, 7
      %v1751 = vsub.s32 %v1748, %v1750
      %v1752 = vrot.slane %v1744, %v1751
      %v1754 = vunpack.c.l.s4 1983009808
      %v1755 = vunpack.c.0.s8 %v1754
      %v1756 = vlaneseq
      %v1757 = vshrl.u32 %v1756, 7
      %v1758 = vsub.s32 %v1755, %v1757
      %v1759 = vrot.slane %v1745, %v1758
      %v1760 = vcombine.low %v1659, %v1667
      %v1761 = vcombine.high %v1659, %v1667
      %v1763 = vunpack.c.l.s4 1983009808
      %v1764 = vunpack.c.0.s8 %v1763
      %v1765 = vlaneseq
      %v1766 = vshrl.u32 %v1765, 7
      %v1767 = vsub.s32 %v1764, %v1766
      %v1768 = vrot.slane %v1760, %v1767
      %v1770 = vunpack.c.l.s4 1983009808
      %v1771 = vunpack.c.0.s8 %v1770
      %v1772 = vlaneseq
      %v1773 = vshrl.u32 %v1772, 7
      %v1774 = vsub.s32 %v1771, %v1773
      %v1775 = vrot.slane %v1761, %v1774
      %v1776 = vcombine.low %v1752, %v1768
      %v1777 = vcombine.high %v1752, %v1768
      %v1779 = vunpack.c.l.s4 1934713408
      %v1780 = vunpack.c.0.s8 %v1779
      %v1781 = vlaneseq
      %v1782 = vshrl.u32 %v1781, 7
      %v1783 = vsub.s32 %v1780, %v1782
      %v1784 = vrot.slane %v1776, %v1783
      %v1786 = vunpack.c.l.s4 1934713408
      %v1787 = vunpack.c.0.s8 %v1786
      %v1788 = vlaneseq
      %v1789 = vshrl.u32 %v1788, 7
      %v1790 = vsub.s32 %v1787, %v1789
      %v1791 = vrot.slane %v1777, %v1790
      %v1792 = vcombine.low %v1759, %v1775
      %v1793 = vcombine.high %v1759, %v1775
      %v1795 = vunpack.c.l.s4 1934713408
      %v1796 = vunpack.c.0.s8 %v1795
      %v1797 = vlaneseq
      %v1798 = vshrl.u32 %v1797, 7
      %v1799 = vsub.s32 %v1796, %v1798
      %v1800 = vrot.slane %v1792, %v1799
      %v1802 = vunpack.c.l.s4 1934713408
      %v1803 = vunpack.c.0.s8 %v1802
      %v1804 = vlaneseq
      %v1805 = vshrl.u32 %v1804, 7
      %v1806 = vsub.s32 %v1803, %v1805
      %v1807 = vrot.slane %v1793, %v1806
      %v1808 = vcombine.high %v1784, 0.0
      %v1809 = vcombine.high %v1791, 0.0
      %v1810 = vcombine.high %v1800, 0.0
      %v1811 = vcombine.high %v1807, 0.0
      %1813 = vrot.lane.b32.xlu0 %v1740, 16
      %v1814 = vpop.permute.xlu0 %1813
      %1817 = vrot.lane.b32.xlu0 %v1723, 32
      %v1818 = vpop.permute.xlu0 %1817
      %1821 = vrot.lane.b32.xlu0 %v1741, 48
      %v1822 = vpop.permute.xlu0 %1821
      %1825 = vrot.lane.b32.xlu0 %v1732, 64
      %v1826 = vpop.permute.xlu0 %1825
      %1829 = vrot.lane.b32.xlu0 %v1742, 80
      %v1830 = vpop.permute.xlu0 %1829
      %1833 = vrot.lane.b32.xlu0 %v1739, 96
      %v1834 = vpop.permute.xlu0 %1833
      %1837 = vrot.lane.b32.xlu0 %v1743, 112
      %v1838 = vpop.permute.xlu0 %1837
      %1841 = vrot.lane.b32.xlu0 %v1808, 16
      %v1842 = vpop.permute.xlu0 %1841
      %1845 = vrot.lane.b32.xlu0 %v1791, 32
      %v1846 = vpop.permute.xlu0 %1845
      %1849 = vrot.lane.b32.xlu0 %v1809, 48
      %v1850 = vpop.permute.xlu0 %1849
      %1853 = vrot.lane.b32.xlu0 %v1800, 64
      %v1854 = vpop.permute.xlu0 %1853
      %1857 = vrot.lane.b32.xlu0 %v1810, 80
      %v1858 = vpop.permute.xlu0 %1857
      %1861 = vrot.lane.b32.xlu0 %v1807, 96
      %v1862 = vpop.permute.xlu0 %1861
      %1865 = vrot.lane.b32.xlu0 %v1811, 112
      %v1866 = vpop.permute.xlu0 %1865
      %v1868 = vsel %vm458, %v1716, %v1814
      %v1869 = vsel %vm460, %v1868, %v1818
      %v1870 = vsel %vm462, %v1869, %v1822
      %v1871 = vsel %vm464, %v1870, %v1826
      %v1872 = vsel %vm466, %v1871, %v1830
      %v1873 = vsel %vm468, %v1872, %v1834
      %v1874 = vsel %vm470, %v1873, %v1838
      %v1875 = vsel %vm458, %v1784, %v1842
      %v1876 = vsel %vm460, %v1875, %v1846
      %v1877 = vsel %vm462, %v1876, %v1850
      %v1878 = vsel %vm464, %v1877, %v1854
      %v1879 = vsel %vm466, %v1878, %v1858
      %v1880 = vsel %vm468, %v1879, %v1862
      %v1881 = vsel %vm470, %v1880, %v1866
      %v1883 = vsel %vm722, %v1648, 0
      %v1886 = vsel %vm722, %v1649, 0
      %v1889 = vsel %vm722, %v1650, 0
      %v1892 = vsel %vm722, %v1651, 0
      %v1895 = vsel %vm735, %v1874, 0
      %v1898 = vsel %vm735, %v1881, 0
      %1900 = vmatprep.subr.mxu0 0.0
      %1901 = vmatpush1.msra.mxu0 0.0
      %1902 = vmatprep.subr.mxu0 0.0
      %1903 = vmatpush1.msra.mxu0 0.0
      %1904 = vmatprep.subr.mxu0 0.0
      %1905 = vmatpush1.msra.mxu0 0.0
      %1906 = vmatprep.subr.mxu0 0.0
      %1907 = vmatpush1.msra.mxu0 0.0
      %1908 = vmatprep.subr.mxu0 0.0
      %1909 = vmatpush1.msra.mxu0 0.0
      %1910 = vmatprep.subr.mxu0 0.0
      %1911 = vmatpush1.msra.mxu0 0.0
      %1912 = vmatprep.subr.mxu0 0.0
      %1913 = vmatpush1.msra.mxu0 0.0
      %1914 = vmatprep.subr.mxu0 0.0
      %1915 = vmatpush1.msra.mxu0 0.0
      %1916 = vmatprep.subr.mxu0 0.0
      %1917 = vmatpush1.msra.mxu0 0.0
      %1918 = vmatprep.subr.mxu0 0.0
      %1919 = vmatpush1.msra.mxu0 0.0
      %1920 = vmatprep.subr.mxu0 0.0
      %1921 = vmatpush1.msra.mxu0 0.0
      %1922 = vmatprep.subr.mxu0 0.0
      %1923 = vmatpush1.msra.mxu0 0.0
      %1924 = vmatprep.subr.mxu0 0.0
      %1925 = vmatpush1.msra.mxu0 0.0
      %1926 = vmatprep.subr.mxu0 0.0
      %1927 = vmatpush1.msra.mxu0 0.0
      %1928 = vmatprep.subr.mxu0 0.0
      %1929 = vmatpush1.msra.mxu0 0.0
      %1930 = vmatprep.subr.mxu0 %v1898
      %1931 = vmatpush1.msra.mxu0 %v1895
      %1932 = vmatprep.subr.mxu0 0.0
      %1933 = vmatpush2.msra.mxu0 0.0
      %1934 = vmatprep.subr.mxu0 0.0
      %1935 = vmatpush2.msra.mxu0 0.0
      %1936 = vmatprep.subr.mxu0 0.0
      %1937 = vmatpush2.msra.mxu0 0.0
      %1938 = vmatprep.subr.mxu0 0.0
      %1939 = vmatpush2.msra.mxu0 0.0
      %1940 = vmatprep.subr.mxu0 0.0
      %1941 = vmatpush2.msra.mxu0 0.0
      %1942 = vmatprep.subr.mxu0 0.0
      %1943 = vmatpush2.msra.mxu0 0.0
      %1944 = vmatprep.subr.mxu0 0.0
      %1945 = vmatpush2.msra.mxu0 0.0
      %1946 = vmatprep.subr.mxu0 0.0
      %1947 = vmatpush2.msra.mxu0 0.0
      %1948 = vmatprep.subr.mxu0 0.0
      %1949 = vmatpush2.msra.mxu0 0.0
      %1950 = vmatprep.subr.mxu0 0.0
      %1951 = vmatpush2.msra.mxu0 0.0
      %1952 = vmatprep.subr.mxu0 0.0
      %1953 = vmatpush2.msra.mxu0 0.0
      %1954 = vmatprep.subr.mxu0 0.0
      %1955 = vmatpush2.msra.mxu0 0.0
      %1956 = vmatprep.subr.mxu0 0.0
      %1957 = vmatpush2.msra.mxu0 0.0
      %1958 = vmatprep.subr.mxu0 0.0
      %1959 = vmatpush2.msra.mxu0 0.0
      %1960 = vmatprep.subr.mxu0 0.0
      %1961 = vmatpush2.msra.mxu0 0.0
      %1962 = vmatprep.subr.mxu0 0.0
      %1963 = vmatpush2.msra.mxu0 0.0
      %1964 = vmatprep.mubr.f32.mxu0 0.0
      %1965 = vmatmul.mubr.f32.gmra.mxu0 %v1883
      %v1966 = vpop.f32.mrf.mxu0
      %v1967 = vadd.f32 0.0, %v1966
      %v1968 = vpop.f32.mrf.mxu0
      %v1969 = vadd.f32 0.0, %v1968
      %1970 = vmatprep.mubr.f32.mxu0 0.0
      %1971 = vmatmul.mubr.f32.gmra.mxu0 %v1886
      %v1972 = vpop.f32.mrf.mxu0
      %v1973 = vadd.f32 0.0, %v1972
      %v1974 = vpop.f32.mrf.mxu0
      %v1975 = vadd.f32 0.0, %v1974
      %1976 = vmatprep.mubr.f32.mxu0 0.0
      %1977 = vmatmul.mubr.f32.gmra.mxu0 %v1889
      %v1978 = vpop.f32.mrf.mxu0
      %v1979 = vadd.f32 0.0, %v1978
      %v1980 = vpop.f32.mrf.mxu0
      %v1981 = vadd.f32 0.0, %v1980
      %1982 = vmatprep.mubr.f32.mxu0 0.0
      %1983 = vmatmul.mubr.f32.gmra.mxu0 %v1892
      %v1984 = vpop.f32.mrf.mxu0
      %v1985 = vadd.f32 0.0, %v1984
      %v1986 = vpop.f32.mrf.mxu0
      %v1987 = vadd.f32 0.0, %v1986
      %1988 = vdwg.mxu0
      %v1989 = vadd.f32 %v1639, %v1967
      %v1990 = vadd.f32 %v1640, %v1969
      %v1991 = vadd.f32 %v1641, %v1973
      %v1992 = vadd.f32 %v1642, %v1975
      %v1993 = vadd.f32 %v1643, %v1979
      %v1994 = vadd.f32 %v1644, %v1981
      %v1995 = vadd.f32 %v1645, %v1985
      %v1996 = vadd.f32 %v1646, %v1987
      %s1997 = scalar_lea.vmem %s1, 160
      %v1998 = vld [vmem:[%s1997] sm:$0xff]
      %v1999 = vld [vmem:[%s1997 + $0x8] sm:$0xff]
      %v2000 = vld [vmem:[%s1997 + $0x10] sm:$0xff]
      %v2001 = vld [vmem:[%s1997 + $0x18] sm:$0xff]
      %2002 = vrot.lane.b32.xlu0 %v1300, 126
      %v2003 = vpop.permute.xlu0 %2002
      %2004 = vrot.lane.b32.xlu0 %v1302, 126
      %v2005 = vpop.permute.xlu0 %2004
      %2006 = vrot.lane.b32.xlu0 %v1305, 126
      %v2007 = vpop.permute.xlu0 %2006
      %2008 = vrot.lane.b32.xlu0 %v1307, 126
      %v2009 = vpop.permute.xlu0 %2008
      %2010 = vrot.lane.b32.xlu0 %v1310, 126
      %v2011 = vpop.permute.xlu0 %2010
      %2012 = vrot.lane.b32.xlu0 %v1312, 126
      %v2013 = vpop.permute.xlu0 %2012
      %2014 = vrot.lane.b32.xlu0 %v1315, 126
      %v2015 = vpop.permute.xlu0 %2014
      %2016 = vrot.lane.b32.xlu0 %v1317, 126
      %v2017 = vpop.permute.xlu0 %2016
      %v2026 = vcombine.low %v2003, %v2011
      %v2027 = vcombine.high %v2003, %v2011
      %v2029 = vunpack.c.l.s4 1983009808
      %v2030 = vunpack.c.0.s8 %v2029
      %v2031 = vlaneseq
      %v2032 = vshrl.u32 %v2031, 7
      %v2033 = vsub.s32 %v2030, %v2032
      %v2034 = vrot.slane %v2026, %v2033
      %v2036 = vunpack.c.l.s4 1983009808
      %v2037 = vunpack.c.0.s8 %v2036
      %v2038 = vlaneseq
      %v2039 = vshrl.u32 %v2038, 7
      %v2040 = vsub.s32 %v2037, %v2039
      %v2041 = vrot.slane %v2027, %v2040
      %v2042 = vcombine.low %v2007, %v2015
      %v2043 = vcombine.high %v2007, %v2015
      %v2045 = vunpack.c.l.s4 1983009808
      %v2046 = vunpack.c.0.s8 %v2045
      %v2047 = vlaneseq
      %v2048 = vshrl.u32 %v2047, 7
      %v2049 = vsub.s32 %v2046, %v2048
      %v2050 = vrot.slane %v2042, %v2049
      %v2052 = vunpack.c.l.s4 1983009808
      %v2053 = vunpack.c.0.s8 %v2052
      %v2054 = vlaneseq
      %v2055 = vshrl.u32 %v2054, 7
      %v2056 = vsub.s32 %v2053, %v2055
      %v2057 = vrot.slane %v2043, %v2056
      %v2058 = vcombine.low %v2034, %v2050
      %v2059 = vcombine.high %v2034, %v2050
      %v2061 = vunpack.c.l.s4 1934713408
      %v2062 = vunpack.c.0.s8 %v2061
      %v2063 = vlaneseq
      %v2064 = vshrl.u32 %v2063, 7
      %v2065 = vsub.s32 %v2062, %v2064
      %v2066 = vrot.slane %v2058, %v2065
      %v2068 = vunpack.c.l.s4 1934713408
      %v2069 = vunpack.c.0.s8 %v2068
      %v2070 = vlaneseq
      %v2071 = vshrl.u32 %v2070, 7
      %v2072 = vsub.s32 %v2069, %v2071
      %v2073 = vrot.slane %v2059, %v2072
      %v2074 = vcombine.low %v2041, %v2057
      %v2075 = vcombine.high %v2041, %v2057
      %v2077 = vunpack.c.l.s4 1934713408
      %v2078 = vunpack.c.0.s8 %v2077
      %v2079 = vlaneseq
      %v2080 = vshrl.u32 %v2079, 7
      %v2081 = vsub.s32 %v2078, %v2080
      %v2082 = vrot.slane %v2074, %v2081
      %v2084 = vunpack.c.l.s4 1934713408
      %v2085 = vunpack.c.0.s8 %v2084
      %v2086 = vlaneseq
      %v2087 = vshrl.u32 %v2086, 7
      %v2088 = vsub.s32 %v2085, %v2087
      %v2089 = vrot.slane %v2075, %v2088
      %v2090 = vcombine.high %v2066, 0.0
      %v2091 = vcombine.high %v2073, 0.0
      %v2092 = vcombine.high %v2082, 0.0
      %v2093 = vcombine.high %v2089, 0.0
      %v2094 = vcombine.low %v2005, %v2013
      %v2095 = vcombine.high %v2005, %v2013
      %v2097 = vunpack.c.l.s4 1983009808
      %v2098 = vunpack.c.0.s8 %v2097
      %v2099 = vlaneseq
      %v2100 = vshrl.u32 %v2099, 7
      %v2101 = vsub.s32 %v2098, %v2100
      %v2102 = vrot.slane %v2094, %v2101
      %v2104 = vunpack.c.l.s4 1983009808
      %v2105 = vunpack.c.0.s8 %v2104
      %v2106 = vlaneseq
      %v2107 = vshrl.u32 %v2106, 7
      %v2108 = vsub.s32 %v2105, %v2107
      %v2109 = vrot.slane %v2095, %v2108
      %v2110 = vcombine.low %v2009, %v2017
      %v2111 = vcombine.high %v2009, %v2017
      %v2113 = vunpack.c.l.s4 1983009808
      %v2114 = vunpack.c.0.s8 %v2113
      %v2115 = vlaneseq
      %v2116 = vshrl.u32 %v2115, 7
      %v2117 = vsub.s32 %v2114, %v2116
      %v2118 = vrot.slane %v2110, %v2117
      %v2120 = vunpack.c.l.s4 1983009808
      %v2121 = vunpack.c.0.s8 %v2120
      %v2122 = vlaneseq
      %v2123 = vshrl.u32 %v2122, 7
      %v2124 = vsub.s32 %v2121, %v2123
      %v2125 = vrot.slane %v2111, %v2124
      %v2126 = vcombine.low %v2102, %v2118
      %v2127 = vcombine.high %v2102, %v2118
      %v2129 = vunpack.c.l.s4 1934713408
      %v2130 = vunpack.c.0.s8 %v2129
      %v2131 = vlaneseq
      %v2132 = vshrl.u32 %v2131, 7
      %v2133 = vsub.s32 %v2130, %v2132
      %v2134 = vrot.slane %v2126, %v2133
      %v2136 = vunpack.c.l.s4 1934713408
      %v2137 = vunpack.c.0.s8 %v2136
      %v2138 = vlaneseq
      %v2139 = vshrl.u32 %v2138, 7
      %v2140 = vsub.s32 %v2137, %v2139
      %v2141 = vrot.slane %v2127, %v2140
      %v2142 = vcombine.low %v2109, %v2125
      %v2143 = vcombine.high %v2109, %v2125
      %v2145 = vunpack.c.l.s4 1934713408
      %v2146 = vunpack.c.0.s8 %v2145
      %v2147 = vlaneseq
      %v2148 = vshrl.u32 %v2147, 7
      %v2149 = vsub.s32 %v2146, %v2148
      %v2150 = vrot.slane %v2142, %v2149
      %v2152 = vunpack.c.l.s4 1934713408
      %v2153 = vunpack.c.0.s8 %v2152
      %v2154 = vlaneseq
      %v2155 = vshrl.u32 %v2154, 7
      %v2156 = vsub.s32 %v2153, %v2155
      %v2157 = vrot.slane %v2143, %v2156
      %v2158 = vcombine.high %v2134, 0.0
      %v2159 = vcombine.high %v2141, 0.0
      %v2160 = vcombine.high %v2150, 0.0
      %v2161 = vcombine.high %v2157, 0.0
      %2163 = vrot.lane.b32.xlu0 %v2090, 16
      %v2164 = vpop.permute.xlu0 %2163
      %2167 = vrot.lane.b32.xlu0 %v2073, 32
      %v2168 = vpop.permute.xlu0 %2167
      %2171 = vrot.lane.b32.xlu0 %v2091, 48
      %v2172 = vpop.permute.xlu0 %2171
      %2175 = vrot.lane.b32.xlu0 %v2082, 64
      %v2176 = vpop.permute.xlu0 %2175
      %2179 = vrot.lane.b32.xlu0 %v2092, 80
      %v2180 = vpop.permute.xlu0 %2179
      %2183 = vrot.lane.b32.xlu0 %v2089, 96
      %v2184 = vpop.permute.xlu0 %2183
      %2187 = vrot.lane.b32.xlu0 %v2093, 112
      %v2188 = vpop.permute.xlu0 %2187
      %2191 = vrot.lane.b32.xlu0 %v2158, 16
      %v2192 = vpop.permute.xlu0 %2191
      %2195 = vrot.lane.b32.xlu0 %v2141, 32
      %v2196 = vpop.permute.xlu0 %2195
      %2199 = vrot.lane.b32.xlu0 %v2159, 48
      %v2200 = vpop.permute.xlu0 %2199
      %2203 = vrot.lane.b32.xlu0 %v2150, 64
      %v2204 = vpop.permute.xlu0 %2203
      %2207 = vrot.lane.b32.xlu0 %v2160, 80
      %v2208 = vpop.permute.xlu0 %2207
      %2211 = vrot.lane.b32.xlu0 %v2157, 96
      %v2212 = vpop.permute.xlu0 %2211
      %2215 = vrot.lane.b32.xlu0 %v2161, 112
      %v2216 = vpop.permute.xlu0 %2215
      %v2218 = vsel %vm458, %v2066, %v2164
      %v2219 = vsel %vm460, %v2218, %v2168
      %v2220 = vsel %vm462, %v2219, %v2172
      %v2221 = vsel %vm464, %v2220, %v2176
      %v2222 = vsel %vm466, %v2221, %v2180
      %v2223 = vsel %vm468, %v2222, %v2184
      %v2224 = vsel %vm470, %v2223, %v2188
      %v2225 = vsel %vm458, %v2134, %v2192
      %v2226 = vsel %vm460, %v2225, %v2196
      %v2227 = vsel %vm462, %v2226, %v2200
      %v2228 = vsel %vm464, %v2227, %v2204
      %v2229 = vsel %vm466, %v2228, %v2208
      %v2230 = vsel %vm468, %v2229, %v2212
      %v2231 = vsel %vm470, %v2230, %v2216
      %v2233 = vsel %vm722, %v1998, 0
      %v2236 = vsel %vm722, %v1999, 0
      %v2239 = vsel %vm722, %v2000, 0
      %v2242 = vsel %vm722, %v2001, 0
      %v2245 = vsel %vm735, %v2224, 0
      %v2248 = vsel %vm735, %v2231, 0
      %2250 = vmatprep.subr.mxu0 0.0
      %2251 = vmatpush1.msra.mxu0 0.0
      %2252 = vmatprep.subr.mxu0 0.0
      %2253 = vmatpush1.msra.mxu0 0.0
      %2254 = vmatprep.subr.mxu0 0.0
      %2255 = vmatpush1.msra.mxu0 0.0
      %2256 = vmatprep.subr.mxu0 0.0
      %2257 = vmatpush1.msra.mxu0 0.0
      %2258 = vmatprep.subr.mxu0 0.0
      %2259 = vmatpush1.msra.mxu0 0.0
      %2260 = vmatprep.subr.mxu0 0.0
      %2261 = vmatpush1.msra.mxu0 0.0
      %2262 = vmatprep.subr.mxu0 0.0
      %2263 = vmatpush1.msra.mxu0 0.0
      %2264 = vmatprep.subr.mxu0 0.0
      %2265 = vmatpush1.msra.mxu0 0.0
      %2266 = vmatprep.subr.mxu0 0.0
      %2267 = vmatpush1.msra.mxu0 0.0
      %2268 = vmatprep.subr.mxu0 0.0
      %2269 = vmatpush1.msra.mxu0 0.0
      %2270 = vmatprep.subr.mxu0 0.0
      %2271 = vmatpush1.msra.mxu0 0.0
      %2272 = vmatprep.subr.mxu0 0.0
      %2273 = vmatpush1.msra.mxu0 0.0
      %2274 = vmatprep.subr.mxu0 0.0
      %2275 = vmatpush1.msra.mxu0 0.0
      %2276 = vmatprep.subr.mxu0 0.0
      %2277 = vmatpush1.msra.mxu0 0.0
      %2278 = vmatprep.subr.mxu0 0.0
      %2279 = vmatpush1.msra.mxu0 0.0
      %2280 = vmatprep.subr.mxu0 %v2248
      %2281 = vmatpush1.msra.mxu0 %v2245
      %2282 = vmatprep.subr.mxu0 0.0
      %2283 = vmatpush2.msra.mxu0 0.0
      %2284 = vmatprep.subr.mxu0 0.0
      %2285 = vmatpush2.msra.mxu0 0.0
      %2286 = vmatprep.subr.mxu0 0.0
      %2287 = vmatpush2.msra.mxu0 0.0
      %2288 = vmatprep.subr.mxu0 0.0
      %2289 = vmatpush2.msra.mxu0 0.0
      %2290 = vmatprep.subr.mxu0 0.0
      %2291 = vmatpush2.msra.mxu0 0.0
      %2292 = vmatprep.subr.mxu0 0.0
      %2293 = vmatpush2.msra.mxu0 0.0
      %2294 = vmatprep.subr.mxu0 0.0
      %2295 = vmatpush2.msra.mxu0 0.0
      %2296 = vmatprep.subr.mxu0 0.0
      %2297 = vmatpush2.msra.mxu0 0.0
      %2298 = vmatprep.subr.mxu0 0.0
      %2299 = vmatpush2.msra.mxu0 0.0
      %2300 = vmatprep.subr.mxu0 0.0
      %2301 = vmatpush2.msra.mxu0 0.0
      %2302 = vmatprep.subr.mxu0 0.0
      %2303 = vmatpush2.msra.mxu0 0.0
      %2304 = vmatprep.subr.mxu0 0.0
      %2305 = vmatpush2.msra.mxu0 0.0
      %2306 = vmatprep.subr.mxu0 0.0
      %2307 = vmatpush2.msra.mxu0 0.0
      %2308 = vmatprep.subr.mxu0 0.0
      %2309 = vmatpush2.msra.mxu0 0.0
      %2310 = vmatprep.subr.mxu0 0.0
      %2311 = vmatpush2.msra.mxu0 0.0
      %2312 = vmatprep.subr.mxu0 0.0
      %2313 = vmatpush2.msra.mxu0 0.0
      %2314 = vmatprep.mubr.f32.mxu0 0.0
      %2315 = vmatmul.mubr.f32.gmra.mxu0 %v2233
      %v2316 = vpop.f32.mrf.mxu0
      %v2317 = vadd.f32 0.0, %v2316
      %v2318 = vpop.f32.mrf.mxu0
      %v2319 = vadd.f32 0.0, %v2318
      %2320 = vmatprep.mubr.f32.mxu0 0.0
      %2321 = vmatmul.mubr.f32.gmra.mxu0 %v2236
      %v2322 = vpop.f32.mrf.mxu0
      %v2323 = vadd.f32 0.0, %v2322
      %v2324 = vpop.f32.mrf.mxu0
      %v2325 = vadd.f32 0.0, %v2324
      %2326 = vmatprep.mubr.f32.mxu0 0.0
      %2327 = vmatmul.mubr.f32.gmra.mxu0 %v2239
      %v2328 = vpop.f32.mrf.mxu0
      %v2329 = vadd.f32 0.0, %v2328
      %v2330 = vpop.f32.mrf.mxu0
      %v2331 = vadd.f32 0.0, %v2330
      %2332 = vmatprep.mubr.f32.mxu0 0.0
      %2333 = vmatmul.mubr.f32.gmra.mxu0 %v2242
      %v2334 = vpop.f32.mrf.mxu0
      %v2335 = vadd.f32 0.0, %v2334
      %v2336 = vpop.f32.mrf.mxu0
      %v2337 = vadd.f32 0.0, %v2336
      %2338 = vdwg.mxu0
      %v2339 = vadd.f32 %v1989, %v2317
      %v2340 = vadd.f32 %v1990, %v2319
      %v2341 = vadd.f32 %v1991, %v2323
      %v2342 = vadd.f32 %v1992, %v2325
      %v2343 = vadd.f32 %v1993, %v2329
      %v2344 = vadd.f32 %v1994, %v2331
      %v2345 = vadd.f32 %v1995, %v2335
      %v2346 = vadd.f32 %v1996, %v2337
      %s2347 = scalar_lea.vmem %s1, 192
      %v2348 = vld [vmem:[%s2347] sm:$0xff]
      %v2349 = vld [vmem:[%s2347 + $0x8] sm:$0xff]
      %v2350 = vld [vmem:[%s2347 + $0x10] sm:$0xff]
      %v2351 = vld [vmem:[%s2347 + $0x18] sm:$0xff]
      %vm2352 = vcmask 1045504
      %v2353 = vrot.slane %v250, 2
      %v2354 = vrot.slane %v251, 2
      %v2355 = vsel %vm2352, %v2353, %v2354
      %v2356 = vrot.slane %v252, 2
      %v2357 = vsel %vm2352, %v2354, %v2356
      %v2358 = vrot.slane %v253, 2
      %v2359 = vrot.slane %v254, 2
      %v2360 = vsel %vm2352, %v2358, %v2359
      %v2361 = vrot.slane %v255, 2
      %v2362 = vsel %vm2352, %v2359, %v2361
      %v2363 = vrot.slane %v256, 2
      %v2364 = vrot.slane %v257, 2
      %v2365 = vsel %vm2352, %v2363, %v2364
      %v2366 = vrot.slane %v258, 2
      %v2367 = vsel %vm2352, %v2364, %v2366
      %v2368 = vrot.slane %v259, 2
      %v2369 = vrot.slane %v260, 2
      %v2370 = vsel %vm2352, %v2368, %v2369
      %v2371 = vrot.slane %v261, 2
      %v2372 = vsel %vm2352, %v2369, %v2371
      %v2381 = vcombine.low %v2355, %v2365
      %v2382 = vcombine.high %v2355, %v2365
      %v2384 = vunpack.c.l.s4 1983009808
      %v2385 = vunpack.c.0.s8 %v2384
      %v2386 = vlaneseq
      %v2387 = vshrl.u32 %v2386, 7
      %v2388 = vsub.s32 %v2385, %v2387
      %v2389 = vrot.slane %v2381, %v2388
      %v2391 = vunpack.c.l.s4 1983009808
      %v2392 = vunpack.c.0.s8 %v2391
      %v2393 = vlaneseq
      %v2394 = vshrl.u32 %v2393, 7
      %v2395 = vsub.s32 %v2392, %v2394
      %v2396 = vrot.slane %v2382, %v2395
      %v2397 = vcombine.low %v2360, %v2370
      %v2398 = vcombine.high %v2360, %v2370
      %v2400 = vunpack.c.l.s4 1983009808
      %v2401 = vunpack.c.0.s8 %v2400
      %v2402 = vlaneseq
      %v2403 = vshrl.u32 %v2402, 7
      %v2404 = vsub.s32 %v2401, %v2403
      %v2405 = vrot.slane %v2397, %v2404
      %v2407 = vunpack.c.l.s4 1983009808
      %v2408 = vunpack.c.0.s8 %v2407
      %v2409 = vlaneseq
      %v2410 = vshrl.u32 %v2409, 7
      %v2411 = vsub.s32 %v2408, %v2410
      %v2412 = vrot.slane %v2398, %v2411
      %v2413 = vcombine.low %v2389, %v2405
      %v2414 = vcombine.high %v2389, %v2405
      %v2416 = vunpack.c.l.s4 1934713408
      %v2417 = vunpack.c.0.s8 %v2416
      %v2418 = vlaneseq
      %v2419 = vshrl.u32 %v2418, 7
      %v2420 = vsub.s32 %v2417, %v2419
      %v2421 = vrot.slane %v2413, %v2420
      %v2423 = vunpack.c.l.s4 1934713408
      %v2424 = vunpack.c.0.s8 %v2423
      %v2425 = vlaneseq
      %v2426 = vshrl.u32 %v2425, 7
      %v2427 = vsub.s32 %v2424, %v2426
      %v2428 = vrot.slane %v2414, %v2427
      %v2429 = vcombine.low %v2396, %v2412
      %v2430 = vcombine.high %v2396, %v2412
      %v2432 = vunpack.c.l.s4 1934713408
      %v2433 = vunpack.c.0.s8 %v2432
      %v2434 = vlaneseq
      %v2435 = vshrl.u32 %v2434, 7
      %v2436 = vsub.s32 %v2433, %v2435
      %v2437 = vrot.slane %v2429, %v2436
      %v2439 = vunpack.c.l.s4 1934713408
      %v2440 = vunpack.c.0.s8 %v2439
      %v2441 = vlaneseq
      %v2442 = vshrl.u32 %v2441, 7
      %v2443 = vsub.s32 %v2440, %v2442
      %v2444 = vrot.slane %v2430, %v2443
      %v2445 = vcombine.high %v2421, 0.0
      %v2446 = vcombine.high %v2428, 0.0
      %v2447 = vcombine.high %v2437, 0.0
      %v2448 = vcombine.high %v2444, 0.0
      %v2449 = vcombine.low %v2357, %v2367
      %v2450 = vcombine.high %v2357, %v2367
      %v2452 = vunpack.c.l.s4 1983009808
      %v2453 = vunpack.c.0.s8 %v2452
      %v2454 = vlaneseq
      %v2455 = vshrl.u32 %v2454, 7
      %v2456 = vsub.s32 %v2453, %v2455
      %v2457 = vrot.slane %v2449, %v2456
      %v2459 = vunpack.c.l.s4 1983009808
      %v2460 = vunpack.c.0.s8 %v2459
      %v2461 = vlaneseq
      %v2462 = vshrl.u32 %v2461, 7
      %v2463 = vsub.s32 %v2460, %v2462
      %v2464 = vrot.slane %v2450, %v2463
      %v2465 = vcombine.low %v2362, %v2372
      %v2466 = vcombine.high %v2362, %v2372
      %v2468 = vunpack.c.l.s4 1983009808
      %v2469 = vunpack.c.0.s8 %v2468
      %v2470 = vlaneseq
      %v2471 = vshrl.u32 %v2470, 7
      %v2472 = vsub.s32 %v2469, %v2471
      %v2473 = vrot.slane %v2465, %v2472
      %v2475 = vunpack.c.l.s4 1983009808
      %v2476 = vunpack.c.0.s8 %v2475
      %v2477 = vlaneseq
      %v2478 = vshrl.u32 %v2477, 7
      %v2479 = vsub.s32 %v2476, %v2478
      %v2480 = vrot.slane %v2466, %v2479
      %v2481 = vcombine.low %v2457, %v2473
      %v2482 = vcombine.high %v2457, %v2473
      %v2484 = vunpack.c.l.s4 1934713408
      %v2485 = vunpack.c.0.s8 %v2484
      %v2486 = vlaneseq
      %v2487 = vshrl.u32 %v2486, 7
      %v2488 = vsub.s32 %v2485, %v2487
      %v2489 = vrot.slane %v2481, %v2488
      %v2491 = vunpack.c.l.s4 1934713408
      %v2492 = vunpack.c.0.s8 %v2491
      %v2493 = vlaneseq
      %v2494 = vshrl.u32 %v2493, 7
      %v2495 = vsub.s32 %v2492, %v2494
      %v2496 = vrot.slane %v2482, %v2495
      %v2497 = vcombine.low %v2464, %v2480
      %v2498 = vcombine.high %v2464, %v2480
      %v2500 = vunpack.c.l.s4 1934713408
      %v2501 = vunpack.c.0.s8 %v2500
      %v2502 = vlaneseq
      %v2503 = vshrl.u32 %v2502, 7
      %v2504 = vsub.s32 %v2501, %v2503
      %v2505 = vrot.slane %v2497, %v2504
      %v2507 = vunpack.c.l.s4 1934713408
      %v2508 = vunpack.c.0.s8 %v2507
      %v2509 = vlaneseq
      %v2510 = vshrl.u32 %v2509, 7
      %v2511 = vsub.s32 %v2508, %v2510
      %v2512 = vrot.slane %v2498, %v2511
      %v2513 = vcombine.high %v2489, 0.0
      %v2514 = vcombine.high %v2496, 0.0
      %v2515 = vcombine.high %v2505, 0.0
      %v2516 = vcombine.high %v2512, 0.0
      %2518 = vrot.lane.b32.xlu0 %v2445, 16
      %v2519 = vpop.permute.xlu0 %2518
      %2522 = vrot.lane.b32.xlu0 %v2428, 32
      %v2523 = vpop.permute.xlu0 %2522
      %2526 = vrot.lane.b32.xlu0 %v2446, 48
      %v2527 = vpop.permute.xlu0 %2526
      %2530 = vrot.lane.b32.xlu0 %v2437, 64
      %v2531 = vpop.permute.xlu0 %2530
      %2534 = vrot.lane.b32.xlu0 %v2447, 80
      %v2535 = vpop.permute.xlu0 %2534
      %2538 = vrot.lane.b32.xlu0 %v2444, 96
      %v2539 = vpop.permute.xlu0 %2538
      %2542 = vrot.lane.b32.xlu0 %v2448, 112
      %v2543 = vpop.permute.xlu0 %2542
      %2546 = vrot.lane.b32.xlu0 %v2513, 16
      %v2547 = vpop.permute.xlu0 %2546
      %2550 = vrot.lane.b32.xlu0 %v2496, 32
      %v2551 = vpop.permute.xlu0 %2550
      %2554 = vrot.lane.b32.xlu0 %v2514, 48
      %v2555 = vpop.permute.xlu0 %2554
      %2558 = vrot.lane.b32.xlu0 %v2505, 64
      %v2559 = vpop.permute.xlu0 %2558
      %2562 = vrot.lane.b32.xlu0 %v2515, 80
      %v2563 = vpop.permute.xlu0 %2562
      %2566 = vrot.lane.b32.xlu0 %v2512, 96
      %v2567 = vpop.permute.xlu0 %2566
      %2570 = vrot.lane.b32.xlu0 %v2516, 112
      %v2571 = vpop.permute.xlu0 %2570
      %v2573 = vsel %vm458, %v2421, %v2519
      %v2574 = vsel %vm460, %v2573, %v2523
      %v2575 = vsel %vm462, %v2574, %v2527
      %v2576 = vsel %vm464, %v2575, %v2531
      %v2577 = vsel %vm466, %v2576, %v2535
      %v2578 = vsel %vm468, %v2577, %v2539
      %v2579 = vsel %vm470, %v2578, %v2543
      %v2580 = vsel %vm458, %v2489, %v2547
      %v2581 = vsel %vm460, %v2580, %v2551
      %v2582 = vsel %vm462, %v2581, %v2555
      %v2583 = vsel %vm464, %v2582, %v2559
      %v2584 = vsel %vm466, %v2583, %v2563
      %v2585 = vsel %vm468, %v2584, %v2567
      %v2586 = vsel %vm470, %v2585, %v2571
      %v2588 = vsel %vm722, %v2348, 0
      %v2591 = vsel %vm722, %v2349, 0
      %v2594 = vsel %vm722, %v2350, 0
      %v2597 = vsel %vm722, %v2351, 0
      %v2600 = vsel %vm735, %v2579, 0
      %v2603 = vsel %vm735, %v2586, 0
      %2605 = vmatprep.subr.mxu0 0.0
      %2606 = vmatpush1.msra.mxu0 0.0
      %2607 = vmatprep.subr.mxu0 0.0
      %2608 = vmatpush1.msra.mxu0 0.0
      %2609 = vmatprep.subr.mxu0 0.0
      %2610 = vmatpush1.msra.mxu0 0.0
      %2611 = vmatprep.subr.mxu0 0.0
      %2612 = vmatpush1.msra.mxu0 0.0
      %2613 = vmatprep.subr.mxu0 0.0
      %2614 = vmatpush1.msra.mxu0 0.0
      %2615 = vmatprep.subr.mxu0 0.0
      %2616 = vmatpush1.msra.mxu0 0.0
      %2617 = vmatprep.subr.mxu0 0.0
      %2618 = vmatpush1.msra.mxu0 0.0
      %2619 = vmatprep.subr.mxu0 0.0
      %2620 = vmatpush1.msra.mxu0 0.0
      %2621 = vmatprep.subr.mxu0 0.0
      %2622 = vmatpush1.msra.mxu0 0.0
      %2623 = vmatprep.subr.mxu0 0.0
      %2624 = vmatpush1.msra.mxu0 0.0
      %2625 = vmatprep.subr.mxu0 0.0
      %2626 = vmatpush1.msra.mxu0 0.0
      %2627 = vmatprep.subr.mxu0 0.0
      %2628 = vmatpush1.msra.mxu0 0.0
      %2629 = vmatprep.subr.mxu0 0.0
      %2630 = vmatpush1.msra.mxu0 0.0
      %2631 = vmatprep.subr.mxu0 0.0
      %2632 = vmatpush1.msra.mxu0 0.0
      %2633 = vmatprep.subr.mxu0 0.0
      %2634 = vmatpush1.msra.mxu0 0.0
      %2635 = vmatprep.subr.mxu0 %v2603
      %2636 = vmatpush1.msra.mxu0 %v2600
      %2637 = vmatprep.subr.mxu0 0.0
      %2638 = vmatpush2.msra.mxu0 0.0
      %2639 = vmatprep.subr.mxu0 0.0
      %2640 = vmatpush2.msra.mxu0 0.0
      %2641 = vmatprep.subr.mxu0 0.0
      %2642 = vmatpush2.msra.mxu0 0.0
      %2643 = vmatprep.subr.mxu0 0.0
      %2644 = vmatpush2.msra.mxu0 0.0
      %2645 = vmatprep.subr.mxu0 0.0
      %2646 = vmatpush2.msra.mxu0 0.0
      %2647 = vmatprep.subr.mxu0 0.0
      %2648 = vmatpush2.msra.mxu0 0.0
      %2649 = vmatprep.subr.mxu0 0.0
      %2650 = vmatpush2.msra.mxu0 0.0
      %2651 = vmatprep.subr.mxu0 0.0
      %2652 = vmatpush2.msra.mxu0 0.0
      %2653 = vmatprep.subr.mxu0 0.0
      %2654 = vmatpush2.msra.mxu0 0.0
      %2655 = vmatprep.subr.mxu0 0.0
      %2656 = vmatpush2.msra.mxu0 0.0
      %2657 = vmatprep.subr.mxu0 0.0
      %2658 = vmatpush2.msra.mxu0 0.0
      %2659 = vmatprep.subr.mxu0 0.0
      %2660 = vmatpush2.msra.mxu0 0.0
      %2661 = vmatprep.subr.mxu0 0.0
      %2662 = vmatpush2.msra.mxu0 0.0
      %2663 = vmatprep.subr.mxu0 0.0
      %2664 = vmatpush2.msra.mxu0 0.0
      %2665 = vmatprep.subr.mxu0 0.0
      %2666 = vmatpush2.msra.mxu0 0.0
      %2667 = vmatprep.subr.mxu0 0.0
      %2668 = vmatpush2.msra.mxu0 0.0
      %2669 = vmatprep.mubr.f32.mxu0 0.0
      %2670 = vmatmul.mubr.f32.gmra.mxu0 %v2588
      %v2671 = vpop.f32.mrf.mxu0
      %v2672 = vadd.f32 0.0, %v2671
      %v2673 = vpop.f32.mrf.mxu0
      %v2674 = vadd.f32 0.0, %v2673
      %2675 = vmatprep.mubr.f32.mxu0 0.0
      %2676 = vmatmul.mubr.f32.gmra.mxu0 %v2591
      %v2677 = vpop.f32.mrf.mxu0
      %v2678 = vadd.f32 0.0, %v2677
      %v2679 = vpop.f32.mrf.mxu0
      %v2680 = vadd.f32 0.0, %v2679
      %2681 = vmatprep.mubr.f32.mxu0 0.0
      %2682 = vmatmul.mubr.f32.gmra.mxu0 %v2594
      %v2683 = vpop.f32.mrf.mxu0
      %v2684 = vadd.f32 0.0, %v2683
      %v2685 = vpop.f32.mrf.mxu0
      %v2686 = vadd.f32 0.0, %v2685
      %2687 = vmatprep.mubr.f32.mxu0 0.0
      %2688 = vmatmul.mubr.f32.gmra.mxu0 %v2597
      %v2689 = vpop.f32.mrf.mxu0
      %v2690 = vadd.f32 0.0, %v2689
      %v2691 = vpop.f32.mrf.mxu0
      %v2692 = vadd.f32 0.0, %v2691
      %2693 = vdwg.mxu0
      %v2694 = vadd.f32 %v2339, %v2672
      %v2695 = vadd.f32 %v2340, %v2674
      %v2696 = vadd.f32 %v2341, %v2678
      %v2697 = vadd.f32 %v2342, %v2680
      %v2698 = vadd.f32 %v2343, %v2684
      %v2699 = vadd.f32 %v2344, %v2686
      %v2700 = vadd.f32 %v2345, %v2690
      %v2701 = vadd.f32 %v2346, %v2692
      %s2702 = scalar_lea.vmem %s1, 224
      %v2703 = vld [vmem:[%s2702] sm:$0xff]
      %v2704 = vld [vmem:[%s2702 + $0x8] sm:$0xff]
      %v2705 = vld [vmem:[%s2702 + $0x10] sm:$0xff]
      %v2706 = vld [vmem:[%s2702 + $0x18] sm:$0xff]
      %2707 = vrot.lane.b32.xlu0 %v2355, 127
      %v2708 = vpop.permute.xlu0 %2707
      %2709 = vrot.lane.b32.xlu0 %v2357, 127
      %v2710 = vpop.permute.xlu0 %2709
      %2711 = vrot.lane.b32.xlu0 %v2360, 127
      %v2712 = vpop.permute.xlu0 %2711
      %2713 = vrot.lane.b32.xlu0 %v2362, 127
      %v2714 = vpop.permute.xlu0 %2713
      %2715 = vrot.lane.b32.xlu0 %v2365, 127
      %v2716 = vpop.permute.xlu0 %2715
      %2717 = vrot.lane.b32.xlu0 %v2367, 127
      %v2718 = vpop.permute.xlu0 %2717
      %2719 = vrot.lane.b32.xlu0 %v2370, 127
      %v2720 = vpop.permute.xlu0 %2719
      %2721 = vrot.lane.b32.xlu0 %v2372, 127
      %v2722 = vpop.permute.xlu0 %2721
      %v2731 = vcombine.low %v2708, %v2716
      %v2732 = vcombine.high %v2708, %v2716
      %v2734 = vunpack.c.l.s4 1983009808
      %v2735 = vunpack.c.0.s8 %v2734
      %v2736 = vlaneseq
      %v2737 = vshrl.u32 %v2736, 7
      %v2738 = vsub.s32 %v2735, %v2737
      %v2739 = vrot.slane %v2731, %v2738
      %v2741 = vunpack.c.l.s4 1983009808
      %v2742 = vunpack.c.0.s8 %v2741
      %v2743 = vlaneseq
      %v2744 = vshrl.u32 %v2743, 7
      %v2745 = vsub.s32 %v2742, %v2744
      %v2746 = vrot.slane %v2732, %v2745
      %v2747 = vcombine.low %v2712, %v2720
      %v2748 = vcombine.high %v2712, %v2720
      %v2750 = vunpack.c.l.s4 1983009808
      %v2751 = vunpack.c.0.s8 %v2750
      %v2752 = vlaneseq
      %v2753 = vshrl.u32 %v2752, 7
      %v2754 = vsub.s32 %v2751, %v2753
      %v2755 = vrot.slane %v2747, %v2754
      %v2757 = vunpack.c.l.s4 1983009808
      %v2758 = vunpack.c.0.s8 %v2757
      %v2759 = vlaneseq
      %v2760 = vshrl.u32 %v2759, 7
      %v2761 = vsub.s32 %v2758, %v2760
      %v2762 = vrot.slane %v2748, %v2761
      %v2763 = vcombine.low %v2739, %v2755
      %v2764 = vcombine.high %v2739, %v2755
      %v2766 = vunpack.c.l.s4 1934713408
      %v2767 = vunpack.c.0.s8 %v2766
      %v2768 = vlaneseq
      %v2769 = vshrl.u32 %v2768, 7
      %v2770 = vsub.s32 %v2767, %v2769
      %v2771 = vrot.slane %v2763, %v2770
      %v2773 = vunpack.c.l.s4 1934713408
      %v2774 = vunpack.c.0.s8 %v2773
      %v2775 = vlaneseq
      %v2776 = vshrl.u32 %v2775, 7
      %v2777 = vsub.s32 %v2774, %v2776
      %v2778 = vrot.slane %v2764, %v2777
      %v2779 = vcombine.low %v2746, %v2762
      %v2780 = vcombine.high %v2746, %v2762
      %v2782 = vunpack.c.l.s4 1934713408
      %v2783 = vunpack.c.0.s8 %v2782
      %v2784 = vlaneseq
      %v2785 = vshrl.u32 %v2784, 7
      %v2786 = vsub.s32 %v2783, %v2785
      %v2787 = vrot.slane %v2779, %v2786
      %v2789 = vunpack.c.l.s4 1934713408
      %v2790 = vunpack.c.0.s8 %v2789
      %v2791 = vlaneseq
      %v2792 = vshrl.u32 %v2791, 7
      %v2793 = vsub.s32 %v2790, %v2792
      %v2794 = vrot.slane %v2780, %v2793
      %v2795 = vcombine.high %v2771, 0.0
      %v2796 = vcombine.high %v2778, 0.0
      %v2797 = vcombine.high %v2787, 0.0
      %v2798 = vcombine.high %v2794, 0.0
      %v2799 = vcombine.low %v2710, %v2718
      %v2800 = vcombine.high %v2710, %v2718
      %v2802 = vunpack.c.l.s4 1983009808
      %v2803 = vunpack.c.0.s8 %v2802
      %v2804 = vlaneseq
      %v2805 = vshrl.u32 %v2804, 7
      %v2806 = vsub.s32 %v2803, %v2805
      %v2807 = vrot.slane %v2799, %v2806
      %v2809 = vunpack.c.l.s4 1983009808
      %v2810 = vunpack.c.0.s8 %v2809
      %v2811 = vlaneseq
      %v2812 = vshrl.u32 %v2811, 7
      %v2813 = vsub.s32 %v2810, %v2812
      %v2814 = vrot.slane %v2800, %v2813
      %v2815 = vcombine.low %v2714, %v2722
      %v2816 = vcombine.high %v2714, %v2722
      %v2818 = vunpack.c.l.s4 1983009808
      %v2819 = vunpack.c.0.s8 %v2818
      %v2820 = vlaneseq
      %v2821 = vshrl.u32 %v2820, 7
      %v2822 = vsub.s32 %v2819, %v2821
      %v2823 = vrot.slane %v2815, %v2822
      %v2825 = vunpack.c.l.s4 1983009808
      %v2826 = vunpack.c.0.s8 %v2825
      %v2827 = vlaneseq
      %v2828 = vshrl.u32 %v2827, 7
      %v2829 = vsub.s32 %v2826, %v2828
      %v2830 = vrot.slane %v2816, %v2829
      %v2831 = vcombine.low %v2807, %v2823
      %v2832 = vcombine.high %v2807, %v2823
      %v2834 = vunpack.c.l.s4 1934713408
      %v2835 = vunpack.c.0.s8 %v2834
      %v2836 = vlaneseq
      %v2837 = vshrl.u32 %v2836, 7
      %v2838 = vsub.s32 %v2835, %v2837
      %v2839 = vrot.slane %v2831, %v2838
      %v2841 = vunpack.c.l.s4 1934713408
      %v2842 = vunpack.c.0.s8 %v2841
      %v2843 = vlaneseq
      %v2844 = vshrl.u32 %v2843, 7
      %v2845 = vsub.s32 %v2842, %v2844
      %v2846 = vrot.slane %v2832, %v2845
      %v2847 = vcombine.low %v2814, %v2830
      %v2848 = vcombine.high %v2814, %v2830
      %v2850 = vunpack.c.l.s4 1934713408
      %v2851 = vunpack.c.0.s8 %v2850
      %v2852 = vlaneseq
      %v2853 = vshrl.u32 %v2852, 7
      %v2854 = vsub.s32 %v2851, %v2853
      %v2855 = vrot.slane %v2847, %v2854
      %v2857 = vunpack.c.l.s4 1934713408
      %v2858 = vunpack.c.0.s8 %v2857
      %v2859 = vlaneseq
      %v2860 = vshrl.u32 %v2859, 7
      %v2861 = vsub.s32 %v2858, %v2860
      %v2862 = vrot.slane %v2848, %v2861
      %v2863 = vcombine.high %v2839, 0.0
      %v2864 = vcombine.high %v2846, 0.0
      %v2865 = vcombine.high %v2855, 0.0
      %v2866 = vcombine.high %v2862, 0.0
      %2868 = vrot.lane.b32.xlu0 %v2795, 16
      %v2869 = vpop.permute.xlu0 %2868
      %2872 = vrot.lane.b32.xlu0 %v2778, 32
      %v2873 = vpop.permute.xlu0 %2872
      %2876 = vrot.lane.b32.xlu0 %v2796, 48
      %v2877 = vpop.permute.xlu0 %2876
      %2880 = vrot.lane.b32.xlu0 %v2787, 64
      %v2881 = vpop.permute.xlu0 %2880
      %2884 = vrot.lane.b32.xlu0 %v2797, 80
      %v2885 = vpop.permute.xlu0 %2884
      %2888 = vrot.lane.b32.xlu0 %v2794, 96
      %v2889 = vpop.permute.xlu0 %2888
      %2892 = vrot.lane.b32.xlu0 %v2798, 112
      %v2893 = vpop.permute.xlu0 %2892
      %2896 = vrot.lane.b32.xlu0 %v2863, 16
      %v2897 = vpop.permute.xlu0 %2896
      %2900 = vrot.lane.b32.xlu0 %v2846, 32
      %v2901 = vpop.permute.xlu0 %2900
      %2904 = vrot.lane.b32.xlu0 %v2864, 48
      %v2905 = vpop.permute.xlu0 %2904
      %2908 = vrot.lane.b32.xlu0 %v2855, 64
      %v2909 = vpop.permute.xlu0 %2908
      %2912 = vrot.lane.b32.xlu0 %v2865, 80
      %v2913 = vpop.permute.xlu0 %2912
      %2916 = vrot.lane.b32.xlu0 %v2862, 96
      %v2917 = vpop.permute.xlu0 %2916
      %2920 = vrot.lane.b32.xlu0 %v2866, 112
      %v2921 = vpop.permute.xlu0 %2920
      %v2923 = vsel %vm458, %v2771, %v2869
      %v2924 = vsel %vm460, %v2923, %v2873
      %v2925 = vsel %vm462, %v2924, %v2877
      %v2926 = vsel %vm464, %v2925, %v2881
      %v2927 = vsel %vm466, %v2926, %v2885
      %v2928 = vsel %vm468, %v2927, %v2889
      %v2929 = vsel %vm470, %v2928, %v2893
      %v2930 = vsel %vm458, %v2839, %v2897
      %v2931 = vsel %vm460, %v2930, %v2901
      %v2932 = vsel %vm462, %v2931, %v2905
      %v2933 = vsel %vm464, %v2932, %v2909
      %v2934 = vsel %vm466, %v2933, %v2913
      %v2935 = vsel %vm468, %v2934, %v2917
      %v2936 = vsel %vm470, %v2935, %v2921
      %v2938 = vsel %vm722, %v2703, 0
      %v2941 = vsel %vm722, %v2704, 0
      %v2944 = vsel %vm722, %v2705, 0
      %v2947 = vsel %vm722, %v2706, 0
      %v2950 = vsel %vm735, %v2929, 0
      %v2953 = vsel %vm735, %v2936, 0
      %2955 = vmatprep.subr.mxu0 0.0
      %2956 = vmatpush1.msra.mxu0 0.0
      %2957 = vmatprep.subr.mxu0 0.0
      %2958 = vmatpush1.msra.mxu0 0.0
      %2959 = vmatprep.subr.mxu0 0.0
      %2960 = vmatpush1.msra.mxu0 0.0
      %2961 = vmatprep.subr.mxu0 0.0
      %2962 = vmatpush1.msra.mxu0 0.0
      %2963 = vmatprep.subr.mxu0 0.0
      %2964 = vmatpush1.msra.mxu0 0.0
      %2965 = vmatprep.subr.mxu0 0.0
      %2966 = vmatpush1.msra.mxu0 0.0
      %2967 = vmatprep.subr.mxu0 0.0
      %2968 = vmatpush1.msra.mxu0 0.0
      %2969 = vmatprep.subr.mxu0 0.0
      %2970 = vmatpush1.msra.mxu0 0.0
      %2971 = vmatprep.subr.mxu0 0.0
      %2972 = vmatpush1.msra.mxu0 0.0
      %2973 = vmatprep.subr.mxu0 0.0
      %2974 = vmatpush1.msra.mxu0 0.0
      %2975 = vmatprep.subr.mxu0 0.0
      %2976 = vmatpush1.msra.mxu0 0.0
      %2977 = vmatprep.subr.mxu0 0.0
      %2978 = vmatpush1.msra.mxu0 0.0
      %2979 = vmatprep.subr.mxu0 0.0
      %2980 = vmatpush1.msra.mxu0 0.0
      %2981 = vmatprep.subr.mxu0 0.0
      %2982 = vmatpush1.msra.mxu0 0.0
      %2983 = vmatprep.subr.mxu0 0.0
      %2984 = vmatpush1.msra.mxu0 0.0
      %2985 = vmatprep.subr.mxu0 %v2953
      %2986 = vmatpush1.msra.mxu0 %v2950
      %2987 = vmatprep.subr.mxu0 0.0
      %2988 = vmatpush2.msra.mxu0 0.0
      %2989 = vmatprep.subr.mxu0 0.0
      %2990 = vmatpush2.msra.mxu0 0.0
      %2991 = vmatprep.subr.mxu0 0.0
      %2992 = vmatpush2.msra.mxu0 0.0
      %2993 = vmatprep.subr.mxu0 0.0
      %2994 = vmatpush2.msra.mxu0 0.0
      %2995 = vmatprep.subr.mxu0 0.0
      %2996 = vmatpush2.msra.mxu0 0.0
      %2997 = vmatprep.subr.mxu0 0.0
      %2998 = vmatpush2.msra.mxu0 0.0
      %2999 = vmatprep.subr.mxu0 0.0
      %3000 = vmatpush2.msra.mxu0 0.0
      %3001 = vmatprep.subr.mxu0 0.0
      %3002 = vmatpush2.msra.mxu0 0.0
      %3003 = vmatprep.subr.mxu0 0.0
      %3004 = vmatpush2.msra.mxu0 0.0
      %3005 = vmatprep.subr.mxu0 0.0
      %3006 = vmatpush2.msra.mxu0 0.0
      %3007 = vmatprep.subr.mxu0 0.0
      %3008 = vmatpush2.msra.mxu0 0.0
      %3009 = vmatprep.subr.mxu0 0.0
      %3010 = vmatpush2.msra.mxu0 0.0
      %3011 = vmatprep.subr.mxu0 0.0
      %3012 = vmatpush2.msra.mxu0 0.0
      %3013 = vmatprep.subr.mxu0 0.0
      %3014 = vmatpush2.msra.mxu0 0.0
      %3015 = vmatprep.subr.mxu0 0.0
      %3016 = vmatpush2.msra.mxu0 0.0
      %3017 = vmatprep.subr.mxu0 0.0
      %3018 = vmatpush2.msra.mxu0 0.0
      %3019 = vmatprep.mubr.f32.mxu0 0.0
      %3020 = vmatmul.mubr.f32.gmra.mxu0 %v2938
      %v3021 = vpop.f32.mrf.mxu0
      %v3022 = vadd.f32 0.0, %v3021
      %v3023 = vpop.f32.mrf.mxu0
      %v3024 = vadd.f32 0.0, %v3023
      %3025 = vmatprep.mubr.f32.mxu0 0.0
      %3026 = vmatmul.mubr.f32.gmra.mxu0 %v2941
      %v3027 = vpop.f32.mrf.mxu0
      %v3028 = vadd.f32 0.0, %v3027
      %v3029 = vpop.f32.mrf.mxu0
      %v3030 = vadd.f32 0.0, %v3029
      %3031 = vmatprep.mubr.f32.mxu0 0.0
      %3032 = vmatmul.mubr.f32.gmra.mxu0 %v2944
      %v3033 = vpop.f32.mrf.mxu0
      %v3034 = vadd.f32 0.0, %v3033
      %v3035 = vpop.f32.mrf.mxu0
      %v3036 = vadd.f32 0.0, %v3035
      %3037 = vmatprep.mubr.f32.mxu0 0.0
      %3038 = vmatmul.mubr.f32.gmra.mxu0 %v2947
      %v3039 = vpop.f32.mrf.mxu0
      %v3040 = vadd.f32 0.0, %v3039
      %v3041 = vpop.f32.mrf.mxu0
      %v3042 = vadd.f32 0.0, %v3041
      %3043 = vdwg.mxu0
      %v3044 = vadd.f32 %v2694, %v3022
      %v3045 = vadd.f32 %v2695, %v3024
      %v3046 = vadd.f32 %v2696, %v3028
      %v3047 = vadd.f32 %v2697, %v3030
      %v3048 = vadd.f32 %v2698, %v3034
      %v3049 = vadd.f32 %v2699, %v3036
      %v3050 = vadd.f32 %v2700, %v3040
      %v3051 = vadd.f32 %v2701, %v3042
      %s3052 = scalar_lea.vmem %s1, 256
      %v3053 = vld [vmem:[%s3052] sm:$0xff]
      %v3054 = vld [vmem:[%s3052 + $0x8] sm:$0xff]
      %v3055 = vld [vmem:[%s3052 + $0x10] sm:$0xff]
      %v3056 = vld [vmem:[%s3052 + $0x18] sm:$0xff]
      %3057 = vrot.lane.b32.xlu0 %v2355, 126
      %v3058 = vpop.permute.xlu0 %3057
      %3059 = vrot.lane.b32.xlu0 %v2357, 126
      %v3060 = vpop.permute.xlu0 %3059
      %3061 = vrot.lane.b32.xlu0 %v2360, 126
      %v3062 = vpop.permute.xlu0 %3061
      %3063 = vrot.lane.b32.xlu0 %v2362, 126
      %v3064 = vpop.permute.xlu0 %3063
      %3065 = vrot.lane.b32.xlu0 %v2365, 126
      %v3066 = vpop.permute.xlu0 %3065
      %3067 = vrot.lane.b32.xlu0 %v2367, 126
      %v3068 = vpop.permute.xlu0 %3067
      %3069 = vrot.lane.b32.xlu0 %v2370, 126
      %v3070 = vpop.permute.xlu0 %3069
      %3071 = vrot.lane.b32.xlu0 %v2372, 126
      %v3072 = vpop.permute.xlu0 %3071
      %v3081 = vcombine.low %v3058, %v3066
      %v3082 = vcombine.high %v3058, %v3066
      %v3084 = vunpack.c.l.s4 1983009808
      %v3085 = vunpack.c.0.s8 %v3084
      %v3086 = vlaneseq
      %v3087 = vshrl.u32 %v3086, 7
      %v3088 = vsub.s32 %v3085, %v3087
      %v3089 = vrot.slane %v3081, %v3088
      %v3091 = vunpack.c.l.s4 1983009808
      %v3092 = vunpack.c.0.s8 %v3091
      %v3093 = vlaneseq
      %v3094 = vshrl.u32 %v3093, 7
      %v3095 = vsub.s32 %v3092, %v3094
      %v3096 = vrot.slane %v3082, %v3095
      %v3097 = vcombine.low %v3062, %v3070
      %v3098 = vcombine.high %v3062, %v3070
      %v3100 = vunpack.c.l.s4 1983009808
      %v3101 = vunpack.c.0.s8 %v3100
      %v3102 = vlaneseq
      %v3103 = vshrl.u32 %v3102, 7
      %v3104 = vsub.s32 %v3101, %v3103
      %v3105 = vrot.slane %v3097, %v3104
      %v3107 = vunpack.c.l.s4 1983009808
      %v3108 = vunpack.c.0.s8 %v3107
      %v3109 = vlaneseq
      %v3110 = vshrl.u32 %v3109, 7
      %v3111 = vsub.s32 %v3108, %v3110
      %v3112 = vrot.slane %v3098, %v3111
      %v3113 = vcombine.low %v3089, %v3105
      %v3114 = vcombine.high %v3089, %v3105
      %v3116 = vunpack.c.l.s4 1934713408
      %v3117 = vunpack.c.0.s8 %v3116
      %v3118 = vlaneseq
      %v3119 = vshrl.u32 %v3118, 7
      %v3120 = vsub.s32 %v3117, %v3119
      %v3121 = vrot.slane %v3113, %v3120
      %v3123 = vunpack.c.l.s4 1934713408
      %v3124 = vunpack.c.0.s8 %v3123
      %v3125 = vlaneseq
      %v3126 = vshrl.u32 %v3125, 7
      %v3127 = vsub.s32 %v3124, %v3126
      %v3128 = vrot.slane %v3114, %v3127
      %v3129 = vcombine.low %v3096, %v3112
      %v3130 = vcombine.high %v3096, %v3112
      %v3132 = vunpack.c.l.s4 1934713408
      %v3133 = vunpack.c.0.s8 %v3132
      %v3134 = vlaneseq
      %v3135 = vshrl.u32 %v3134, 7
      %v3136 = vsub.s32 %v3133, %v3135
      %v3137 = vrot.slane %v3129, %v3136
      %v3139 = vunpack.c.l.s4 1934713408
      %v3140 = vunpack.c.0.s8 %v3139
      %v3141 = vlaneseq
      %v3142 = vshrl.u32 %v3141, 7
      %v3143 = vsub.s32 %v3140, %v3142
      %v3144 = vrot.slane %v3130, %v3143
      %v3145 = vcombine.high %v3121, 0.0
      %v3146 = vcombine.high %v3128, 0.0
      %v3147 = vcombine.high %v3137, 0.0
      %v3148 = vcombine.high %v3144, 0.0
      %v3149 = vcombine.low %v3060, %v3068
      %v3150 = vcombine.high %v3060, %v3068
      %v3152 = vunpack.c.l.s4 1983009808
      %v3153 = vunpack.c.0.s8 %v3152
      %v3154 = vlaneseq
      %v3155 = vshrl.u32 %v3154, 7
      %v3156 = vsub.s32 %v3153, %v3155
      %v3157 = vrot.slane %v3149, %v3156
      %v3159 = vunpack.c.l.s4 1983009808
      %v3160 = vunpack.c.0.s8 %v3159
      %v3161 = vlaneseq
      %v3162 = vshrl.u32 %v3161, 7
      %v3163 = vsub.s32 %v3160, %v3162
      %v3164 = vrot.slane %v3150, %v3163
      %v3165 = vcombine.low %v3064, %v3072
      %v3166 = vcombine.high %v3064, %v3072
      %v3168 = vunpack.c.l.s4 1983009808
      %v3169 = vunpack.c.0.s8 %v3168
      %v3170 = vlaneseq
      %v3171 = vshrl.u32 %v3170, 7
      %v3172 = vsub.s32 %v3169, %v3171
      %v3173 = vrot.slane %v3165, %v3172
      %v3175 = vunpack.c.l.s4 1983009808
      %v3176 = vunpack.c.0.s8 %v3175
      %v3177 = vlaneseq
      %v3178 = vshrl.u32 %v3177, 7
      %v3179 = vsub.s32 %v3176, %v3178
      %v3180 = vrot.slane %v3166, %v3179
      %v3181 = vcombine.low %v3157, %v3173
      %v3182 = vcombine.high %v3157, %v3173
      %v3184 = vunpack.c.l.s4 1934713408
      %v3185 = vunpack.c.0.s8 %v3184
      %v3186 = vlaneseq
      %v3187 = vshrl.u32 %v3186, 7
      %v3188 = vsub.s32 %v3185, %v3187
      %v3189 = vrot.slane %v3181, %v3188
      %v3191 = vunpack.c.l.s4 1934713408
      %v3192 = vunpack.c.0.s8 %v3191
      %v3193 = vlaneseq
      %v3194 = vshrl.u32 %v3193, 7
      %v3195 = vsub.s32 %v3192, %v3194
      %v3196 = vrot.slane %v3182, %v3195
      %v3197 = vcombine.low %v3164, %v3180
      %v3198 = vcombine.high %v3164, %v3180
      %v3200 = vunpack.c.l.s4 1934713408
      %v3201 = vunpack.c.0.s8 %v3200
      %v3202 = vlaneseq
      %v3203 = vshrl.u32 %v3202, 7
      %v3204 = vsub.s32 %v3201, %v3203
      %v3205 = vrot.slane %v3197, %v3204
      %v3207 = vunpack.c.l.s4 1934713408
      %v3208 = vunpack.c.0.s8 %v3207
      %v3209 = vlaneseq
      %v3210 = vshrl.u32 %v3209, 7
      %v3211 = vsub.s32 %v3208, %v3210
      %v3212 = vrot.slane %v3198, %v3211
      %v3213 = vcombine.high %v3189, 0.0
      %v3214 = vcombine.high %v3196, 0.0
      %v3215 = vcombine.high %v3205, 0.0
      %v3216 = vcombine.high %v3212, 0.0
      %3218 = vrot.lane.b32.xlu0 %v3145, 16
      %v3219 = vpop.permute.xlu0 %3218
      %3222 = vrot.lane.b32.xlu0 %v3128, 32
      %v3223 = vpop.permute.xlu0 %3222
      %3226 = vrot.lane.b32.xlu0 %v3146, 48
      %v3227 = vpop.permute.xlu0 %3226
      %3230 = vrot.lane.b32.xlu0 %v3137, 64
      %v3231 = vpop.permute.xlu0 %3230
      %3234 = vrot.lane.b32.xlu0 %v3147, 80
      %v3235 = vpop.permute.xlu0 %3234
      %3238 = vrot.lane.b32.xlu0 %v3144, 96
      %v3239 = vpop.permute.xlu0 %3238
      %3242 = vrot.lane.b32.xlu0 %v3148, 112
      %v3243 = vpop.permute.xlu0 %3242
      %3246 = vrot.lane.b32.xlu0 %v3213, 16
      %v3247 = vpop.permute.xlu0 %3246
      %3250 = vrot.lane.b32.xlu0 %v3196, 32
      %v3251 = vpop.permute.xlu0 %3250
      %3254 = vrot.lane.b32.xlu0 %v3214, 48
      %v3255 = vpop.permute.xlu0 %3254
      %3258 = vrot.lane.b32.xlu0 %v3205, 64
      %v3259 = vpop.permute.xlu0 %3258
      %3262 = vrot.lane.b32.xlu0 %v3215, 80
      %v3263 = vpop.permute.xlu0 %3262
      %3266 = vrot.lane.b32.xlu0 %v3212, 96
      %v3267 = vpop.permute.xlu0 %3266
      %3270 = vrot.lane.b32.xlu0 %v3216, 112
      %v3271 = vpop.permute.xlu0 %3270
      %v3273 = vsel %vm458, %v3121, %v3219
      %v3274 = vsel %vm460, %v3273, %v3223
      %v3275 = vsel %vm462, %v3274, %v3227
      %v3276 = vsel %vm464, %v3275, %v3231
      %v3277 = vsel %vm466, %v3276, %v3235
      %v3278 = vsel %vm468, %v3277, %v3239
      %v3279 = vsel %vm470, %v3278, %v3243
      %v3280 = vsel %vm458, %v3189, %v3247
      %v3281 = vsel %vm460, %v3280, %v3251
      %v3282 = vsel %vm462, %v3281, %v3255
      %v3283 = vsel %vm464, %v3282, %v3259
      %v3284 = vsel %vm466, %v3283, %v3263
      %v3285 = vsel %vm468, %v3284, %v3267
      %v3286 = vsel %vm470, %v3285, %v3271
      %v3288 = vsel %vm722, %v3053, 0
      %v3291 = vsel %vm722, %v3054, 0
      %v3294 = vsel %vm722, %v3055, 0
      %v3297 = vsel %vm722, %v3056, 0
      %v3300 = vsel %vm735, %v3279, 0
      %v3303 = vsel %vm735, %v3286, 0
      %3305 = vmatprep.subr.mxu0 0.0
      %3306 = vmatpush1.msra.mxu0 0.0
      %3307 = vmatprep.subr.mxu0 0.0
      %3308 = vmatpush1.msra.mxu0 0.0
      %3309 = vmatprep.subr.mxu0 0.0
      %3310 = vmatpush1.msra.mxu0 0.0
      %3311 = vmatprep.subr.mxu0 0.0
      %3312 = vmatpush1.msra.mxu0 0.0
      %3313 = vmatprep.subr.mxu0 0.0
      %3314 = vmatpush1.msra.mxu0 0.0
      %3315 = vmatprep.subr.mxu0 0.0
      %3316 = vmatpush1.msra.mxu0 0.0
      %3317 = vmatprep.subr.mxu0 0.0
      %3318 = vmatpush1.msra.mxu0 0.0
      %3319 = vmatprep.subr.mxu0 0.0
      %3320 = vmatpush1.msra.mxu0 0.0
      %3321 = vmatprep.subr.mxu0 0.0
      %3322 = vmatpush1.msra.mxu0 0.0
      %3323 = vmatprep.subr.mxu0 0.0
      %3324 = vmatpush1.msra.mxu0 0.0
      %3325 = vmatprep.subr.mxu0 0.0
      %3326 = vmatpush1.msra.mxu0 0.0
      %3327 = vmatprep.subr.mxu0 0.0
      %3328 = vmatpush1.msra.mxu0 0.0
      %3329 = vmatprep.subr.mxu0 0.0
      %3330 = vmatpush1.msra.mxu0 0.0
      %3331 = vmatprep.subr.mxu0 0.0
      %3332 = vmatpush1.msra.mxu0 0.0
      %3333 = vmatprep.subr.mxu0 0.0
      %3334 = vmatpush1.msra.mxu0 0.0
      %3335 = vmatprep.subr.mxu0 %v3303
      %3336 = vmatpush1.msra.mxu0 %v3300
      %3337 = vmatprep.subr.mxu0 0.0
      %3338 = vmatpush2.msra.mxu0 0.0
      %3339 = vmatprep.subr.mxu0 0.0
      %3340 = vmatpush2.msra.mxu0 0.0
      %3341 = vmatprep.subr.mxu0 0.0
      %3342 = vmatpush2.msra.mxu0 0.0
      %3343 = vmatprep.subr.mxu0 0.0
      %3344 = vmatpush2.msra.mxu0 0.0
      %3345 = vmatprep.subr.mxu0 0.0
      %3346 = vmatpush2.msra.mxu0 0.0
      %3347 = vmatprep.subr.mxu0 0.0
      %3348 = vmatpush2.msra.mxu0 0.0
      %3349 = vmatprep.subr.mxu0 0.0
      %3350 = vmatpush2.msra.mxu0 0.0
      %3351 = vmatprep.subr.mxu0 0.0
      %3352 = vmatpush2.msra.mxu0 0.0
      %3353 = vmatprep.subr.mxu0 0.0
      %3354 = vmatpush2.msra.mxu0 0.0
      %3355 = vmatprep.subr.mxu0 0.0
      %3356 = vmatpush2.msra.mxu0 0.0
      %3357 = vmatprep.subr.mxu0 0.0
      %3358 = vmatpush2.msra.mxu0 0.0
      %3359 = vmatprep.subr.mxu0 0.0
      %3360 = vmatpush2.msra.mxu0 0.0
      %3361 = vmatprep.subr.mxu0 0.0
      %3362 = vmatpush2.msra.mxu0 0.0
      %3363 = vmatprep.subr.mxu0 0.0
      %3364 = vmatpush2.msra.mxu0 0.0
      %3365 = vmatprep.subr.mxu0 0.0
      %3366 = vmatpush2.msra.mxu0 0.0
      %3367 = vmatprep.subr.mxu0 0.0
      %3368 = vmatpush2.msra.mxu0 0.0
      %3369 = vmatprep.mubr.f32.mxu0 0.0
      %3370 = vmatmul.mubr.f32.gmra.mxu0 %v3288
      %v3371 = vpop.f32.mrf.mxu0
      %v3372 = vadd.f32 0.0, %v3371
      %v3373 = vpop.f32.mrf.mxu0
      %v3374 = vadd.f32 0.0, %v3373
      %3375 = vmatprep.mubr.f32.mxu0 0.0
      %3376 = vmatmul.mubr.f32.gmra.mxu0 %v3291
      %v3377 = vpop.f32.mrf.mxu0
      %v3378 = vadd.f32 0.0, %v3377
      %v3379 = vpop.f32.mrf.mxu0
      %v3380 = vadd.f32 0.0, %v3379
      %3381 = vmatprep.mubr.f32.mxu0 0.0
      %3382 = vmatmul.mubr.f32.gmra.mxu0 %v3294
      %v3383 = vpop.f32.mrf.mxu0
      %v3384 = vadd.f32 0.0, %v3383
      %v3385 = vpop.f32.mrf.mxu0
      %v3386 = vadd.f32 0.0, %v3385
      %3387 = vmatprep.mubr.f32.mxu0 0.0
      %3388 = vmatmul.mubr.f32.gmra.mxu0 %v3297
      %v3389 = vpop.f32.mrf.mxu0
      %v3390 = vadd.f32 0.0, %v3389
      %v3391 = vpop.f32.mrf.mxu0
      %v3392 = vadd.f32 0.0, %v3391
      %3393 = vdwg.mxu0
      %v3394 = vadd.f32 %v3044, %v3372
      %v3395 = vadd.f32 %v3045, %v3374
      %v3396 = vadd.f32 %v3046, %v3378
      %v3397 = vadd.f32 %v3047, %v3380
      %v3398 = vadd.f32 %v3048, %v3384
      %v3399 = vadd.f32 %v3049, %v3386
      %v3400 = vadd.f32 %v3050, %v3390
      %v3401 = vadd.f32 %v3051, %v3392
      %v3402 = vld [vmem:[%s2] sm:$0xff]
      %v3403 = vld [vmem:[%s2 + $0x8] sm:$0xff]
      %v3404 = vld [vmem:[%s2 + $0x10] sm:$0xff]
      %v3405 = vld [vmem:[%s2 + $0x18] sm:$0xff]
      %3407 = vset.pattern.permute.xlu0 0
      %3408 = vperm.xlu0 %3407, %v3402
      %v3409 = vpop.permute.xlu0 %3408
      %3412 = vset.pattern.permute.xlu0 0
      %3413 = vperm.xlu0 %3412, %v3403
      %v3414 = vpop.permute.xlu0 %3413
      %3417 = vset.pattern.permute.xlu0 0
      %3418 = vperm.xlu0 %3417, %v3404
      %v3419 = vpop.permute.xlu0 %3418
      %3422 = vset.pattern.permute.xlu0 0
      %3423 = vperm.xlu0 %3422, %v3405
      %v3424 = vpop.permute.xlu0 %3423
      %v3426 = vadd.f32 %v3394, %v3409
      %v3427 = vadd.f32 %v3395, %v3409
      %v3428 = vadd.f32 %v3396, %v3414
      %v3429 = vadd.f32 %v3397, %v3414
      %v3430 = vadd.f32 %v3398, %v3419
      %v3431 = vadd.f32 %v3399, %v3419
      %v3432 = vadd.f32 %v3400, %v3424
      %v3433 = vadd.f32 %v3401, %v3424
      %v3434 = vmax.f32 %v3426, 0.0
      %v3435 = vmax.f32 %v3427, 0.0
      %v3436 = vmax.f32 %v3428, 0.0
      %v3437 = vmax.f32 %v3429, 0.0
      %v3438 = vmax.f32 %v3430, 0.0
      %v3439 = vmax.f32 %v3431, 0.0
      %v3440 = vmax.f32 %v3432, 0.0
      %v3441 = vmax.f32 %v3433, 0.0
      %v3442 = vld [vmem:[%s3] sm:$0xff]
      %v3443 = vld [vmem:[%s3 + $0x8] sm:$0xff]
      %v3444 = vld [vmem:[%s3 + $0x10] sm:$0xff]
      %v3445 = vld [vmem:[%s3 + $0x18] sm:$0xff]
      %3447 = vset.pattern.permute.xlu0 0
      %3448 = vperm.xlu0 %3447, %v3442
      %v3449 = vpop.permute.xlu0 %3448
      %3452 = vset.pattern.permute.xlu0 0
      %3453 = vperm.xlu0 %3452, %v3443
      %v3454 = vpop.permute.xlu0 %3453
      %3457 = vset.pattern.permute.xlu0 0
      %3458 = vperm.xlu0 %3457, %v3444
      %v3459 = vpop.permute.xlu0 %3458
      %3462 = vset.pattern.permute.xlu0 0
      %3463 = vperm.xlu0 %3462, %v3445
      %v3464 = vpop.permute.xlu0 %3463
      %v3466 = vmul.f32 %v3434, %v3449
      %v3467 = vmul.f32 %v3435, %v3449
      %v3468 = vmul.f32 %v3436, %v3454
      %v3469 = vmul.f32 %v3437, %v3454
      %v3470 = vmul.f32 %v3438, %v3459
      %v3471 = vmul.f32 %v3439, %v3459
      %v3472 = vmul.f32 %v3440, %v3464
      %v3473 = vmul.f32 %v3441, %v3464
      %v3474 = vld [vmem:[%s4] sm:$0xff]
      %v3475 = vld [vmem:[%s4 + $0x8] sm:$0xff]
      %v3476 = vld [vmem:[%s4 + $0x10] sm:$0xff]
      %v3477 = vld [vmem:[%s4 + $0x18] sm:$0xff]
      %3479 = vset.pattern.permute.xlu0 0
      %3480 = vperm.xlu0 %3479, %v3474
      %v3481 = vpop.permute.xlu0 %3480
      %3484 = vset.pattern.permute.xlu0 0
      %3485 = vperm.xlu0 %3484, %v3475
      %v3486 = vpop.permute.xlu0 %3485
      %3489 = vset.pattern.permute.xlu0 0
      %3490 = vperm.xlu0 %3489, %v3476
      %v3491 = vpop.permute.xlu0 %3490
      %3494 = vset.pattern.permute.xlu0 0
      %3495 = vperm.xlu0 %3494, %v3477
      %v3496 = vpop.permute.xlu0 %3495
      %v3498 = vadd.f32 %v3466, %v3481
      %v3499 = vadd.f32 %v3467, %v3481
      %v3500 = vadd.f32 %v3468, %v3486
      %v3501 = vadd.f32 %v3469, %v3486
      %v3502 = vadd.f32 %v3470, %v3491
      %v3503 = vadd.f32 %v3471, %v3491
      %v3504 = vadd.f32 %v3472, %v3496
      %v3505 = vadd.f32 %v3473, %v3496
      %3506 = vst [vmem:[%s246] sm:$0xff] %v3498
      %3507 = vst [vmem:[%s246 + $0x8] sm:$0xff] %v3499
      %3508 = vst [vmem:[%s246 + $0x10] sm:$0xff] %v3500
      %3509 = vst [vmem:[%s246 + $0x18] sm:$0xff] %v3501
      %3510 = vst [vmem:[%s246 + $0x20] sm:$0xff] %v3502
      %3511 = vst [vmem:[%s246 + $0x28] sm:$0xff] %v3503
      %3512 = vst [vmem:[%s246 + $0x30] sm:$0xff] %v3504
      %3513 = vst [vmem:[%s246 + $0x38] sm:$0xff] %v3505
      %s3514 = smul.u32 2, %s21
      %p3515 = scmp.lt.s32.totalorder %s20, 1
      %s3516 = scalar_select %p3515, %s20, 1
      %p3517 = scmp.lt.s32.totalorder %s3514, 1
      %s3518 = scalar_select %p3517, %s3514, 1
      %s3519 = smul.addr %s3516, 8
      %s3520 = sadd.s32 %s3518, %s3519
      %s3521 = smul.addr %s3520, 8
      %s3522 = scalar_lea.vmem %s5, %s3521
      // Predicated region
      $region41: #{conv_transpose_block.3} parent=39 // pred_check
        %p3523 = pneg %p158
      $region42: #{conv_transpose_block.3} parent=39 // pred_check_branch
        %3525 = sbr.rel (%p3523) target = $region44
      $region43: #{conv_transpose_block.3} parent=39 // pred_region
        %s3526 = smul.u32 2, %s21
      $region44: #{conv_transpose_block.3} parent=39 // pred_fallthru
        _
    $region40: #{conv_transpose_block.3} parent=5 // pred_fallthru
      _
    %p3527 = scmp.le.s32.totalorder 2, %s11
    // Predicated region
    $region45: #{conv_transpose_block.3} parent=5 // pred_check
      %p3528 = pneg %p3527
    $region46: #{conv_transpose_block.3} parent=5 // pred_check_branch
      %3530 = sbr.rel (%p3528) target = $region48
    $region47: #{conv_transpose_block.3} parent=5 // pred_region
      %s3531 = ssub.s32 %s11, 2
      // Predicated region
      $region49: #{conv_transpose_block.3} parent=47 // pred_check
        %p3532 = pneg %p164
      $region50: #{conv_transpose_block.3} parent=47 // pred_check_branch
        %3534 = sbr.rel (%p3532) target = $region52
      $region51: #{conv_transpose_block.3} parent=47 // pred_region
        %s3535 = smul.u32 2, %s23
        %p3536 = scmp.lt.s32.totalorder %s22, 1
        %s3537 = scalar_select %p3536, %s22, 1
        %p3538 = scmp.lt.s32.totalorder %s3535, 1
        %s3539 = scalar_select %p3538, %s3535, 1
        %s3540 = smul.addr %s3537, 8
        %s3541 = sadd.s32 %s3539, %s3540
        %s3542 = smul.addr %s3541, 8
        %s3543 = scalar_lea.vmem %s5, %s3542
      $region52: #{conv_transpose_block.3} parent=47 // pred_fallthru
        _
    $region48: #{conv_transpose_block.3} parent=5 // pred_fallthru
      _
  $region6: #{conv_transpose_block.3} parent=0 // loop_footer
    %s15 = sadd.s32 1, %s11
  $region7: #{conv_transpose_block.3} parent=0 // loop_footer_branch
    %10 = sbr.rel target = $region3
  $region8: #{conv_transpose_block.3} parent=0 // loop_exit
    _

// kernel: conv_transpose_block.2
$region0: #{conv_transpose_block.2}
  #allocation0 [shape = 'u32[]', space=smem, size = 0x4, offset = 0x4, fixed_abs, tag = 'smem constant byte address 0x4 - core index']
  #allocation1 [shape = 'u32[144,128]{1,0:T(1,128)}', space=vmem, size = 0x12000, scoped, tag = 'internal scratch']
  %s0 = inlined_call_operand.vmem [shape: f32[2,4,18,18], index: 0, kind: input, shape index: {}]
  %s1 = inlined_call_operand.vmem [shape: f32[9,32,4], index: 1, kind: input, shape index: {}]
  %s2 = inlined_call_operand.vmem [shape: f32[32,1], index: 2, kind: input, shape index: {}]
  %s3 = inlined_call_operand.vmem [shape: f32[2,32,128], index: 3, kind: output, shape index: {0}]
  %s4 = inlined_call_operand.vmem [shape: f32[2,32,128], index: 4, kind: output, shape index: {1}]
  %5 = xla_tuple %s3, %s4
  %s6 = sld [smem:[#allocation0]]
  $region57: #{conv_transpose_block.2} parent=0
    _
  %s8 = ssub.s32 1, %s6
  %s9 = scalar_select 0, %s8, %s6
  loop: start=0, step=1, limit=4
  $region2: #{conv_transpose_block.2} parent=0 // loop_pre_header
    _
  $region3: #{conv_transpose_block.2} parent=0 // loop_header
    %s11 = sphi 0, %s15
    %p12 = scmp.ge.s32.totalorder %s11, 4
    %s18 = sphi 0, %s30
    %s19 = sphi 0, %s26
    %s20 = sphi 0, %s18
    %s21 = sphi 0, %s19
    %s22 = sphi 0, %s20
    %s23 = sphi 0, %s21
    %s33 = sphi 0, %s35
    %s36 = sphi 0, %s33
    %s37 = sphi 0, %s36
    %s53 = sphi 0, %s37
    %s57 = sphi 0, %s57
    %s59 = sphi 0, %s57
    %s60 = sphi 0, %s59
    %s74 = sphi 0, %s60
    %s78 = sphi 0, %s78
    %s80 = sphi 0, %s78
    %s81 = sphi 0, %s80
    %s95 = sphi 0, %s81
    %s101 = sphi 0, %s103
    %s104 = sphi 0, %s101
    %s105 = sphi 0, %s104
    %s121 = sphi 0, %s105
    %s127 = sphi 0, %s129
    %s130 = sphi 0, %s127
    %s131 = sphi 0, %s130
    %s147 = sphi 0, %s131
  $region4: #{conv_transpose_block.2} parent=0 // loop_header_branch
    %14 = sbr.rel (%p12) target = $region8
  $region5: #{conv_transpose_block.2} parent=0 // loop_body
    %s16 = ssub.s32 %s11, 1
    %s17 = ssub.s32 %s11, 2
    %s24 = sadd.s32 1, %s19
    %p25 = scmp.ge.s32.totalorder %s24, 1
    %s26 = scalar_select %p25, 0, %s24
    %s27 = sadd.s32 1, %s18
    %s28 = scalar_select %p25, %s27, %s18
    %p29 = scmp.ge.s32.totalorder %s28, 2
    %s30 = scalar_select %p29, 0, %s28
    %s31 = ssub.s32 %s18, %s30
    %p32 = scmp.eq.s32.totalorder %s31, 0
    %s34 = sadd.s32 %s33, 1
    %s35 = scalar_select %p32, %s33, %s34
    %p38 = pneg %p32
    %p39 = scmp.eq.s32.totalorder %s11, 1
    %p40 = por %p38, %p39
    %p41 = scmp.ne.s32.totalorder %s33, %s36
    %p42 = scmp.eq.s32.totalorder %s11, 0
    %p43 = por %p41, %p42
    %p44 = scmp.ne.s32.totalorder %s33, %s36
    %p45 = scmp.eq.s32.totalorder %s16, 1
    %p46 = por %p44, %p45
    %p47 = scmp.ne.s32.totalorder %s36, %s37
    %p48 = scmp.eq.s32.totalorder %s16, 0
    %p49 = por %p47, %p48
    %p50 = scmp.ne.s32.totalorder %s36, %s37
    %p51 = scmp.eq.s32.totalorder %s17, 1
    %p52 = por %p50, %p51
    %p54 = scmp.ne.s32.totalorder %s37, %s53
    %p55 = scmp.eq.s32.totalorder %s17, 0
    %p56 = por %p54, %p55
    %s58 = sadd.s32 %s57, 1
    %p61 = scmp.eq.s32.totalorder %s11, 1
    %p62 = scmp.ne.s32.totalorder %s57, %s59
    %p63 = scmp.eq.s32.totalorder %s11, 0
    %p64 = por %p62, %p63
    %p65 = scmp.ne.s32.totalorder %s57, %s59
    %p66 = scmp.eq.s32.totalorder %s16, 1
    %p67 = por %p65, %p66
    %p68 = scmp.ne.s32.totalorder %s59, %s60
    %p69 = scmp.eq.s32.totalorder %s16, 0
    %p70 = por %p68, %p69
    %p71 = scmp.ne.s32.totalorder %s59, %s60
    %p72 = scmp.eq.s32.totalorder %s17, 1
    %p73 = por %p71, %p72
    %p75 = scmp.ne.s32.totalorder %s60, %s74
    %p76 = scmp.eq.s32.totalorder %s17, 0
    %p77 = por %p75, %p76
    %s79 = sadd.s32 %s78, 1
    %p82 = scmp.eq.s32.totalorder %s11, 1
    %p83 = scmp.ne.s32.totalorder %s78, %s80
    %p84 = scmp.eq.s32.totalorder %s11, 0
    %p85 = por %p83, %p84
    %p86 = scmp.ne.s32.totalorder %s78, %s80
    %p87 = scmp.eq.s32.totalorder %s16, 1
    %p88 = por %p86, %p87
    %p89 = scmp.ne.s32.totalorder %s80, %s81
    %p90 = scmp.eq.s32.totalorder %s16, 0
    %p91 = por %p89, %p90
    %p92 = scmp.ne.s32.totalorder %s80, %s81
    %p93 = scmp.eq.s32.totalorder %s17, 1
    %p94 = por %p92, %p93
    %p96 = scmp.ne.s32.totalorder %s81, %s95
    %p97 = scmp.eq.s32.totalorder %s17, 0
    %p98 = por %p96, %p97
    %s99 = ssub.s32 %s18, %s30
    %p100 = scmp.eq.s32.totalorder %s99, 0
    %s102 = sadd.s32 %s101, 1
    %s103 = scalar_select %p100, %s101, %s102
    %p106 = pneg %p100
    %p107 = scmp.eq.s32.totalorder %s11, 1
    %p108 = por %p106, %p107
    %p109 = scmp.ne.s32.totalorder %s101, %s104
    %p110 = scmp.eq.s32.totalorder %s11, 0
    %p111 = por %p109, %p110
    %p112 = scmp.ne.s32.totalorder %s101, %s104
    %p113 = scmp.eq.s32.totalorder %s16, 1
    %p114 = por %p112, %p113
    %p115 = scmp.ne.s32.totalorder %s104, %s105
    %p116 = scmp.eq.s32.totalorder %s16, 0
    %p117 = por %p115, %p116
    %p118 = scmp.ne.s32.totalorder %s104, %s105
    %p119 = scmp.eq.s32.totalorder %s17, 1
    %p120 = por %p118, %p119
    %p122 = scmp.ne.s32.totalorder %s105, %s121
    %p123 = scmp.eq.s32.totalorder %s17, 0
    %p124 = por %p122, %p123
    %s125 = ssub.s32 %s18, %s30
    %p126 = scmp.eq.s32.totalorder %s125, 0
    %s128 = sadd.s32 %s127, 1
    %s129 = scalar_select %p126, %s127, %s128
    %p132 = pneg %p126
    %p133 = scmp.eq.s32.totalorder %s11, 1
    %p134 = por %p132, %p133
    %p135 = scmp.ne.s32.totalorder %s127, %s130
    %p136 = scmp.eq.s32.totalorder %s11, 0
    %p137 = por %p135, %p136
    %p138 = scmp.ne.s32.totalorder %s127, %s130
    %p139 = scmp.eq.s32.totalorder %s16, 1
    %p140 = por %p138, %p139
    %p141 = scmp.ne.s32.totalorder %s130, %s131
    %p142 = scmp.eq.s32.totalorder %s16, 0
    %p143 = por %p141, %p142
    %p144 = scmp.ne.s32.totalorder %s130, %s131
    %p145 = scmp.eq.s32.totalorder %s17, 1
    %p146 = por %p144, %p145
    %p148 = scmp.ne.s32.totalorder %s131, %s147
    %p149 = scmp.eq.s32.totalorder %s17, 0
    %p150 = por %p148, %p149
    %p151 = scmp.le.s32.totalorder 1, %s11
    %p152 = scmp.lt.s32.totalorder %s11, 3
    %p153 = pnand %p151, %p152
    %p154 = pneg %p153
    // Predicated region
    $region9: #{conv_transpose_block.2} parent=5 // pred_check
      _
    $region10: #{conv_transpose_block.2} parent=5 // pred_check_branch
      %156 = sbr.rel (%p153) target = $region12
    $region11: #{conv_transpose_block.2} parent=5 // pred_region
      %s157 = ssub.s32 %s11, 1
      // Predicated region
      $region13: #{conv_transpose_block.2} parent=11 // pred_check
        %p158 = pneg %p70
      $region14: #{conv_transpose_block.2} parent=11 // pred_check_branch
        %160 = sbr.rel (%p158) target = $region16
      $region15: #{conv_transpose_block.2} parent=11 // pred_region
        _
      $region16: #{conv_transpose_block.2} parent=11 // pred_fallthru
        _
      // Predicated region
      $region17: #{conv_transpose_block.2} parent=11 // pred_check
        %p161 = pneg %p91
      $region18: #{conv_transpose_block.2} parent=11 // pred_check_branch
        %163 = sbr.rel (%p161) target = $region20
      $region19: #{conv_transpose_block.2} parent=11 // pred_region
        _
      $region20: #{conv_transpose_block.2} parent=11 // pred_fallthru
        _
    $region12: #{conv_transpose_block.2} parent=5 // pred_fallthru
      _
    %p164 = scmp.lt.s32.totalorder %s11, 2
    // Predicated region
    $region21: #{conv_transpose_block.2} parent=5 // pred_check
      %p165 = pneg %p164
    $region22: #{conv_transpose_block.2} parent=5 // pred_check_branch
      %167 = sbr.rel (%p165) target = $region24
    $region23: #{conv_transpose_block.2} parent=5 // pred_region
      // Predicated region
      $region25: #{conv_transpose_block.2} parent=23 // pred_check
        %p168 = pneg %p43
      $region26: #{conv_transpose_block.2} parent=23 // pred_check_branch
        %170 = sbr.rel (%p168) target = $region28
      $region27: #{conv_transpose_block.2} parent=23 // pred_region
        %p171 = scmp.lt.s32.totalorder %s18, 1
        %s172 = scalar_select %p171, %s18, 1
        %s173 = smul.addr %s172, 12
        %s174 = smul.addr %s173, 8
        %s175 = scalar_lea.vmem %s0, %s174
      $region28: #{conv_transpose_block.2} parent=23 // pred_fallthru
        _
    $region24: #{conv_transpose_block.2} parent=5 // pred_fallthru
      _
    %p176 = scmp.le.s32.totalorder 1, %s11
    %p177 = scmp.lt.s32.totalorder %s11, 3
    %p178 = pnand %p176, %p177
    %p179 = pneg %p178
    // Predicated region
    $region29: #{conv_transpose_block.2} parent=5 // pred_check
      _
    $region30: #{conv_transpose_block.2} parent=5 // pred_check_branch
      %181 = sbr.rel (%p178) target = $region32
    $region31: #{conv_transpose_block.2} parent=5 // pred_region
      %s182 = ssub.s32 %s11, 1
      %p183 = scmp.lt.s32.totalorder %s20, 1
      %s184 = scalar_select %p183, %s20, 1
      %s185 = smul.addr %s184, 12
      %s186 = smul.addr %s185, 8
      %s187 = scalar_lea.vmem %s0, %s186
      %p188 = pneg %p49
      %p189 = pneg %p46
      %p190 = pneg %p70
      %p191 = pneg %p67
      %p192 = pneg %p91
      %p193 = pneg %p88
      %p194 = pneg %p117
      %p195 = pneg %p114
      %p196 = scmp.lt.s32.totalorder %s20, 1
      %s197 = scalar_select %p196, %s20, 1
      %s198 = smul.addr %s197, 4
      %s199 = smul.addr %s198, 8
      %s200 = scalar_lea.vmem %s3, %s199
      %p201 = pneg %p143
      %p202 = pneg %p140
      %p203 = scmp.lt.s32.totalorder %s20, 1
      %s204 = scalar_select %p203, %s20, 1
      %s205 = smul.addr %s204, 4
      %s206 = smul.addr %s205, 8
      %s207 = scalar_lea.vmem %s4, %s206
      %p208 = scmp.lt.s32.totalorder %s20, 1
      %s209 = scalar_select %p208, %s20, 1
      %s210 = smul.addr %s209, 12
      %s211 = smul.addr %s210, 8
      %s212 = scalar_lea.vmem %s0, %s211
      %p213 = scmp.lt.s32.totalorder %s20, 1
      %s214 = scalar_select %p213, %s20, 1
      %s215 = smul.addr %s214, 4
      %s216 = smul.addr %s215, 8
      %s217 = scalar_lea.vmem %s3, %s216
      %p218 = scmp.lt.s32.totalorder %s20, 1
      %s219 = scalar_select %p218, %s20, 1
      %s220 = smul.addr %s219, 4
      %s221 = smul.addr %s220, 8
      %s222 = scalar_lea.vmem %s4, %s221
      %p223 = scmp.eq.s32.totalorder %s21, 0
      // Predicated region
      $region33: #{conv_transpose_block.2} parent=31 // pred_check
        %p224 = pneg %p223
      $region34: #{conv_transpose_block.2} parent=31 // pred_check_branch
        %226 = sbr.rel (%p224) target = $region36
      $region35: #{conv_transpose_block.2} parent=31 // pred_region
        %227 = vst [vmem:[%s217] sm:$0xff] 0.0
        %228 = vst [vmem:[%s217 + $0x8] sm:$0xff] 0.0
        %229 = vst [vmem:[%s217 + $0x10] sm:$0xff] 0.0
        %230 = vst [vmem:[%s217 + $0x18] sm:$0xff] 0.0
        %231 = vst [vmem:[%s222] sm:$0xff] 0.0
        %232 = vst [vmem:[%s222 + $0x8] sm:$0xff] 0.0
        %233 = vst [vmem:[%s222 + $0x10] sm:$0xff] 0.0
        %234 = vst [vmem:[%s222 + $0x18] sm:$0xff] 0.0
      $region36: #{conv_transpose_block.2} parent=31 // pred_fallthru
        _
      %s235 = smul.u32 %s21, 16
      %s236 = scalar_lea.vmem %s212, %s235
      %v237 = vld [vmem:[%s236] sm:$0xff]
      %v238 = vld [vmem:[%s236 + $0x8] sm:$0xff]
      %v239 = vld [vmem:[%s236 + $0x10] sm:$0x3]
      %v240 = vld [vmem:[%s236 + $0x18] sm:$0xff]
      %v241 = vld [vmem:[%s236 + $0x20] sm:$0xff]
      %v242 = vld [vmem:[%s236 + $0x28] sm:$0x3]
      %v243 = vld [vmem:[%s236 + $0x30] sm:$0xff]
      %v244 = vld [vmem:[%s236 + $0x38] sm:$0xff]
      %v245 = vld [vmem:[%s236 + $0x40] sm:$0x3]
      %v246 = vld [vmem:[%s236 + $0x48] sm:$0xff]
      %v247 = vld [vmem:[%s236 + $0x50] sm:$0xff]
      %v248 = vld [vmem:[%s236 + $0x58] sm:$0x3]
      %v249 = vld [vmem:[%s1] sm:$0xff]
      %v250 = vld [vmem:[%s1 + $0x8] sm:$0xff]
      %v251 = vld [vmem:[%s1 + $0x10] sm:$0xff]
      %v252 = vld [vmem:[%s1 + $0x18] sm:$0xff]
      %v253 = vcombine.low %v237, %v243
      %v254 = vcombine.high %v237, %v243
      %v256 = vunpack.c.l.s4 1983009808
      %v257 = vunpack.c.0.s8 %v256
      %v258 = vlaneseq
      %v259 = vshrl.u32 %v258, 7
      %v260 = vsub.s32 %v257, %v259
      %v261 = vrot.slane %v253, %v260
      %v263 = vunpack.c.l.s4 1983009808
      %v264 = vunpack.c.0.s8 %v263
      %v265 = vlaneseq
      %v266 = vshrl.u32 %v265, 7
      %v267 = vsub.s32 %v264, %v266
      %v268 = vrot.slane %v254, %v267
      %v269 = vcombine.low %v240, %v246
      %v270 = vcombine.high %v240, %v246
      %v272 = vunpack.c.l.s4 1983009808
      %v273 = vunpack.c.0.s8 %v272
      %v274 = vlaneseq
      %v275 = vshrl.u32 %v274, 7
      %v276 = vsub.s32 %v273, %v275
      %v277 = vrot.slane %v269, %v276
      %v279 = vunpack.c.l.s4 1983009808
      %v280 = vunpack.c.0.s8 %v279
      %v281 = vlaneseq
      %v282 = vshrl.u32 %v281, 7
      %v283 = vsub.s32 %v280, %v282
      %v284 = vrot.slane %v270, %v283
      %v285 = vcombine.low %v261, %v277
      %v286 = vcombine.high %v261, %v277
      %v288 = vunpack.c.l.s4 1934713408
      %v289 = vunpack.c.0.s8 %v288
      %v290 = vlaneseq
      %v291 = vshrl.u32 %v290, 7
      %v292 = vsub.s32 %v289, %v291
      %v293 = vrot.slane %v285, %v292
      %v295 = vunpack.c.l.s4 1934713408
      %v296 = vunpack.c.0.s8 %v295
      %v297 = vlaneseq
      %v298 = vshrl.u32 %v297, 7
      %v299 = vsub.s32 %v296, %v298
      %v300 = vrot.slane %v286, %v299
      %v301 = vcombine.low %v268, %v284
      %v302 = vcombine.high %v268, %v284
      %v304 = vunpack.c.l.s4 1934713408
      %v305 = vunpack.c.0.s8 %v304
      %v306 = vlaneseq
      %v307 = vshrl.u32 %v306, 7
      %v308 = vsub.s32 %v305, %v307
      %v309 = vrot.slane %v301, %v308
      %v311 = vunpack.c.l.s4 1934713408
      %v312 = vunpack.c.0.s8 %v311
      %v313 = vlaneseq
      %v314 = vshrl.u32 %v313, 7
      %v315 = vsub.s32 %v312, %v314
      %v316 = vrot.slane %v302, %v315
      %v317 = vcombine.high %v293, 0.0
      %v318 = vcombine.high %v300, 0.0
      %v319 = vcombine.high %v309, 0.0
      %v320 = vcombine.high %v316, 0.0
      %v321 = vcombine.low %v238, %v244
      %v322 = vcombine.high %v238, %v244
      %v324 = vunpack.c.l.s4 1983009808
      %v325 = vunpack.c.0.s8 %v324
      %v326 = vlaneseq
      %v327 = vshrl.u32 %v326, 7
      %v328 = vsub.s32 %v325, %v327
      %v329 = vrot.slane %v321, %v328
      %v331 = vunpack.c.l.s4 1983009808
      %v332 = vunpack.c.0.s8 %v331
      %v333 = vlaneseq
      %v334 = vshrl.u32 %v333, 7
      %v335 = vsub.s32 %v332, %v334
      %v336 = vrot.slane %v322, %v335
      %v337 = vcombine.low %v241, %v247
      %v338 = vcombine.high %v241, %v247
      %v340 = vunpack.c.l.s4 1983009808
      %v341 = vunpack.c.0.s8 %v340
      %v342 = vlaneseq
      %v343 = vshrl.u32 %v342, 7
      %v344 = vsub.s32 %v341, %v343
      %v345 = vrot.slane %v337, %v344
      %v347 = vunpack.c.l.s4 1983009808
      %v348 = vunpack.c.0.s8 %v347
      %v349 = vlaneseq
      %v350 = vshrl.u32 %v349, 7
      %v351 = vsub.s32 %v348, %v350
      %v352 = vrot.slane %v338, %v351
      %v353 = vcombine.low %v329, %v345
      %v354 = vcombine.high %v329, %v345
      %v356 = vunpack.c.l.s4 1934713408
      %v357 = vunpack.c.0.s8 %v356
      %v358 = vlaneseq
      %v359 = vshrl.u32 %v358, 7
      %v360 = vsub.s32 %v357, %v359
      %v361 = vrot.slane %v353, %v360
      %v363 = vunpack.c.l.s4 1934713408
      %v364 = vunpack.c.0.s8 %v363
      %v365 = vlaneseq
      %v366 = vshrl.u32 %v365, 7
      %v367 = vsub.s32 %v364, %v366
      %v368 = vrot.slane %v354, %v367
      %v369 = vcombine.low %v336, %v352
      %v370 = vcombine.high %v336, %v352
      %v372 = vunpack.c.l.s4 1934713408
      %v373 = vunpack.c.0.s8 %v372
      %v374 = vlaneseq
      %v375 = vshrl.u32 %v374, 7
      %v376 = vsub.s32 %v373, %v375
      %v377 = vrot.slane %v369, %v376
      %v379 = vunpack.c.l.s4 1934713408
      %v380 = vunpack.c.0.s8 %v379
      %v381 = vlaneseq
      %v382 = vshrl.u32 %v381, 7
      %v383 = vsub.s32 %v380, %v382
      %v384 = vrot.slane %v370, %v383
      %v385 = vcombine.high %v361, 0.0
      %v386 = vcombine.high %v368, 0.0
      %v387 = vcombine.high %v377, 0.0
      %v388 = vcombine.high %v384, 0.0
      %390 = vrot.lane.b32.xlu0 %v317, 16
      %v391 = vpop.permute.xlu0 %390
      %394 = vrot.lane.b32.xlu0 %v300, 32
      %v395 = vpop.permute.xlu0 %394
      %398 = vrot.lane.b32.xlu0 %v318, 48
      %v399 = vpop.permute.xlu0 %398
      %402 = vrot.lane.b32.xlu0 %v309, 64
      %v403 = vpop.permute.xlu0 %402
      %406 = vrot.lane.b32.xlu0 %v319, 80
      %v407 = vpop.permute.xlu0 %406
      %410 = vrot.lane.b32.xlu0 %v316, 96
      %v411 = vpop.permute.xlu0 %410
      %414 = vrot.lane.b32.xlu0 %v320, 112
      %v415 = vpop.permute.xlu0 %414
      %418 = vrot.lane.b32.xlu0 %v385, 16
      %v419 = vpop.permute.xlu0 %418
      %422 = vrot.lane.b32.xlu0 %v368, 32
      %v423 = vpop.permute.xlu0 %422
      %426 = vrot.lane.b32.xlu0 %v386, 48
      %v427 = vpop.permute.xlu0 %426
      %430 = vrot.lane.b32.xlu0 %v377, 64
      %v431 = vpop.permute.xlu0 %430
      %434 = vrot.lane.b32.xlu0 %v387, 80
      %v435 = vpop.permute.xlu0 %434
      %438 = vrot.lane.b32.xlu0 %v384, 96
      %v439 = vpop.permute.xlu0 %438
      %442 = vrot.lane.b32.xlu0 %v388, 112
      %v443 = vpop.permute.xlu0 %442
      %vm445 = vcmask 130048
      %v446 = vsel %vm445, %v293, %v391
      %vm447 = vcmask 261120
      %v448 = vsel %vm447, %v446, %v395
      %vm449 = vcmask 392192
      %v450 = vsel %vm449, %v448, %v399
      %vm451 = vcmask 523264
      %v452 = vsel %vm451, %v450, %v403
      %vm453 = vcmask 654336
      %v454 = vsel %vm453, %v452, %v407
      %vm455 = vcmask 785408
      %v456 = vsel %vm455, %v454, %v411
      %vm457 = vcmask 916480
      %v458 = vsel %vm457, %v456, %v415
      %v459 = vsel %vm445, %v361, %v419
      %v460 = vsel %vm447, %v459, %v423
      %v461 = vsel %vm449, %v460, %v427
      %v462 = vsel %vm451, %v461, %v431
      %v463 = vsel %vm453, %v462, %v435
      %v464 = vsel %vm455, %v463, %v439
      %v465 = vsel %vm457, %v464, %v443
      %s466 = scalar_lea.vmem %s1, 32
      %v467 = vld [vmem:[%s466] sm:$0xff]
      %v468 = vld [vmem:[%s466 + $0x8] sm:$0xff]
      %v469 = vld [vmem:[%s466 + $0x10] sm:$0xff]
      %v470 = vld [vmem:[%s466 + $0x18] sm:$0xff]
      %479 = vrot.lane.b32.xlu0 %v237, 127
      %v480 = vpop.permute.xlu0 %479
      %481 = vrot.lane.b32.xlu0 %v238, 127
      %v482 = vpop.permute.xlu0 %481
      %483 = vrot.lane.b32.xlu0 %v240, 127
      %v484 = vpop.permute.xlu0 %483
      %485 = vrot.lane.b32.xlu0 %v241, 127
      %v486 = vpop.permute.xlu0 %485
      %487 = vrot.lane.b32.xlu0 %v243, 127
      %v488 = vpop.permute.xlu0 %487
      %489 = vrot.lane.b32.xlu0 %v244, 127
      %v490 = vpop.permute.xlu0 %489
      %491 = vrot.lane.b32.xlu0 %v246, 127
      %v492 = vpop.permute.xlu0 %491
      %493 = vrot.lane.b32.xlu0 %v247, 127
      %v494 = vpop.permute.xlu0 %493
      %v503 = vcombine.low %v480, %v488
      %v504 = vcombine.high %v480, %v488
      %v506 = vunpack.c.l.s4 1983009808
      %v507 = vunpack.c.0.s8 %v506
      %v508 = vlaneseq
      %v509 = vshrl.u32 %v508, 7
      %v510 = vsub.s32 %v507, %v509
      %v511 = vrot.slane %v503, %v510
      %v513 = vunpack.c.l.s4 1983009808
      %v514 = vunpack.c.0.s8 %v513
      %v515 = vlaneseq
      %v516 = vshrl.u32 %v515, 7
      %v517 = vsub.s32 %v514, %v516
      %v518 = vrot.slane %v504, %v517
      %v519 = vcombine.low %v484, %v492
      %v520 = vcombine.high %v484, %v492
      %v522 = vunpack.c.l.s4 1983009808
      %v523 = vunpack.c.0.s8 %v522
      %v524 = vlaneseq
      %v525 = vshrl.u32 %v524, 7
      %v526 = vsub.s32 %v523, %v525
      %v527 = vrot.slane %v519, %v526
      %v529 = vunpack.c.l.s4 1983009808
      %v530 = vunpack.c.0.s8 %v529
      %v531 = vlaneseq
      %v532 = vshrl.u32 %v531, 7
      %v533 = vsub.s32 %v530, %v532
      %v534 = vrot.slane %v520, %v533
      %v535 = vcombine.low %v511, %v527
      %v536 = vcombine.high %v511, %v527
      %v538 = vunpack.c.l.s4 1934713408
      %v539 = vunpack.c.0.s8 %v538
      %v540 = vlaneseq
      %v541 = vshrl.u32 %v540, 7
      %v542 = vsub.s32 %v539, %v541
      %v543 = vrot.slane %v535, %v542
      %v545 = vunpack.c.l.s4 1934713408
      %v546 = vunpack.c.0.s8 %v545
      %v547 = vlaneseq
      %v548 = vshrl.u32 %v547, 7
      %v549 = vsub.s32 %v546, %v548
      %v550 = vrot.slane %v536, %v549
      %v551 = vcombine.low %v518, %v534
      %v552 = vcombine.high %v518, %v534
      %v554 = vunpack.c.l.s4 1934713408
      %v555 = vunpack.c.0.s8 %v554
      %v556 = vlaneseq
      %v557 = vshrl.u32 %v556, 7
      %v558 = vsub.s32 %v555, %v557
      %v559 = vrot.slane %v551, %v558
      %v561 = vunpack.c.l.s4 1934713408
      %v562 = vunpack.c.0.s8 %v561
      %v563 = vlaneseq
      %v564 = vshrl.u32 %v563, 7
      %v565 = vsub.s32 %v562, %v564
      %v566 = vrot.slane %v552, %v565
      %v567 = vcombine.high %v543, 0.0
      %v568 = vcombine.high %v550, 0.0
      %v569 = vcombine.high %v559, 0.0
      %v570 = vcombine.high %v566, 0.0
      %v571 = vcombine.low %v482, %v490
      %v572 = vcombine.high %v482, %v490
      %v574 = vunpack.c.l.s4 1983009808
      %v575 = vunpack.c.0.s8 %v574
      %v576 = vlaneseq
      %v577 = vshrl.u32 %v576, 7
      %v578 = vsub.s32 %v575, %v577
      %v579 = vrot.slane %v571, %v578
      %v581 = vunpack.c.l.s4 1983009808
      %v582 = vunpack.c.0.s8 %v581
      %v583 = vlaneseq
      %v584 = vshrl.u32 %v583, 7
      %v585 = vsub.s32 %v582, %v584
      %v586 = vrot.slane %v572, %v585
      %v587 = vcombine.low %v486, %v494
      %v588 = vcombine.high %v486, %v494
      %v590 = vunpack.c.l.s4 1983009808
      %v591 = vunpack.c.0.s8 %v590
      %v592 = vlaneseq
      %v593 = vshrl.u32 %v592, 7
      %v594 = vsub.s32 %v591, %v593
      %v595 = vrot.slane %v587, %v594
      %v597 = vunpack.c.l.s4 1983009808
      %v598 = vunpack.c.0.s8 %v597
      %v599 = vlaneseq
      %v600 = vshrl.u32 %v599, 7
      %v601 = vsub.s32 %v598, %v600
      %v602 = vrot.slane %v588, %v601
      %v603 = vcombine.low %v579, %v595
      %v604 = vcombine.high %v579, %v595
      %v606 = vunpack.c.l.s4 1934713408
      %v607 = vunpack.c.0.s8 %v606
      %v608 = vlaneseq
      %v609 = vshrl.u32 %v608, 7
      %v610 = vsub.s32 %v607, %v609
      %v611 = vrot.slane %v603, %v610
      %v613 = vunpack.c.l.s4 1934713408
      %v614 = vunpack.c.0.s8 %v613
      %v615 = vlaneseq
      %v616 = vshrl.u32 %v615, 7
      %v617 = vsub.s32 %v614, %v616
      %v618 = vrot.slane %v604, %v617
      %v619 = vcombine.low %v586, %v602
      %v620 = vcombine.high %v586, %v602
      %v622 = vunpack.c.l.s4 1934713408
      %v623 = vunpack.c.0.s8 %v622
      %v624 = vlaneseq
      %v625 = vshrl.u32 %v624, 7
      %v626 = vsub.s32 %v623, %v625
      %v627 = vrot.slane %v619, %v626
      %v629 = vunpack.c.l.s4 1934713408
      %v630 = vunpack.c.0.s8 %v629
      %v631 = vlaneseq
      %v632 = vshrl.u32 %v631, 7
      %v633 = vsub.s32 %v630, %v632
      %v634 = vrot.slane %v620, %v633
      %v635 = vcombine.high %v611, 0.0
      %v636 = vcombine.high %v618, 0.0
      %v637 = vcombine.high %v627, 0.0
      %v638 = vcombine.high %v634, 0.0
      %640 = vrot.lane.b32.xlu0 %v567, 16
      %v641 = vpop.permute.xlu0 %640
      %644 = vrot.lane.b32.xlu0 %v550, 32
      %v645 = vpop.permute.xlu0 %644
      %648 = vrot.lane.b32.xlu0 %v568, 48
      %v649 = vpop.permute.xlu0 %648
      %652 = vrot.lane.b32.xlu0 %v559, 64
      %v653 = vpop.permute.xlu0 %652
      %656 = vrot.lane.b32.xlu0 %v569, 80
      %v657 = vpop.permute.xlu0 %656
      %660 = vrot.lane.b32.xlu0 %v566, 96
      %v661 = vpop.permute.xlu0 %660
      %664 = vrot.lane.b32.xlu0 %v570, 112
      %v665 = vpop.permute.xlu0 %664
      %668 = vrot.lane.b32.xlu0 %v635, 16
      %v669 = vpop.permute.xlu0 %668
      %672 = vrot.lane.b32.xlu0 %v618, 32
      %v673 = vpop.permute.xlu0 %672
      %676 = vrot.lane.b32.xlu0 %v636, 48
      %v677 = vpop.permute.xlu0 %676
      %680 = vrot.lane.b32.xlu0 %v627, 64
      %v681 = vpop.permute.xlu0 %680
      %684 = vrot.lane.b32.xlu0 %v637, 80
      %v685 = vpop.permute.xlu0 %684
      %688 = vrot.lane.b32.xlu0 %v634, 96
      %v689 = vpop.permute.xlu0 %688
      %692 = vrot.lane.b32.xlu0 %v638, 112
      %v693 = vpop.permute.xlu0 %692
      %v695 = vsel %vm445, %v543, %v641
      %v696 = vsel %vm447, %v695, %v645
      %v697 = vsel %vm449, %v696, %v649
      %v698 = vsel %vm451, %v697, %v653
      %v699 = vsel %vm453, %v698, %v657
      %v700 = vsel %vm455, %v699, %v661
      %v701 = vsel %vm457, %v700, %v665
      %v702 = vsel %vm445, %v611, %v669
      %v703 = vsel %vm447, %v702, %v673
      %v704 = vsel %vm449, %v703, %v677
      %v705 = vsel %vm451, %v704, %v681
      %v706 = vsel %vm453, %v705, %v685
      %v707 = vsel %vm455, %v706, %v689
      %v708 = vsel %vm457, %v707, %v693
      %vm709 = vcmask 31744
      %v711 = vsel %vm709, %v467, 0
      %v714 = vsel %vm709, %v468, 0
      %v717 = vsel %vm709, %v469, 0
      %v720 = vsel %vm709, %v470, 0
      %vm722 = vcmask 1043456
      %v724 = vsel %vm722, %v701, 0
      %v727 = vsel %vm722, %v708, 0
      %729 = vmatprep.subr.mxu0 0.0
      %730 = vmatpush1.msra.mxu0 0.0
      %731 = vmatprep.subr.mxu0 0.0
      %732 = vmatpush1.msra.mxu0 0.0
      %733 = vmatprep.subr.mxu0 0.0
      %734 = vmatpush1.msra.mxu0 0.0
      %735 = vmatprep.subr.mxu0 0.0
      %736 = vmatpush1.msra.mxu0 0.0
      %737 = vmatprep.subr.mxu0 0.0
      %738 = vmatpush1.msra.mxu0 0.0
      %739 = vmatprep.subr.mxu0 0.0
      %740 = vmatpush1.msra.mxu0 0.0
      %741 = vmatprep.subr.mxu0 0.0
      %742 = vmatpush1.msra.mxu0 0.0
      %743 = vmatprep.subr.mxu0 0.0
      %744 = vmatpush1.msra.mxu0 0.0
      %745 = vmatprep.subr.mxu0 0.0
      %746 = vmatpush1.msra.mxu0 0.0
      %747 = vmatprep.subr.mxu0 0.0
      %748 = vmatpush1.msra.mxu0 0.0
      %749 = vmatprep.subr.mxu0 0.0
      %750 = vmatpush1.msra.mxu0 0.0
      %751 = vmatprep.subr.mxu0 0.0
      %752 = vmatpush1.msra.mxu0 0.0
      %753 = vmatprep.subr.mxu0 0.0
      %754 = vmatpush1.msra.mxu0 0.0
      %755 = vmatprep.subr.mxu0 0.0
      %756 = vmatpush1.msra.mxu0 0.0
      %757 = vmatprep.subr.mxu0 0.0
      %758 = vmatpush1.msra.mxu0 0.0
      %759 = vmatprep.subr.mxu0 %v727
      %760 = vmatpush1.msra.mxu0 %v724
      %761 = vmatprep.subr.mxu0 0.0
      %762 = vmatpush2.msra.mxu0 0.0
      %763 = vmatprep.subr.mxu0 0.0
      %764 = vmatpush2.msra.mxu0 0.0
      %765 = vmatprep.subr.mxu0 0.0
      %766 = vmatpush2.msra.mxu0 0.0
      %767 = vmatprep.subr.mxu0 0.0
      %768 = vmatpush2.msra.mxu0 0.0
      %769 = vmatprep.subr.mxu0 0.0
      %770 = vmatpush2.msra.mxu0 0.0
      %771 = vmatprep.subr.mxu0 0.0
      %772 = vmatpush2.msra.mxu0 0.0
      %773 = vmatprep.subr.mxu0 0.0
      %774 = vmatpush2.msra.mxu0 0.0
      %775 = vmatprep.subr.mxu0 0.0
      %776 = vmatpush2.msra.mxu0 0.0
      %777 = vmatprep.subr.mxu0 0.0
      %778 = vmatpush2.msra.mxu0 0.0
      %779 = vmatprep.subr.mxu0 0.0
      %780 = vmatpush2.msra.mxu0 0.0
      %781 = vmatprep.subr.mxu0 0.0
      %782 = vmatpush2.msra.mxu0 0.0
      %783 = vmatprep.subr.mxu0 0.0
      %784 = vmatpush2.msra.mxu0 0.0
      %785 = vmatprep.subr.mxu0 0.0
      %786 = vmatpush2.msra.mxu0 0.0
      %787 = vmatprep.subr.mxu0 0.0
      %788 = vmatpush2.msra.mxu0 0.0
      %789 = vmatprep.subr.mxu0 0.0
      %790 = vmatpush2.msra.mxu0 0.0
      %791 = vmatprep.subr.mxu0 0.0
      %792 = vmatpush2.msra.mxu0 0.0
      %793 = vmatprep.mubr.f32.mxu0 0.0
      %794 = vmatmul.mubr.f32.gmra.mxu0 %v711
      %v795 = vpop.f32.mrf.mxu0
      %v796 = vadd.f32 0.0, %v795
      %v797 = vpop.f32.mrf.mxu0
      %v798 = vadd.f32 0.0, %v797
      %799 = vmatprep.mubr.f32.mxu0 0.0
      %800 = vmatmul.mubr.f32.gmra.mxu0 %v714
      %v801 = vpop.f32.mrf.mxu0
      %v802 = vadd.f32 0.0, %v801
      %v803 = vpop.f32.mrf.mxu0
      %v804 = vadd.f32 0.0, %v803
      %805 = vmatprep.mubr.f32.mxu0 0.0
      %806 = vmatmul.mubr.f32.gmra.mxu0 %v717
      %v807 = vpop.f32.mrf.mxu0
      %v808 = vadd.f32 0.0, %v807
      %v809 = vpop.f32.mrf.mxu0
      %v810 = vadd.f32 0.0, %v809
      %811 = vmatprep.mubr.f32.mxu0 0.0
      %812 = vmatmul.mubr.f32.gmra.mxu0 %v720
      %v813 = vpop.f32.mrf.mxu0
      %v814 = vadd.f32 0.0, %v813
      %v815 = vpop.f32.mrf.mxu0
      %v816 = vadd.f32 0.0, %v815
      %817 = vdwg.mxu0
      %v819 = vsel %vm709, %v249, 0
      %v822 = vsel %vm709, %v250, 0
      %v825 = vsel %vm709, %v251, 0
      %v828 = vsel %vm709, %v252, 0
      %v831 = vsel %vm722, %v458, 0
      %v834 = vsel %vm722, %v465, 0
      %836 = vmatprep.subr.mxu0 0.0
      %837 = vmatpush1.msra.mxu0 0.0
      %838 = vmatprep.subr.mxu0 0.0
      %839 = vmatpush1.msra.mxu0 0.0
      %840 = vmatprep.subr.mxu0 0.0
      %841 = vmatpush1.msra.mxu0 0.0
      %842 = vmatprep.subr.mxu0 0.0
      %843 = vmatpush1.msra.mxu0 0.0
      %844 = vmatprep.subr.mxu0 0.0
      %845 = vmatpush1.msra.mxu0 0.0
      %846 = vmatprep.subr.mxu0 0.0
      %847 = vmatpush1.msra.mxu0 0.0
      %848 = vmatprep.subr.mxu0 0.0
      %849 = vmatpush1.msra.mxu0 0.0
      %850 = vmatprep.subr.mxu0 0.0
      %851 = vmatpush1.msra.mxu0 0.0
      %852 = vmatprep.subr.mxu0 0.0
      %853 = vmatpush1.msra.mxu0 0.0
      %854 = vmatprep.subr.mxu0 0.0
      %855 = vmatpush1.msra.mxu0 0.0
      %856 = vmatprep.subr.mxu0 0.0
      %857 = vmatpush1.msra.mxu0 0.0
      %858 = vmatprep.subr.mxu0 0.0
      %859 = vmatpush1.msra.mxu0 0.0
      %860 = vmatprep.subr.mxu0 0.0
      %861 = vmatpush1.msra.mxu0 0.0
      %862 = vmatprep.subr.mxu0 0.0
      %863 = vmatpush1.msra.mxu0 0.0
      %864 = vmatprep.subr.mxu0 0.0
      %865 = vmatpush1.msra.mxu0 0.0
      %866 = vmatprep.subr.mxu0 %v834
      %867 = vmatpush1.msra.mxu0 %v831
      %868 = vmatprep.subr.mxu0 0.0
      %869 = vmatpush2.msra.mxu0 0.0
      %870 = vmatprep.subr.mxu0 0.0
      %871 = vmatpush2.msra.mxu0 0.0
      %872 = vmatprep.subr.mxu0 0.0
      %873 = vmatpush2.msra.mxu0 0.0
      %874 = vmatprep.subr.mxu0 0.0
      %875 = vmatpush2.msra.mxu0 0.0
      %876 = vmatprep.subr.mxu0 0.0
      %877 = vmatpush2.msra.mxu0 0.0
      %878 = vmatprep.subr.mxu0 0.0
      %879 = vmatpush2.msra.mxu0 0.0
      %880 = vmatprep.subr.mxu0 0.0
      %881 = vmatpush2.msra.mxu0 0.0
      %882 = vmatprep.subr.mxu0 0.0
      %883 = vmatpush2.msra.mxu0 0.0
      %884 = vmatprep.subr.mxu0 0.0
      %885 = vmatpush2.msra.mxu0 0.0
      %886 = vmatprep.subr.mxu0 0.0
      %887 = vmatpush2.msra.mxu0 0.0
      %888 = vmatprep.subr.mxu0 0.0
      %889 = vmatpush2.msra.mxu0 0.0
      %890 = vmatprep.subr.mxu0 0.0
      %891 = vmatpush2.msra.mxu0 0.0
      %892 = vmatprep.subr.mxu0 0.0
      %893 = vmatpush2.msra.mxu0 0.0
      %894 = vmatprep.subr.mxu0 0.0
      %895 = vmatpush2.msra.mxu0 0.0
      %896 = vmatprep.subr.mxu0 0.0
      %897 = vmatpush2.msra.mxu0 0.0
      %898 = vmatprep.subr.mxu0 0.0
      %899 = vmatpush2.msra.mxu0 0.0
      %900 = vmatprep.mubr.f32.mxu0 0.0
      %901 = vmatmul.mubr.f32.gmra.mxu0 %v819
      %v902 = vpop.f32.mrf.mxu0
      %v903 = vadd.f32 %v796, %v902
      %v904 = vpop.f32.mrf.mxu0
      %v905 = vadd.f32 %v798, %v904
      %906 = vmatprep.mubr.f32.mxu0 0.0
      %907 = vmatmul.mubr.f32.gmra.mxu0 %v822
      %v908 = vpop.f32.mrf.mxu0
      %v909 = vadd.f32 %v802, %v908
      %v910 = vpop.f32.mrf.mxu0
      %v911 = vadd.f32 %v804, %v910
      %912 = vmatprep.mubr.f32.mxu0 0.0
      %913 = vmatmul.mubr.f32.gmra.mxu0 %v825
      %v914 = vpop.f32.mrf.mxu0
      %v915 = vadd.f32 %v808, %v914
      %v916 = vpop.f32.mrf.mxu0
      %v917 = vadd.f32 %v810, %v916
      %918 = vmatprep.mubr.f32.mxu0 0.0
      %919 = vmatmul.mubr.f32.gmra.mxu0 %v828
      %v920 = vpop.f32.mrf.mxu0
      %v921 = vadd.f32 %v814, %v920
      %v922 = vpop.f32.mrf.mxu0
      %v923 = vadd.f32 %v816, %v922
      %924 = vdwg.mxu0
      %s925 = scalar_lea.vmem %s1, 64
      %v926 = vld [vmem:[%s925] sm:$0xff]
      %v927 = vld [vmem:[%s925 + $0x8] sm:$0xff]
      %v928 = vld [vmem:[%s925 + $0x10] sm:$0xff]
      %v929 = vld [vmem:[%s925 + $0x18] sm:$0xff]
      %930 = vrot.lane.b32.xlu0 %v237, 126
      %v931 = vpop.permute.xlu0 %930
      %932 = vrot.lane.b32.xlu0 %v238, 126
      %v933 = vpop.permute.xlu0 %932
      %934 = vrot.lane.b32.xlu0 %v240, 126
      %v935 = vpop.permute.xlu0 %934
      %936 = vrot.lane.b32.xlu0 %v241, 126
      %v937 = vpop.permute.xlu0 %936
      %938 = vrot.lane.b32.xlu0 %v243, 126
      %v939 = vpop.permute.xlu0 %938
      %940 = vrot.lane.b32.xlu0 %v244, 126
      %v941 = vpop.permute.xlu0 %940
      %942 = vrot.lane.b32.xlu0 %v246, 126
      %v943 = vpop.permute.xlu0 %942
      %944 = vrot.lane.b32.xlu0 %v247, 126
      %v945 = vpop.permute.xlu0 %944
      %v954 = vcombine.low %v931, %v939
      %v955 = vcombine.high %v931, %v939
      %v957 = vunpack.c.l.s4 1983009808
      %v958 = vunpack.c.0.s8 %v957
      %v959 = vlaneseq
      %v960 = vshrl.u32 %v959, 7
      %v961 = vsub.s32 %v958, %v960
      %v962 = vrot.slane %v954, %v961
      %v964 = vunpack.c.l.s4 1983009808
      %v965 = vunpack.c.0.s8 %v964
      %v966 = vlaneseq
      %v967 = vshrl.u32 %v966, 7
      %v968 = vsub.s32 %v965, %v967
      %v969 = vrot.slane %v955, %v968
      %v970 = vcombine.low %v935, %v943
      %v971 = vcombine.high %v935, %v943
      %v973 = vunpack.c.l.s4 1983009808
      %v974 = vunpack.c.0.s8 %v973
      %v975 = vlaneseq
      %v976 = vshrl.u32 %v975, 7
      %v977 = vsub.s32 %v974, %v976
      %v978 = vrot.slane %v970, %v977
      %v980 = vunpack.c.l.s4 1983009808
      %v981 = vunpack.c.0.s8 %v980
      %v982 = vlaneseq
      %v983 = vshrl.u32 %v982, 7
      %v984 = vsub.s32 %v981, %v983
      %v985 = vrot.slane %v971, %v984
      %v986 = vcombine.low %v962, %v978
      %v987 = vcombine.high %v962, %v978
      %v989 = vunpack.c.l.s4 1934713408
      %v990 = vunpack.c.0.s8 %v989
      %v991 = vlaneseq
      %v992 = vshrl.u32 %v991, 7
      %v993 = vsub.s32 %v990, %v992
      %v994 = vrot.slane %v986, %v993
      %v996 = vunpack.c.l.s4 1934713408
      %v997 = vunpack.c.0.s8 %v996
      %v998 = vlaneseq
      %v999 = vshrl.u32 %v998, 7
      %v1000 = vsub.s32 %v997, %v999
      %v1001 = vrot.slane %v987, %v1000
      %v1002 = vcombine.low %v969, %v985
      %v1003 = vcombine.high %v969, %v985
      %v1005 = vunpack.c.l.s4 1934713408
      %v1006 = vunpack.c.0.s8 %v1005
      %v1007 = vlaneseq
      %v1008 = vshrl.u32 %v1007, 7
      %v1009 = vsub.s32 %v1006, %v1008
      %v1010 = vrot.slane %v1002, %v1009
      %v1012 = vunpack.c.l.s4 1934713408
      %v1013 = vunpack.c.0.s8 %v1012
      %v1014 = vlaneseq
      %v1015 = vshrl.u32 %v1014, 7
      %v1016 = vsub.s32 %v1013, %v1015
      %v1017 = vrot.slane %v1003, %v1016
      %v1018 = vcombine.high %v994, 0.0
      %v1019 = vcombine.high %v1001, 0.0
      %v1020 = vcombine.high %v1010, 0.0
      %v1021 = vcombine.high %v1017, 0.0
      %v1022 = vcombine.low %v933, %v941
      %v1023 = vcombine.high %v933, %v941
      %v1025 = vunpack.c.l.s4 1983009808
      %v1026 = vunpack.c.0.s8 %v1025
      %v1027 = vlaneseq
      %v1028 = vshrl.u32 %v1027, 7
      %v1029 = vsub.s32 %v1026, %v1028
      %v1030 = vrot.slane %v1022, %v1029
      %v1032 = vunpack.c.l.s4 1983009808
      %v1033 = vunpack.c.0.s8 %v1032
      %v1034 = vlaneseq
      %v1035 = vshrl.u32 %v1034, 7
      %v1036 = vsub.s32 %v1033, %v1035
      %v1037 = vrot.slane %v1023, %v1036
      %v1038 = vcombine.low %v937, %v945
      %v1039 = vcombine.high %v937, %v945
      %v1041 = vunpack.c.l.s4 1983009808
      %v1042 = vunpack.c.0.s8 %v1041
      %v1043 = vlaneseq
      %v1044 = vshrl.u32 %v1043, 7
      %v1045 = vsub.s32 %v1042, %v1044
      %v1046 = vrot.slane %v1038, %v1045
      %v1048 = vunpack.c.l.s4 1983009808
      %v1049 = vunpack.c.0.s8 %v1048
      %v1050 = vlaneseq
      %v1051 = vshrl.u32 %v1050, 7
      %v1052 = vsub.s32 %v1049, %v1051
      %v1053 = vrot.slane %v1039, %v1052
      %v1054 = vcombine.low %v1030, %v1046
      %v1055 = vcombine.high %v1030, %v1046
      %v1057 = vunpack.c.l.s4 1934713408
      %v1058 = vunpack.c.0.s8 %v1057
      %v1059 = vlaneseq
      %v1060 = vshrl.u32 %v1059, 7
      %v1061 = vsub.s32 %v1058, %v1060
      %v1062 = vrot.slane %v1054, %v1061
      %v1064 = vunpack.c.l.s4 1934713408
      %v1065 = vunpack.c.0.s8 %v1064
      %v1066 = vlaneseq
      %v1067 = vshrl.u32 %v1066, 7
      %v1068 = vsub.s32 %v1065, %v1067
      %v1069 = vrot.slane %v1055, %v1068
      %v1070 = vcombine.low %v1037, %v1053
      %v1071 = vcombine.high %v1037, %v1053
      %v1073 = vunpack.c.l.s4 1934713408
      %v1074 = vunpack.c.0.s8 %v1073
      %v1075 = vlaneseq
      %v1076 = vshrl.u32 %v1075, 7
      %v1077 = vsub.s32 %v1074, %v1076
      %v1078 = vrot.slane %v1070, %v1077
      %v1080 = vunpack.c.l.s4 1934713408
      %v1081 = vunpack.c.0.s8 %v1080
      %v1082 = vlaneseq
      %v1083 = vshrl.u32 %v1082, 7
      %v1084 = vsub.s32 %v1081, %v1083
      %v1085 = vrot.slane %v1071, %v1084
      %v1086 = vcombine.high %v1062, 0.0
      %v1087 = vcombine.high %v1069, 0.0
      %v1088 = vcombine.high %v1078, 0.0
      %v1089 = vcombine.high %v1085, 0.0
      %1091 = vrot.lane.b32.xlu0 %v1018, 16
      %v1092 = vpop.permute.xlu0 %1091
      %1095 = vrot.lane.b32.xlu0 %v1001, 32
      %v1096 = vpop.permute.xlu0 %1095
      %1099 = vrot.lane.b32.xlu0 %v1019, 48
      %v1100 = vpop.permute.xlu0 %1099
      %1103 = vrot.lane.b32.xlu0 %v1010, 64
      %v1104 = vpop.permute.xlu0 %1103
      %1107 = vrot.lane.b32.xlu0 %v1020, 80
      %v1108 = vpop.permute.xlu0 %1107
      %1111 = vrot.lane.b32.xlu0 %v1017, 96
      %v1112 = vpop.permute.xlu0 %1111
      %1115 = vrot.lane.b32.xlu0 %v1021, 112
      %v1116 = vpop.permute.xlu0 %1115
      %1119 = vrot.lane.b32.xlu0 %v1086, 16
      %v1120 = vpop.permute.xlu0 %1119
      %1123 = vrot.lane.b32.xlu0 %v1069, 32
      %v1124 = vpop.permute.xlu0 %1123
      %1127 = vrot.lane.b32.xlu0 %v1087, 48
      %v1128 = vpop.permute.xlu0 %1127
      %1131 = vrot.lane.b32.xlu0 %v1078, 64
      %v1132 = vpop.permute.xlu0 %1131
      %1135 = vrot.lane.b32.xlu0 %v1088, 80
      %v1136 = vpop.permute.xlu0 %1135
      %1139 = vrot.lane.b32.xlu0 %v1085, 96
      %v1140 = vpop.permute.xlu0 %1139
      %1143 = vrot.lane.b32.xlu0 %v1089, 112
      %v1144 = vpop.permute.xlu0 %1143
      %v1146 = vsel %vm445, %v994, %v1092
      %v1147 = vsel %vm447, %v1146, %v1096
      %v1148 = vsel %vm449, %v1147, %v1100
      %v1149 = vsel %vm451, %v1148, %v1104
      %v1150 = vsel %vm453, %v1149, %v1108
      %v1151 = vsel %vm455, %v1150, %v1112
      %v1152 = vsel %vm457, %v1151, %v1116
      %v1153 = vsel %vm445, %v1062, %v1120
      %v1154 = vsel %vm447, %v1153, %v1124
      %v1155 = vsel %vm449, %v1154, %v1128
      %v1156 = vsel %vm451, %v1155, %v1132
      %v1157 = vsel %vm453, %v1156, %v1136
      %v1158 = vsel %vm455, %v1157, %v1140
      %v1159 = vsel %vm457, %v1158, %v1144
      %v1161 = vsel %vm709, %v926, 0
      %v1164 = vsel %vm709, %v927, 0
      %v1167 = vsel %vm709, %v928, 0
      %v1170 = vsel %vm709, %v929, 0
      %v1173 = vsel %vm722, %v1152, 0
      %v1176 = vsel %vm722, %v1159, 0
      %1178 = vmatprep.subr.mxu0 0.0
      %1179 = vmatpush1.msra.mxu0 0.0
      %1180 = vmatprep.subr.mxu0 0.0
      %1181 = vmatpush1.msra.mxu0 0.0
      %1182 = vmatprep.subr.mxu0 0.0
      %1183 = vmatpush1.msra.mxu0 0.0
      %1184 = vmatprep.subr.mxu0 0.0
      %1185 = vmatpush1.msra.mxu0 0.0
      %1186 = vmatprep.subr.mxu0 0.0
      %1187 = vmatpush1.msra.mxu0 0.0
      %1188 = vmatprep.subr.mxu0 0.0
      %1189 = vmatpush1.msra.mxu0 0.0
      %1190 = vmatprep.subr.mxu0 0.0
      %1191 = vmatpush1.msra.mxu0 0.0
      %1192 = vmatprep.subr.mxu0 0.0
      %1193 = vmatpush1.msra.mxu0 0.0
      %1194 = vmatprep.subr.mxu0 0.0
      %1195 = vmatpush1.msra.mxu0 0.0
      %1196 = vmatprep.subr.mxu0 0.0
      %1197 = vmatpush1.msra.mxu0 0.0
      %1198 = vmatprep.subr.mxu0 0.0
      %1199 = vmatpush1.msra.mxu0 0.0
      %1200 = vmatprep.subr.mxu0 0.0
      %1201 = vmatpush1.msra.mxu0 0.0
      %1202 = vmatprep.subr.mxu0 0.0
      %1203 = vmatpush1.msra.mxu0 0.0
      %1204 = vmatprep.subr.mxu0 0.0
      %1205 = vmatpush1.msra.mxu0 0.0
      %1206 = vmatprep.subr.mxu0 0.0
      %1207 = vmatpush1.msra.mxu0 0.0
      %1208 = vmatprep.subr.mxu0 %v1176
      %1209 = vmatpush1.msra.mxu0 %v1173
      %1210 = vmatprep.subr.mxu0 0.0
      %1211 = vmatpush2.msra.mxu0 0.0
      %1212 = vmatprep.subr.mxu0 0.0
      %1213 = vmatpush2.msra.mxu0 0.0
      %1214 = vmatprep.subr.mxu0 0.0
      %1215 = vmatpush2.msra.mxu0 0.0
      %1216 = vmatprep.subr.mxu0 0.0
      %1217 = vmatpush2.msra.mxu0 0.0
      %1218 = vmatprep.subr.mxu0 0.0
      %1219 = vmatpush2.msra.mxu0 0.0
      %1220 = vmatprep.subr.mxu0 0.0
      %1221 = vmatpush2.msra.mxu0 0.0
      %1222 = vmatprep.subr.mxu0 0.0
      %1223 = vmatpush2.msra.mxu0 0.0
      %1224 = vmatprep.subr.mxu0 0.0
      %1225 = vmatpush2.msra.mxu0 0.0
      %1226 = vmatprep.subr.mxu0 0.0
      %1227 = vmatpush2.msra.mxu0 0.0
      %1228 = vmatprep.subr.mxu0 0.0
      %1229 = vmatpush2.msra.mxu0 0.0
      %1230 = vmatprep.subr.mxu0 0.0
      %1231 = vmatpush2.msra.mxu0 0.0
      %1232 = vmatprep.subr.mxu0 0.0
      %1233 = vmatpush2.msra.mxu0 0.0
      %1234 = vmatprep.subr.mxu0 0.0
      %1235 = vmatpush2.msra.mxu0 0.0
      %1236 = vmatprep.subr.mxu0 0.0
      %1237 = vmatpush2.msra.mxu0 0.0
      %1238 = vmatprep.subr.mxu0 0.0
      %1239 = vmatpush2.msra.mxu0 0.0
      %1240 = vmatprep.subr.mxu0 0.0
      %1241 = vmatpush2.msra.mxu0 0.0
      %1242 = vmatprep.mubr.f32.mxu0 0.0
      %1243 = vmatmul.mubr.f32.gmra.mxu0 %v1161
      %v1244 = vpop.f32.mrf.mxu0
      %v1245 = vadd.f32 0.0, %v1244
      %v1246 = vpop.f32.mrf.mxu0
      %v1247 = vadd.f32 0.0, %v1246
      %1248 = vmatprep.mubr.f32.mxu0 0.0
      %1249 = vmatmul.mubr.f32.gmra.mxu0 %v1164
      %v1250 = vpop.f32.mrf.mxu0
      %v1251 = vadd.f32 0.0, %v1250
      %v1252 = vpop.f32.mrf.mxu0
      %v1253 = vadd.f32 0.0, %v1252
      %1254 = vmatprep.mubr.f32.mxu0 0.0
      %1255 = vmatmul.mubr.f32.gmra.mxu0 %v1167
      %v1256 = vpop.f32.mrf.mxu0
      %v1257 = vadd.f32 0.0, %v1256
      %v1258 = vpop.f32.mrf.mxu0
      %v1259 = vadd.f32 0.0, %v1258
      %1260 = vmatprep.mubr.f32.mxu0 0.0
      %1261 = vmatmul.mubr.f32.gmra.mxu0 %v1170
      %v1262 = vpop.f32.mrf.mxu0
      %v1263 = vadd.f32 0.0, %v1262
      %v1264 = vpop.f32.mrf.mxu0
      %v1265 = vadd.f32 0.0, %v1264
      %1266 = vdwg.mxu0
      %v1267 = vadd.f32 %v903, %v1245
      %v1268 = vadd.f32 %v905, %v1247
      %v1269 = vadd.f32 %v909, %v1251
      %v1270 = vadd.f32 %v911, %v1253
      %v1271 = vadd.f32 %v915, %v1257
      %v1272 = vadd.f32 %v917, %v1259
      %v1273 = vadd.f32 %v921, %v1263
      %v1274 = vadd.f32 %v923, %v1265
      %s1275 = scalar_lea.vmem %s1, 96
      %v1276 = vld [vmem:[%s1275] sm:$0xff]
      %v1277 = vld [vmem:[%s1275 + $0x8] sm:$0xff]
      %v1278 = vld [vmem:[%s1275 + $0x10] sm:$0xff]
      %v1279 = vld [vmem:[%s1275 + $0x18] sm:$0xff]
      %vm1284 = vcmask 1046528
      %v1285 = vrot.slane %v237, 1
      %v1286 = vrot.slane %v238, 1
      %v1287 = vsel %vm1284, %v1285, %v1286
      %v1288 = vrot.slane %v239, 1
      %v1289 = vsel %vm1284, %v1286, %v1288
      %v1290 = vrot.slane %v240, 1
      %v1291 = vrot.slane %v241, 1
      %v1292 = vsel %vm1284, %v1290, %v1291
      %v1293 = vrot.slane %v242, 1
      %v1294 = vsel %vm1284, %v1291, %v1293
      %v1295 = vrot.slane %v243, 1
      %v1296 = vrot.slane %v244, 1
      %v1297 = vsel %vm1284, %v1295, %v1296
      %v1298 = vrot.slane %v245, 1
      %v1299 = vsel %vm1284, %v1296, %v1298
      %v1300 = vrot.slane %v246, 1
      %v1301 = vrot.slane %v247, 1
      %v1302 = vsel %vm1284, %v1300, %v1301
      %v1303 = vrot.slane %v248, 1
      %v1304 = vsel %vm1284, %v1301, %v1303
      %v1313 = vcombine.low %v1287, %v1297
      %v1314 = vcombine.high %v1287, %v1297
      %v1316 = vunpack.c.l.s4 1983009808
      %v1317 = vunpack.c.0.s8 %v1316
      %v1318 = vlaneseq
      %v1319 = vshrl.u32 %v1318, 7
      %v1320 = vsub.s32 %v1317, %v1319
      %v1321 = vrot.slane %v1313, %v1320
      %v1323 = vunpack.c.l.s4 1983009808
      %v1324 = vunpack.c.0.s8 %v1323
      %v1325 = vlaneseq
      %v1326 = vshrl.u32 %v1325, 7
      %v1327 = vsub.s32 %v1324, %v1326
      %v1328 = vrot.slane %v1314, %v1327
      %v1329 = vcombine.low %v1292, %v1302
      %v1330 = vcombine.high %v1292, %v1302
      %v1332 = vunpack.c.l.s4 1983009808
      %v1333 = vunpack.c.0.s8 %v1332
      %v1334 = vlaneseq
      %v1335 = vshrl.u32 %v1334, 7
      %v1336 = vsub.s32 %v1333, %v1335
      %v1337 = vrot.slane %v1329, %v1336
      %v1339 = vunpack.c.l.s4 1983009808
      %v1340 = vunpack.c.0.s8 %v1339
      %v1341 = vlaneseq
      %v1342 = vshrl.u32 %v1341, 7
      %v1343 = vsub.s32 %v1340, %v1342
      %v1344 = vrot.slane %v1330, %v1343
      %v1345 = vcombine.low %v1321, %v1337
      %v1346 = vcombine.high %v1321, %v1337
      %v1348 = vunpack.c.l.s4 1934713408
      %v1349 = vunpack.c.0.s8 %v1348
      %v1350 = vlaneseq
      %v1351 = vshrl.u32 %v1350, 7
      %v1352 = vsub.s32 %v1349, %v1351
      %v1353 = vrot.slane %v1345, %v1352
      %v1355 = vunpack.c.l.s4 1934713408
      %v1356 = vunpack.c.0.s8 %v1355
      %v1357 = vlaneseq
      %v1358 = vshrl.u32 %v1357, 7
      %v1359 = vsub.s32 %v1356, %v1358
      %v1360 = vrot.slane %v1346, %v1359
      %v1361 = vcombine.low %v1328, %v1344
      %v1362 = vcombine.high %v1328, %v1344
      %v1364 = vunpack.c.l.s4 1934713408
      %v1365 = vunpack.c.0.s8 %v1364
      %v1366 = vlaneseq
      %v1367 = vshrl.u32 %v1366, 7
      %v1368 = vsub.s32 %v1365, %v1367
      %v1369 = vrot.slane %v1361, %v1368
      %v1371 = vunpack.c.l.s4 1934713408
      %v1372 = vunpack.c.0.s8 %v1371
      %v1373 = vlaneseq
      %v1374 = vshrl.u32 %v1373, 7
      %v1375 = vsub.s32 %v1372, %v1374
      %v1376 = vrot.slane %v1362, %v1375
      %v1377 = vcombine.high %v1353, 0.0
      %v1378 = vcombine.high %v1360, 0.0
      %v1379 = vcombine.high %v1369, 0.0
      %v1380 = vcombine.high %v1376, 0.0
      %v1381 = vcombine.low %v1289, %v1299
      %v1382 = vcombine.high %v1289, %v1299
      %v1384 = vunpack.c.l.s4 1983009808
      %v1385 = vunpack.c.0.s8 %v1384
      %v1386 = vlaneseq
      %v1387 = vshrl.u32 %v1386, 7
      %v1388 = vsub.s32 %v1385, %v1387
      %v1389 = vrot.slane %v1381, %v1388
      %v1391 = vunpack.c.l.s4 1983009808
      %v1392 = vunpack.c.0.s8 %v1391
      %v1393 = vlaneseq
      %v1394 = vshrl.u32 %v1393, 7
      %v1395 = vsub.s32 %v1392, %v1394
      %v1396 = vrot.slane %v1382, %v1395
      %v1397 = vcombine.low %v1294, %v1304
      %v1398 = vcombine.high %v1294, %v1304
      %v1400 = vunpack.c.l.s4 1983009808
      %v1401 = vunpack.c.0.s8 %v1400
      %v1402 = vlaneseq
      %v1403 = vshrl.u32 %v1402, 7
      %v1404 = vsub.s32 %v1401, %v1403
      %v1405 = vrot.slane %v1397, %v1404
      %v1407 = vunpack.c.l.s4 1983009808
      %v1408 = vunpack.c.0.s8 %v1407
      %v1409 = vlaneseq
      %v1410 = vshrl.u32 %v1409, 7
      %v1411 = vsub.s32 %v1408, %v1410
      %v1412 = vrot.slane %v1398, %v1411
      %v1413 = vcombine.low %v1389, %v1405
      %v1414 = vcombine.high %v1389, %v1405
      %v1416 = vunpack.c.l.s4 1934713408
      %v1417 = vunpack.c.0.s8 %v1416
      %v1418 = vlaneseq
      %v1419 = vshrl.u32 %v1418, 7
      %v1420 = vsub.s32 %v1417, %v1419
      %v1421 = vrot.slane %v1413, %v1420
      %v1423 = vunpack.c.l.s4 1934713408
      %v1424 = vunpack.c.0.s8 %v1423
      %v1425 = vlaneseq
      %v1426 = vshrl.u32 %v1425, 7
      %v1427 = vsub.s32 %v1424, %v1426
      %v1428 = vrot.slane %v1414, %v1427
      %v1429 = vcombine.low %v1396, %v1412
      %v1430 = vcombine.high %v1396, %v1412
      %v1432 = vunpack.c.l.s4 1934713408
      %v1433 = vunpack.c.0.s8 %v1432
      %v1434 = vlaneseq
      %v1435 = vshrl.u32 %v1434, 7
      %v1436 = vsub.s32 %v1433, %v1435
      %v1437 = vrot.slane %v1429, %v1436
      %v1439 = vunpack.c.l.s4 1934713408
      %v1440 = vunpack.c.0.s8 %v1439
      %v1441 = vlaneseq
      %v1442 = vshrl.u32 %v1441, 7
      %v1443 = vsub.s32 %v1440, %v1442
      %v1444 = vrot.slane %v1430, %v1443
      %v1445 = vcombine.high %v1421, 0.0
      %v1446 = vcombine.high %v1428, 0.0
      %v1447 = vcombine.high %v1437, 0.0
      %v1448 = vcombine.high %v1444, 0.0
      %1450 = vrot.lane.b32.xlu0 %v1377, 16
      %v1451 = vpop.permute.xlu0 %1450
      %1454 = vrot.lane.b32.xlu0 %v1360, 32
      %v1455 = vpop.permute.xlu0 %1454
      %1458 = vrot.lane.b32.xlu0 %v1378, 48
      %v1459 = vpop.permute.xlu0 %1458
      %1462 = vrot.lane.b32.xlu0 %v1369, 64
      %v1463 = vpop.permute.xlu0 %1462
      %1466 = vrot.lane.b32.xlu0 %v1379, 80
      %v1467 = vpop.permute.xlu0 %1466
      %1470 = vrot.lane.b32.xlu0 %v1376, 96
      %v1471 = vpop.permute.xlu0 %1470
      %1474 = vrot.lane.b32.xlu0 %v1380, 112
      %v1475 = vpop.permute.xlu0 %1474
      %1478 = vrot.lane.b32.xlu0 %v1445, 16
      %v1479 = vpop.permute.xlu0 %1478
      %1482 = vrot.lane.b32.xlu0 %v1428, 32
      %v1483 = vpop.permute.xlu0 %1482
      %1486 = vrot.lane.b32.xlu0 %v1446, 48
      %v1487 = vpop.permute.xlu0 %1486
      %1490 = vrot.lane.b32.xlu0 %v1437, 64
      %v1491 = vpop.permute.xlu0 %1490
      %1494 = vrot.lane.b32.xlu0 %v1447, 80
      %v1495 = vpop.permute.xlu0 %1494
      %1498 = vrot.lane.b32.xlu0 %v1444, 96
      %v1499 = vpop.permute.xlu0 %1498
      %1502 = vrot.lane.b32.xlu0 %v1448, 112
      %v1503 = vpop.permute.xlu0 %1502
      %v1505 = vsel %vm445, %v1353, %v1451
      %v1506 = vsel %vm447, %v1505, %v1455
      %v1507 = vsel %vm449, %v1506, %v1459
      %v1508 = vsel %vm451, %v1507, %v1463
      %v1509 = vsel %vm453, %v1508, %v1467
      %v1510 = vsel %vm455, %v1509, %v1471
      %v1511 = vsel %vm457, %v1510, %v1475
      %v1512 = vsel %vm445, %v1421, %v1479
      %v1513 = vsel %vm447, %v1512, %v1483
      %v1514 = vsel %vm449, %v1513, %v1487
      %v1515 = vsel %vm451, %v1514, %v1491
      %v1516 = vsel %vm453, %v1515, %v1495
      %v1517 = vsel %vm455, %v1516, %v1499
      %v1518 = vsel %vm457, %v1517, %v1503
      %v1520 = vsel %vm709, %v1276, 0
      %v1523 = vsel %vm709, %v1277, 0
      %v1526 = vsel %vm709, %v1278, 0
      %v1529 = vsel %vm709, %v1279, 0
      %v1532 = vsel %vm722, %v1511, 0
      %v1535 = vsel %vm722, %v1518, 0
      %1537 = vmatprep.subr.mxu0 0.0
      %1538 = vmatpush1.msra.mxu0 0.0
      %1539 = vmatprep.subr.mxu0 0.0
      %1540 = vmatpush1.msra.mxu0 0.0
      %1541 = vmatprep.subr.mxu0 0.0
      %1542 = vmatpush1.msra.mxu0 0.0
      %1543 = vmatprep.subr.mxu0 0.0
      %1544 = vmatpush1.msra.mxu0 0.0
      %1545 = vmatprep.subr.mxu0 0.0
      %1546 = vmatpush1.msra.mxu0 0.0
      %1547 = vmatprep.subr.mxu0 0.0
      %1548 = vmatpush1.msra.mxu0 0.0
      %1549 = vmatprep.subr.mxu0 0.0
      %1550 = vmatpush1.msra.mxu0 0.0
      %1551 = vmatprep.subr.mxu0 0.0
      %1552 = vmatpush1.msra.mxu0 0.0
      %1553 = vmatprep.subr.mxu0 0.0
      %1554 = vmatpush1.msra.mxu0 0.0
      %1555 = vmatprep.subr.mxu0 0.0
      %1556 = vmatpush1.msra.mxu0 0.0
      %1557 = vmatprep.subr.mxu0 0.0
      %1558 = vmatpush1.msra.mxu0 0.0
      %1559 = vmatprep.subr.mxu0 0.0
      %1560 = vmatpush1.msra.mxu0 0.0
      %1561 = vmatprep.subr.mxu0 0.0
      %1562 = vmatpush1.msra.mxu0 0.0
      %1563 = vmatprep.subr.mxu0 0.0
      %1564 = vmatpush1.msra.mxu0 0.0
      %1565 = vmatprep.subr.mxu0 0.0
      %1566 = vmatpush1.msra.mxu0 0.0
      %1567 = vmatprep.subr.mxu0 %v1535
      %1568 = vmatpush1.msra.mxu0 %v1532
      %1569 = vmatprep.subr.mxu0 0.0
      %1570 = vmatpush2.msra.mxu0 0.0
      %1571 = vmatprep.subr.mxu0 0.0
      %1572 = vmatpush2.msra.mxu0 0.0
      %1573 = vmatprep.subr.mxu0 0.0
      %1574 = vmatpush2.msra.mxu0 0.0
      %1575 = vmatprep.subr.mxu0 0.0
      %1576 = vmatpush2.msra.mxu0 0.0
      %1577 = vmatprep.subr.mxu0 0.0
      %1578 = vmatpush2.msra.mxu0 0.0
      %1579 = vmatprep.subr.mxu0 0.0
      %1580 = vmatpush2.msra.mxu0 0.0
      %1581 = vmatprep.subr.mxu0 0.0
      %1582 = vmatpush2.msra.mxu0 0.0
      %1583 = vmatprep.subr.mxu0 0.0
      %1584 = vmatpush2.msra.mxu0 0.0
      %1585 = vmatprep.subr.mxu0 0.0
      %1586 = vmatpush2.msra.mxu0 0.0
      %1587 = vmatprep.subr.mxu0 0.0
      %1588 = vmatpush2.msra.mxu0 0.0
      %1589 = vmatprep.subr.mxu0 0.0
      %1590 = vmatpush2.msra.mxu0 0.0
      %1591 = vmatprep.subr.mxu0 0.0
      %1592 = vmatpush2.msra.mxu0 0.0
      %1593 = vmatprep.subr.mxu0 0.0
      %1594 = vmatpush2.msra.mxu0 0.0
      %1595 = vmatprep.subr.mxu0 0.0
      %1596 = vmatpush2.msra.mxu0 0.0
      %1597 = vmatprep.subr.mxu0 0.0
      %1598 = vmatpush2.msra.mxu0 0.0
      %1599 = vmatprep.subr.mxu0 0.0
      %1600 = vmatpush2.msra.mxu0 0.0
      %1601 = vmatprep.mubr.f32.mxu0 0.0
      %1602 = vmatmul.mubr.f32.gmra.mxu0 %v1520
      %v1603 = vpop.f32.mrf.mxu0
      %v1604 = vadd.f32 0.0, %v1603
      %v1605 = vpop.f32.mrf.mxu0
      %v1606 = vadd.f32 0.0, %v1605
      %1607 = vmatprep.mubr.f32.mxu0 0.0
      %1608 = vmatmul.mubr.f32.gmra.mxu0 %v1523
      %v1609 = vpop.f32.mrf.mxu0
      %v1610 = vadd.f32 0.0, %v1609
      %v1611 = vpop.f32.mrf.mxu0
      %v1612 = vadd.f32 0.0, %v1611
      %1613 = vmatprep.mubr.f32.mxu0 0.0
      %1614 = vmatmul.mubr.f32.gmra.mxu0 %v1526
      %v1615 = vpop.f32.mrf.mxu0
      %v1616 = vadd.f32 0.0, %v1615
      %v1617 = vpop.f32.mrf.mxu0
      %v1618 = vadd.f32 0.0, %v1617
      %1619 = vmatprep.mubr.f32.mxu0 0.0
      %1620 = vmatmul.mubr.f32.gmra.mxu0 %v1529
      %v1621 = vpop.f32.mrf.mxu0
      %v1622 = vadd.f32 0.0, %v1621
      %v1623 = vpop.f32.mrf.mxu0
      %v1624 = vadd.f32 0.0, %v1623
      %1625 = vdwg.mxu0
      %v1626 = vadd.f32 %v1267, %v1604
      %v1627 = vadd.f32 %v1268, %v1606
      %v1628 = vadd.f32 %v1269, %v1610
      %v1629 = vadd.f32 %v1270, %v1612
      %v1630 = vadd.f32 %v1271, %v1616
      %v1631 = vadd.f32 %v1272, %v1618
      %v1632 = vadd.f32 %v1273, %v1622
      %v1633 = vadd.f32 %v1274, %v1624
      %s1634 = scalar_lea.vmem %s1, 128
      %v1635 = vld [vmem:[%s1634] sm:$0xff]
      %v1636 = vld [vmem:[%s1634 + $0x8] sm:$0xff]
      %v1637 = vld [vmem:[%s1634 + $0x10] sm:$0xff]
      %v1638 = vld [vmem:[%s1634 + $0x18] sm:$0xff]
      %1639 = vrot.lane.b32.xlu0 %v1287, 127
      %v1640 = vpop.permute.xlu0 %1639
      %1641 = vrot.lane.b32.xlu0 %v1289, 127
      %v1642 = vpop.permute.xlu0 %1641
      %1643 = vrot.lane.b32.xlu0 %v1292, 127
      %v1644 = vpop.permute.xlu0 %1643
      %1645 = vrot.lane.b32.xlu0 %v1294, 127
      %v1646 = vpop.permute.xlu0 %1645
      %1647 = vrot.lane.b32.xlu0 %v1297, 127
      %v1648 = vpop.permute.xlu0 %1647
      %1649 = vrot.lane.b32.xlu0 %v1299, 127
      %v1650 = vpop.permute.xlu0 %1649
      %1651 = vrot.lane.b32.xlu0 %v1302, 127
      %v1652 = vpop.permute.xlu0 %1651
      %1653 = vrot.lane.b32.xlu0 %v1304, 127
      %v1654 = vpop.permute.xlu0 %1653
      %v1663 = vcombine.low %v1640, %v1648
      %v1664 = vcombine.high %v1640, %v1648
      %v1666 = vunpack.c.l.s4 1983009808
      %v1667 = vunpack.c.0.s8 %v1666
      %v1668 = vlaneseq
      %v1669 = vshrl.u32 %v1668, 7
      %v1670 = vsub.s32 %v1667, %v1669
      %v1671 = vrot.slane %v1663, %v1670
      %v1673 = vunpack.c.l.s4 1983009808
      %v1674 = vunpack.c.0.s8 %v1673
      %v1675 = vlaneseq
      %v1676 = vshrl.u32 %v1675, 7
      %v1677 = vsub.s32 %v1674, %v1676
      %v1678 = vrot.slane %v1664, %v1677
      %v1679 = vcombine.low %v1644, %v1652
      %v1680 = vcombine.high %v1644, %v1652
      %v1682 = vunpack.c.l.s4 1983009808
      %v1683 = vunpack.c.0.s8 %v1682
      %v1684 = vlaneseq
      %v1685 = vshrl.u32 %v1684, 7
      %v1686 = vsub.s32 %v1683, %v1685
      %v1687 = vrot.slane %v1679, %v1686
      %v1689 = vunpack.c.l.s4 1983009808
      %v1690 = vunpack.c.0.s8 %v1689
      %v1691 = vlaneseq
      %v1692 = vshrl.u32 %v1691, 7
      %v1693 = vsub.s32 %v1690, %v1692
      %v1694 = vrot.slane %v1680, %v1693
      %v1695 = vcombine.low %v1671, %v1687
      %v1696 = vcombine.high %v1671, %v1687
      %v1698 = vunpack.c.l.s4 1934713408
      %v1699 = vunpack.c.0.s8 %v1698
      %v1700 = vlaneseq
      %v1701 = vshrl.u32 %v1700, 7
      %v1702 = vsub.s32 %v1699, %v1701
      %v1703 = vrot.slane %v1695, %v1702
      %v1705 = vunpack.c.l.s4 1934713408
      %v1706 = vunpack.c.0.s8 %v1705
      %v1707 = vlaneseq
      %v1708 = vshrl.u32 %v1707, 7
      %v1709 = vsub.s32 %v1706, %v1708
      %v1710 = vrot.slane %v1696, %v1709
      %v1711 = vcombine.low %v1678, %v1694
      %v1712 = vcombine.high %v1678, %v1694
      %v1714 = vunpack.c.l.s4 1934713408
      %v1715 = vunpack.c.0.s8 %v1714
      %v1716 = vlaneseq
      %v1717 = vshrl.u32 %v1716, 7
      %v1718 = vsub.s32 %v1715, %v1717
      %v1719 = vrot.slane %v1711, %v1718
      %v1721 = vunpack.c.l.s4 1934713408
      %v1722 = vunpack.c.0.s8 %v1721
      %v1723 = vlaneseq
      %v1724 = vshrl.u32 %v1723, 7
      %v1725 = vsub.s32 %v1722, %v1724
      %v1726 = vrot.slane %v1712, %v1725
      %v1727 = vcombine.high %v1703, 0.0
      %v1728 = vcombine.high %v1710, 0.0
      %v1729 = vcombine.high %v1719, 0.0
      %v1730 = vcombine.high %v1726, 0.0
      %v1731 = vcombine.low %v1642, %v1650
      %v1732 = vcombine.high %v1642, %v1650
      %v1734 = vunpack.c.l.s4 1983009808
      %v1735 = vunpack.c.0.s8 %v1734
      %v1736 = vlaneseq
      %v1737 = vshrl.u32 %v1736, 7
      %v1738 = vsub.s32 %v1735, %v1737
      %v1739 = vrot.slane %v1731, %v1738
      %v1741 = vunpack.c.l.s4 1983009808
      %v1742 = vunpack.c.0.s8 %v1741
      %v1743 = vlaneseq
      %v1744 = vshrl.u32 %v1743, 7
      %v1745 = vsub.s32 %v1742, %v1744
      %v1746 = vrot.slane %v1732, %v1745
      %v1747 = vcombine.low %v1646, %v1654
      %v1748 = vcombine.high %v1646, %v1654
      %v1750 = vunpack.c.l.s4 1983009808
      %v1751 = vunpack.c.0.s8 %v1750
      %v1752 = vlaneseq
      %v1753 = vshrl.u32 %v1752, 7
      %v1754 = vsub.s32 %v1751, %v1753
      %v1755 = vrot.slane %v1747, %v1754
      %v1757 = vunpack.c.l.s4 1983009808
      %v1758 = vunpack.c.0.s8 %v1757
      %v1759 = vlaneseq
      %v1760 = vshrl.u32 %v1759, 7
      %v1761 = vsub.s32 %v1758, %v1760
      %v1762 = vrot.slane %v1748, %v1761
      %v1763 = vcombine.low %v1739, %v1755
      %v1764 = vcombine.high %v1739, %v1755
      %v1766 = vunpack.c.l.s4 1934713408
      %v1767 = vunpack.c.0.s8 %v1766
      %v1768 = vlaneseq
      %v1769 = vshrl.u32 %v1768, 7
      %v1770 = vsub.s32 %v1767, %v1769
      %v1771 = vrot.slane %v1763, %v1770
      %v1773 = vunpack.c.l.s4 1934713408
      %v1774 = vunpack.c.0.s8 %v1773
      %v1775 = vlaneseq
      %v1776 = vshrl.u32 %v1775, 7
      %v1777 = vsub.s32 %v1774, %v1776
      %v1778 = vrot.slane %v1764, %v1777
      %v1779 = vcombine.low %v1746, %v1762
      %v1780 = vcombine.high %v1746, %v1762
      %v1782 = vunpack.c.l.s4 1934713408
      %v1783 = vunpack.c.0.s8 %v1782
      %v1784 = vlaneseq
      %v1785 = vshrl.u32 %v1784, 7
      %v1786 = vsub.s32 %v1783, %v1785
      %v1787 = vrot.slane %v1779, %v1786
      %v1789 = vunpack.c.l.s4 1934713408
      %v1790 = vunpack.c.0.s8 %v1789
      %v1791 = vlaneseq
      %v1792 = vshrl.u32 %v1791, 7
      %v1793 = vsub.s32 %v1790, %v1792
      %v1794 = vrot.slane %v1780, %v1793
      %v1795 = vcombine.high %v1771, 0.0
      %v1796 = vcombine.high %v1778, 0.0
      %v1797 = vcombine.high %v1787, 0.0
      %v1798 = vcombine.high %v1794, 0.0
      %1800 = vrot.lane.b32.xlu0 %v1727, 16
      %v1801 = vpop.permute.xlu0 %1800
      %1804 = vrot.lane.b32.xlu0 %v1710, 32
      %v1805 = vpop.permute.xlu0 %1804
      %1808 = vrot.lane.b32.xlu0 %v1728, 48
      %v1809 = vpop.permute.xlu0 %1808
      %1812 = vrot.lane.b32.xlu0 %v1719, 64
      %v1813 = vpop.permute.xlu0 %1812
      %1816 = vrot.lane.b32.xlu0 %v1729, 80
      %v1817 = vpop.permute.xlu0 %1816
      %1820 = vrot.lane.b32.xlu0 %v1726, 96
      %v1821 = vpop.permute.xlu0 %1820
      %1824 = vrot.lane.b32.xlu0 %v1730, 112
      %v1825 = vpop.permute.xlu0 %1824
      %1828 = vrot.lane.b32.xlu0 %v1795, 16
      %v1829 = vpop.permute.xlu0 %1828
      %1832 = vrot.lane.b32.xlu0 %v1778, 32
      %v1833 = vpop.permute.xlu0 %1832
      %1836 = vrot.lane.b32.xlu0 %v1796, 48
      %v1837 = vpop.permute.xlu0 %1836
      %1840 = vrot.lane.b32.xlu0 %v1787, 64
      %v1841 = vpop.permute.xlu0 %1840
      %1844 = vrot.lane.b32.xlu0 %v1797, 80
      %v1845 = vpop.permute.xlu0 %1844
      %1848 = vrot.lane.b32.xlu0 %v1794, 96
      %v1849 = vpop.permute.xlu0 %1848
      %1852 = vrot.lane.b32.xlu0 %v1798, 112
      %v1853 = vpop.permute.xlu0 %1852
      %v1855 = vsel %vm445, %v1703, %v1801
      %v1856 = vsel %vm447, %v1855, %v1805
      %v1857 = vsel %vm449, %v1856, %v1809
      %v1858 = vsel %vm451, %v1857, %v1813
      %v1859 = vsel %vm453, %v1858, %v1817
      %v1860 = vsel %vm455, %v1859, %v1821
      %v1861 = vsel %vm457, %v1860, %v1825
      %v1862 = vsel %vm445, %v1771, %v1829
      %v1863 = vsel %vm447, %v1862, %v1833
      %v1864 = vsel %vm449, %v1863, %v1837
      %v1865 = vsel %vm451, %v1864, %v1841
      %v1866 = vsel %vm453, %v1865, %v1845
      %v1867 = vsel %vm455, %v1866, %v1849
      %v1868 = vsel %vm457, %v1867, %v1853
      %v1870 = vsel %vm709, %v1635, 0
      %v1873 = vsel %vm709, %v1636, 0
      %v1876 = vsel %vm709, %v1637, 0
      %v1879 = vsel %vm709, %v1638, 0
      %v1882 = vsel %vm722, %v1861, 0
      %v1885 = vsel %vm722, %v1868, 0
      %1887 = vmatprep.subr.mxu0 0.0
      %1888 = vmatpush1.msra.mxu0 0.0
      %1889 = vmatprep.subr.mxu0 0.0
      %1890 = vmatpush1.msra.mxu0 0.0
      %1891 = vmatprep.subr.mxu0 0.0
      %1892 = vmatpush1.msra.mxu0 0.0
      %1893 = vmatprep.subr.mxu0 0.0
      %1894 = vmatpush1.msra.mxu0 0.0
      %1895 = vmatprep.subr.mxu0 0.0
      %1896 = vmatpush1.msra.mxu0 0.0
      %1897 = vmatprep.subr.mxu0 0.0
      %1898 = vmatpush1.msra.mxu0 0.0
      %1899 = vmatprep.subr.mxu0 0.0
      %1900 = vmatpush1.msra.mxu0 0.0
      %1901 = vmatprep.subr.mxu0 0.0
      %1902 = vmatpush1.msra.mxu0 0.0
      %1903 = vmatprep.subr.mxu0 0.0
      %1904 = vmatpush1.msra.mxu0 0.0
      %1905 = vmatprep.subr.mxu0 0.0
      %1906 = vmatpush1.msra.mxu0 0.0
      %1907 = vmatprep.subr.mxu0 0.0
      %1908 = vmatpush1.msra.mxu0 0.0
      %1909 = vmatprep.subr.mxu0 0.0
      %1910 = vmatpush1.msra.mxu0 0.0
      %1911 = vmatprep.subr.mxu0 0.0
      %1912 = vmatpush1.msra.mxu0 0.0
      %1913 = vmatprep.subr.mxu0 0.0
      %1914 = vmatpush1.msra.mxu0 0.0
      %1915 = vmatprep.subr.mxu0 0.0
      %1916 = vmatpush1.msra.mxu0 0.0
      %1917 = vmatprep.subr.mxu0 %v1885
      %1918 = vmatpush1.msra.mxu0 %v1882
      %1919 = vmatprep.subr.mxu0 0.0
      %1920 = vmatpush2.msra.mxu0 0.0
      %1921 = vmatprep.subr.mxu0 0.0
      %1922 = vmatpush2.msra.mxu0 0.0
      %1923 = vmatprep.subr.mxu0 0.0
      %1924 = vmatpush2.msra.mxu0 0.0
      %1925 = vmatprep.subr.mxu0 0.0
      %1926 = vmatpush2.msra.mxu0 0.0
      %1927 = vmatprep.subr.mxu0 0.0
      %1928 = vmatpush2.msra.mxu0 0.0
      %1929 = vmatprep.subr.mxu0 0.0
      %1930 = vmatpush2.msra.mxu0 0.0
      %1931 = vmatprep.subr.mxu0 0.0
      %1932 = vmatpush2.msra.mxu0 0.0
      %1933 = vmatprep.subr.mxu0 0.0
      %1934 = vmatpush2.msra.mxu0 0.0
      %1935 = vmatprep.subr.mxu0 0.0
      %1936 = vmatpush2.msra.mxu0 0.0
      %1937 = vmatprep.subr.mxu0 0.0
      %1938 = vmatpush2.msra.mxu0 0.0
      %1939 = vmatprep.subr.mxu0 0.0
      %1940 = vmatpush2.msra.mxu0 0.0
      %1941 = vmatprep.subr.mxu0 0.0
      %1942 = vmatpush2.msra.mxu0 0.0
      %1943 = vmatprep.subr.mxu0 0.0
      %1944 = vmatpush2.msra.mxu0 0.0
      %1945 = vmatprep.subr.mxu0 0.0
      %1946 = vmatpush2.msra.mxu0 0.0
      %1947 = vmatprep.subr.mxu0 0.0
      %1948 = vmatpush2.msra.mxu0 0.0
      %1949 = vmatprep.subr.mxu0 0.0
      %1950 = vmatpush2.msra.mxu0 0.0
      %1951 = vmatprep.mubr.f32.mxu0 0.0
      %1952 = vmatmul.mubr.f32.gmra.mxu0 %v1870
      %v1953 = vpop.f32.mrf.mxu0
      %v1954 = vadd.f32 0.0, %v1953
      %v1955 = vpop.f32.mrf.mxu0
      %v1956 = vadd.f32 0.0, %v1955
      %1957 = vmatprep.mubr.f32.mxu0 0.0
      %1958 = vmatmul.mubr.f32.gmra.mxu0 %v1873
      %v1959 = vpop.f32.mrf.mxu0
      %v1960 = vadd.f32 0.0, %v1959
      %v1961 = vpop.f32.mrf.mxu0
      %v1962 = vadd.f32 0.0, %v1961
      %1963 = vmatprep.mubr.f32.mxu0 0.0
      %1964 = vmatmul.mubr.f32.gmra.mxu0 %v1876
      %v1965 = vpop.f32.mrf.mxu0
      %v1966 = vadd.f32 0.0, %v1965
      %v1967 = vpop.f32.mrf.mxu0
      %v1968 = vadd.f32 0.0, %v1967
      %1969 = vmatprep.mubr.f32.mxu0 0.0
      %1970 = vmatmul.mubr.f32.gmra.mxu0 %v1879
      %v1971 = vpop.f32.mrf.mxu0
      %v1972 = vadd.f32 0.0, %v1971
      %v1973 = vpop.f32.mrf.mxu0
      %v1974 = vadd.f32 0.0, %v1973
      %1975 = vdwg.mxu0
      %v1976 = vadd.f32 %v1626, %v1954
      %v1977 = vadd.f32 %v1627, %v1956
      %v1978 = vadd.f32 %v1628, %v1960
      %v1979 = vadd.f32 %v1629, %v1962
      %v1980 = vadd.f32 %v1630, %v1966
      %v1981 = vadd.f32 %v1631, %v1968
      %v1982 = vadd.f32 %v1632, %v1972
      %v1983 = vadd.f32 %v1633, %v1974
      %s1984 = scalar_lea.vmem %s1, 160
      %v1985 = vld [vmem:[%s1984] sm:$0xff]
      %v1986 = vld [vmem:[%s1984 + $0x8] sm:$0xff]
      %v1987 = vld [vmem:[%s1984 + $0x10] sm:$0xff]
      %v1988 = vld [vmem:[%s1984 + $0x18] sm:$0xff]
      %1989 = vrot.lane.b32.xlu0 %v1287, 126
      %v1990 = vpop.permute.xlu0 %1989
      %1991 = vrot.lane.b32.xlu0 %v1289, 126
      %v1992 = vpop.permute.xlu0 %1991
      %1993 = vrot.lane.b32.xlu0 %v1292, 126
      %v1994 = vpop.permute.xlu0 %1993
      %1995 = vrot.lane.b32.xlu0 %v1294, 126
      %v1996 = vpop.permute.xlu0 %1995
      %1997 = vrot.lane.b32.xlu0 %v1297, 126
      %v1998 = vpop.permute.xlu0 %1997
      %1999 = vrot.lane.b32.xlu0 %v1299, 126
      %v2000 = vpop.permute.xlu0 %1999
      %2001 = vrot.lane.b32.xlu0 %v1302, 126
      %v2002 = vpop.permute.xlu0 %2001
      %2003 = vrot.lane.b32.xlu0 %v1304, 126
      %v2004 = vpop.permute.xlu0 %2003
      %v2013 = vcombine.low %v1990, %v1998
      %v2014 = vcombine.high %v1990, %v1998
      %v2016 = vunpack.c.l.s4 1983009808
      %v2017 = vunpack.c.0.s8 %v2016
      %v2018 = vlaneseq
      %v2019 = vshrl.u32 %v2018, 7
      %v2020 = vsub.s32 %v2017, %v2019
      %v2021 = vrot.slane %v2013, %v2020
      %v2023 = vunpack.c.l.s4 1983009808
      %v2024 = vunpack.c.0.s8 %v2023
      %v2025 = vlaneseq
      %v2026 = vshrl.u32 %v2025, 7
      %v2027 = vsub.s32 %v2024, %v2026
      %v2028 = vrot.slane %v2014, %v2027
      %v2029 = vcombine.low %v1994, %v2002
      %v2030 = vcombine.high %v1994, %v2002
      %v2032 = vunpack.c.l.s4 1983009808
      %v2033 = vunpack.c.0.s8 %v2032
      %v2034 = vlaneseq
      %v2035 = vshrl.u32 %v2034, 7
      %v2036 = vsub.s32 %v2033, %v2035
      %v2037 = vrot.slane %v2029, %v2036
      %v2039 = vunpack.c.l.s4 1983009808
      %v2040 = vunpack.c.0.s8 %v2039
      %v2041 = vlaneseq
      %v2042 = vshrl.u32 %v2041, 7
      %v2043 = vsub.s32 %v2040, %v2042
      %v2044 = vrot.slane %v2030, %v2043
      %v2045 = vcombine.low %v2021, %v2037
      %v2046 = vcombine.high %v2021, %v2037
      %v2048 = vunpack.c.l.s4 1934713408
      %v2049 = vunpack.c.0.s8 %v2048
      %v2050 = vlaneseq
      %v2051 = vshrl.u32 %v2050, 7
      %v2052 = vsub.s32 %v2049, %v2051
      %v2053 = vrot.slane %v2045, %v2052
      %v2055 = vunpack.c.l.s4 1934713408
      %v2056 = vunpack.c.0.s8 %v2055
      %v2057 = vlaneseq
      %v2058 = vshrl.u32 %v2057, 7
      %v2059 = vsub.s32 %v2056, %v2058
      %v2060 = vrot.slane %v2046, %v2059
      %v2061 = vcombine.low %v2028, %v2044
      %v2062 = vcombine.high %v2028, %v2044
      %v2064 = vunpack.c.l.s4 1934713408
      %v2065 = vunpack.c.0.s8 %v2064
      %v2066 = vlaneseq
      %v2067 = vshrl.u32 %v2066, 7
      %v2068 = vsub.s32 %v2065, %v2067
      %v2069 = vrot.slane %v2061, %v2068
      %v2071 = vunpack.c.l.s4 1934713408
      %v2072 = vunpack.c.0.s8 %v2071
      %v2073 = vlaneseq
      %v2074 = vshrl.u32 %v2073, 7
      %v2075 = vsub.s32 %v2072, %v2074
      %v2076 = vrot.slane %v2062, %v2075
      %v2077 = vcombine.high %v2053, 0.0
      %v2078 = vcombine.high %v2060, 0.0
      %v2079 = vcombine.high %v2069, 0.0
      %v2080 = vcombine.high %v2076, 0.0
      %v2081 = vcombine.low %v1992, %v2000
      %v2082 = vcombine.high %v1992, %v2000
      %v2084 = vunpack.c.l.s4 1983009808
      %v2085 = vunpack.c.0.s8 %v2084
      %v2086 = vlaneseq
      %v2087 = vshrl.u32 %v2086, 7
      %v2088 = vsub.s32 %v2085, %v2087
      %v2089 = vrot.slane %v2081, %v2088
      %v2091 = vunpack.c.l.s4 1983009808
      %v2092 = vunpack.c.0.s8 %v2091
      %v2093 = vlaneseq
      %v2094 = vshrl.u32 %v2093, 7
      %v2095 = vsub.s32 %v2092, %v2094
      %v2096 = vrot.slane %v2082, %v2095
      %v2097 = vcombine.low %v1996, %v2004
      %v2098 = vcombine.high %v1996, %v2004
      %v2100 = vunpack.c.l.s4 1983009808
      %v2101 = vunpack.c.0.s8 %v2100
      %v2102 = vlaneseq
      %v2103 = vshrl.u32 %v2102, 7
      %v2104 = vsub.s32 %v2101, %v2103
      %v2105 = vrot.slane %v2097, %v2104
      %v2107 = vunpack.c.l.s4 1983009808
      %v2108 = vunpack.c.0.s8 %v2107
      %v2109 = vlaneseq
      %v2110 = vshrl.u32 %v2109, 7
      %v2111 = vsub.s32 %v2108, %v2110
      %v2112 = vrot.slane %v2098, %v2111
      %v2113 = vcombine.low %v2089, %v2105
      %v2114 = vcombine.high %v2089, %v2105
      %v2116 = vunpack.c.l.s4 1934713408
      %v2117 = vunpack.c.0.s8 %v2116
      %v2118 = vlaneseq
      %v2119 = vshrl.u32 %v2118, 7
      %v2120 = vsub.s32 %v2117, %v2119
      %v2121 = vrot.slane %v2113, %v2120
      %v2123 = vunpack.c.l.s4 1934713408
      %v2124 = vunpack.c.0.s8 %v2123
      %v2125 = vlaneseq
      %v2126 = vshrl.u32 %v2125, 7
      %v2127 = vsub.s32 %v2124, %v2126
      %v2128 = vrot.slane %v2114, %v2127
      %v2129 = vcombine.low %v2096, %v2112
      %v2130 = vcombine.high %v2096, %v2112
      %v2132 = vunpack.c.l.s4 1934713408
      %v2133 = vunpack.c.0.s8 %v2132
      %v2134 = vlaneseq
      %v2135 = vshrl.u32 %v2134, 7
      %v2136 = vsub.s32 %v2133, %v2135
      %v2137 = vrot.slane %v2129, %v2136
      %v2139 = vunpack.c.l.s4 1934713408
      %v2140 = vunpack.c.0.s8 %v2139
      %v2141 = vlaneseq
      %v2142 = vshrl.u32 %v2141, 7
      %v2143 = vsub.s32 %v2140, %v2142
      %v2144 = vrot.slane %v2130, %v2143
      %v2145 = vcombine.high %v2121, 0.0
      %v2146 = vcombine.high %v2128, 0.0
      %v2147 = vcombine.high %v2137, 0.0
      %v2148 = vcombine.high %v2144, 0.0
      %2150 = vrot.lane.b32.xlu0 %v2077, 16
      %v2151 = vpop.permute.xlu0 %2150
      %2154 = vrot.lane.b32.xlu0 %v2060, 32
      %v2155 = vpop.permute.xlu0 %2154
      %2158 = vrot.lane.b32.xlu0 %v2078, 48
      %v2159 = vpop.permute.xlu0 %2158
      %2162 = vrot.lane.b32.xlu0 %v2069, 64
      %v2163 = vpop.permute.xlu0 %2162
      %2166 = vrot.lane.b32.xlu0 %v2079, 80
      %v2167 = vpop.permute.xlu0 %2166
      %2170 = vrot.lane.b32.xlu0 %v2076, 96
      %v2171 = vpop.permute.xlu0 %2170
      %2174 = vrot.lane.b32.xlu0 %v2080, 112
      %v2175 = vpop.permute.xlu0 %2174
      %2178 = vrot.lane.b32.xlu0 %v2145, 16
      %v2179 = vpop.permute.xlu0 %2178
      %2182 = vrot.lane.b32.xlu0 %v2128, 32
      %v2183 = vpop.permute.xlu0 %2182
      %2186 = vrot.lane.b32.xlu0 %v2146, 48
      %v2187 = vpop.permute.xlu0 %2186
      %2190 = vrot.lane.b32.xlu0 %v2137, 64
      %v2191 = vpop.permute.xlu0 %2190
      %2194 = vrot.lane.b32.xlu0 %v2147, 80
      %v2195 = vpop.permute.xlu0 %2194
      %2198 = vrot.lane.b32.xlu0 %v2144, 96
      %v2199 = vpop.permute.xlu0 %2198
      %2202 = vrot.lane.b32.xlu0 %v2148, 112
      %v2203 = vpop.permute.xlu0 %2202
      %v2205 = vsel %vm445, %v2053, %v2151
      %v2206 = vsel %vm447, %v2205, %v2155
      %v2207 = vsel %vm449, %v2206, %v2159
      %v2208 = vsel %vm451, %v2207, %v2163
      %v2209 = vsel %vm453, %v2208, %v2167
      %v2210 = vsel %vm455, %v2209, %v2171
      %v2211 = vsel %vm457, %v2210, %v2175
      %v2212 = vsel %vm445, %v2121, %v2179
      %v2213 = vsel %vm447, %v2212, %v2183
      %v2214 = vsel %vm449, %v2213, %v2187
      %v2215 = vsel %vm451, %v2214, %v2191
      %v2216 = vsel %vm453, %v2215, %v2195
      %v2217 = vsel %vm455, %v2216, %v2199
      %v2218 = vsel %vm457, %v2217, %v2203
      %v2220 = vsel %vm709, %v1985, 0
      %v2223 = vsel %vm709, %v1986, 0
      %v2226 = vsel %vm709, %v1987, 0
      %v2229 = vsel %vm709, %v1988, 0
      %v2232 = vsel %vm722, %v2211, 0
      %v2235 = vsel %vm722, %v2218, 0
      %2237 = vmatprep.subr.mxu0 0.0
      %2238 = vmatpush1.msra.mxu0 0.0
      %2239 = vmatprep.subr.mxu0 0.0
      %2240 = vmatpush1.msra.mxu0 0.0
      %2241 = vmatprep.subr.mxu0 0.0
      %2242 = vmatpush1.msra.mxu0 0.0
      %2243 = vmatprep.subr.mxu0 0.0
      %2244 = vmatpush1.msra.mxu0 0.0
      %2245 = vmatprep.subr.mxu0 0.0
      %2246 = vmatpush1.msra.mxu0 0.0
      %2247 = vmatprep.subr.mxu0 0.0
      %2248 = vmatpush1.msra.mxu0 0.0
      %2249 = vmatprep.subr.mxu0 0.0
      %2250 = vmatpush1.msra.mxu0 0.0
      %2251 = vmatprep.subr.mxu0 0.0
      %2252 = vmatpush1.msra.mxu0 0.0
      %2253 = vmatprep.subr.mxu0 0.0
      %2254 = vmatpush1.msra.mxu0 0.0
      %2255 = vmatprep.subr.mxu0 0.0
      %2256 = vmatpush1.msra.mxu0 0.0
      %2257 = vmatprep.subr.mxu0 0.0
      %2258 = vmatpush1.msra.mxu0 0.0
      %2259 = vmatprep.subr.mxu0 0.0
      %2260 = vmatpush1.msra.mxu0 0.0
      %2261 = vmatprep.subr.mxu0 0.0
      %2262 = vmatpush1.msra.mxu0 0.0
      %2263 = vmatprep.subr.mxu0 0.0
      %2264 = vmatpush1.msra.mxu0 0.0
      %2265 = vmatprep.subr.mxu0 0.0
      %2266 = vmatpush1.msra.mxu0 0.0
      %2267 = vmatprep.subr.mxu0 %v2235
      %2268 = vmatpush1.msra.mxu0 %v2232
      %2269 = vmatprep.subr.mxu0 0.0
      %2270 = vmatpush2.msra.mxu0 0.0
      %2271 = vmatprep.subr.mxu0 0.0
      %2272 = vmatpush2.msra.mxu0 0.0
      %2273 = vmatprep.subr.mxu0 0.0
      %2274 = vmatpush2.msra.mxu0 0.0
      %2275 = vmatprep.subr.mxu0 0.0
      %2276 = vmatpush2.msra.mxu0 0.0
      %2277 = vmatprep.subr.mxu0 0.0
      %2278 = vmatpush2.msra.mxu0 0.0
      %2279 = vmatprep.subr.mxu0 0.0
      %2280 = vmatpush2.msra.mxu0 0.0
      %2281 = vmatprep.subr.mxu0 0.0
      %2282 = vmatpush2.msra.mxu0 0.0
      %2283 = vmatprep.subr.mxu0 0.0
      %2284 = vmatpush2.msra.mxu0 0.0
      %2285 = vmatprep.subr.mxu0 0.0
      %2286 = vmatpush2.msra.mxu0 0.0
      %2287 = vmatprep.subr.mxu0 0.0
      %2288 = vmatpush2.msra.mxu0 0.0
      %2289 = vmatprep.subr.mxu0 0.0
      %2290 = vmatpush2.msra.mxu0 0.0
      %2291 = vmatprep.subr.mxu0 0.0
      %2292 = vmatpush2.msra.mxu0 0.0
      %2293 = vmatprep.subr.mxu0 0.0
      %2294 = vmatpush2.msra.mxu0 0.0
      %2295 = vmatprep.subr.mxu0 0.0
      %2296 = vmatpush2.msra.mxu0 0.0
      %2297 = vmatprep.subr.mxu0 0.0
      %2298 = vmatpush2.msra.mxu0 0.0
      %2299 = vmatprep.subr.mxu0 0.0
      %2300 = vmatpush2.msra.mxu0 0.0
      %2301 = vmatprep.mubr.f32.mxu0 0.0
      %2302 = vmatmul.mubr.f32.gmra.mxu0 %v2220
      %v2303 = vpop.f32.mrf.mxu0
      %v2304 = vadd.f32 0.0, %v2303
      %v2305 = vpop.f32.mrf.mxu0
      %v2306 = vadd.f32 0.0, %v2305
      %2307 = vmatprep.mubr.f32.mxu0 0.0
      %2308 = vmatmul.mubr.f32.gmra.mxu0 %v2223
      %v2309 = vpop.f32.mrf.mxu0
      %v2310 = vadd.f32 0.0, %v2309
      %v2311 = vpop.f32.mrf.mxu0
      %v2312 = vadd.f32 0.0, %v2311
      %2313 = vmatprep.mubr.f32.mxu0 0.0
      %2314 = vmatmul.mubr.f32.gmra.mxu0 %v2226
      %v2315 = vpop.f32.mrf.mxu0
      %v2316 = vadd.f32 0.0, %v2315
      %v2317 = vpop.f32.mrf.mxu0
      %v2318 = vadd.f32 0.0, %v2317
      %2319 = vmatprep.mubr.f32.mxu0 0.0
      %2320 = vmatmul.mubr.f32.gmra.mxu0 %v2229
      %v2321 = vpop.f32.mrf.mxu0
      %v2322 = vadd.f32 0.0, %v2321
      %v2323 = vpop.f32.mrf.mxu0
      %v2324 = vadd.f32 0.0, %v2323
      %2325 = vdwg.mxu0
      %v2326 = vadd.f32 %v1976, %v2304
      %v2327 = vadd.f32 %v1977, %v2306
      %v2328 = vadd.f32 %v1978, %v2310
      %v2329 = vadd.f32 %v1979, %v2312
      %v2330 = vadd.f32 %v1980, %v2316
      %v2331 = vadd.f32 %v1981, %v2318
      %v2332 = vadd.f32 %v1982, %v2322
      %v2333 = vadd.f32 %v1983, %v2324
      %s2334 = scalar_lea.vmem %s1, 192
      %v2335 = vld [vmem:[%s2334] sm:$0xff]
      %v2336 = vld [vmem:[%s2334 + $0x8] sm:$0xff]
      %v2337 = vld [vmem:[%s2334 + $0x10] sm:$0xff]
      %v2338 = vld [vmem:[%s2334 + $0x18] sm:$0xff]
      %vm2339 = vcmask 1045504
      %v2340 = vrot.slane %v237, 2
      %v2341 = vrot.slane %v238, 2
      %v2342 = vsel %vm2339, %v2340, %v2341
      %v2343 = vrot.slane %v239, 2
      %v2344 = vsel %vm2339, %v2341, %v2343
      %v2345 = vrot.slane %v240, 2
      %v2346 = vrot.slane %v241, 2
      %v2347 = vsel %vm2339, %v2345, %v2346
      %v2348 = vrot.slane %v242, 2
      %v2349 = vsel %vm2339, %v2346, %v2348
      %v2350 = vrot.slane %v243, 2
      %v2351 = vrot.slane %v244, 2
      %v2352 = vsel %vm2339, %v2350, %v2351
      %v2353 = vrot.slane %v245, 2
      %v2354 = vsel %vm2339, %v2351, %v2353
      %v2355 = vrot.slane %v246, 2
      %v2356 = vrot.slane %v247, 2
      %v2357 = vsel %vm2339, %v2355, %v2356
      %v2358 = vrot.slane %v248, 2
      %v2359 = vsel %vm2339, %v2356, %v2358
      %v2368 = vcombine.low %v2342, %v2352
      %v2369 = vcombine.high %v2342, %v2352
      %v2371 = vunpack.c.l.s4 1983009808
      %v2372 = vunpack.c.0.s8 %v2371
      %v2373 = vlaneseq
      %v2374 = vshrl.u32 %v2373, 7
      %v2375 = vsub.s32 %v2372, %v2374
      %v2376 = vrot.slane %v2368, %v2375
      %v2378 = vunpack.c.l.s4 1983009808
      %v2379 = vunpack.c.0.s8 %v2378
      %v2380 = vlaneseq
      %v2381 = vshrl.u32 %v2380, 7
      %v2382 = vsub.s32 %v2379, %v2381
      %v2383 = vrot.slane %v2369, %v2382
      %v2384 = vcombine.low %v2347, %v2357
      %v2385 = vcombine.high %v2347, %v2357
      %v2387 = vunpack.c.l.s4 1983009808
      %v2388 = vunpack.c.0.s8 %v2387
      %v2389 = vlaneseq
      %v2390 = vshrl.u32 %v2389, 7
      %v2391 = vsub.s32 %v2388, %v2390
      %v2392 = vrot.slane %v2384, %v2391
      %v2394 = vunpack.c.l.s4 1983009808
      %v2395 = vunpack.c.0.s8 %v2394
      %v2396 = vlaneseq
      %v2397 = vshrl.u32 %v2396, 7
      %v2398 = vsub.s32 %v2395, %v2397
      %v2399 = vrot.slane %v2385, %v2398
      %v2400 = vcombine.low %v2376, %v2392
      %v2401 = vcombine.high %v2376, %v2392
      %v2403 = vunpack.c.l.s4 1934713408
      %v2404 = vunpack.c.0.s8 %v2403
      %v2405 = vlaneseq
      %v2406 = vshrl.u32 %v2405, 7
      %v2407 = vsub.s32 %v2404, %v2406
      %v2408 = vrot.slane %v2400, %v2407
      %v2410 = vunpack.c.l.s4 1934713408
      %v2411 = vunpack.c.0.s8 %v2410
      %v2412 = vlaneseq
      %v2413 = vshrl.u32 %v2412, 7
      %v2414 = vsub.s32 %v2411, %v2413
      %v2415 = vrot.slane %v2401, %v2414
      %v2416 = vcombine.low %v2383, %v2399
      %v2417 = vcombine.high %v2383, %v2399
      %v2419 = vunpack.c.l.s4 1934713408
      %v2420 = vunpack.c.0.s8 %v2419
      %v2421 = vlaneseq
      %v2422 = vshrl.u32 %v2421, 7
      %v2423 = vsub.s32 %v2420, %v2422
      %v2424 = vrot.slane %v2416, %v2423
      %v2426 = vunpack.c.l.s4 1934713408
      %v2427 = vunpack.c.0.s8 %v2426
      %v2428 = vlaneseq
      %v2429 = vshrl.u32 %v2428, 7
      %v2430 = vsub.s32 %v2427, %v2429
      %v2431 = vrot.slane %v2417, %v2430
      %v2432 = vcombine.high %v2408, 0.0
      %v2433 = vcombine.high %v2415, 0.0
      %v2434 = vcombine.high %v2424, 0.0
      %v2435 = vcombine.high %v2431, 0.0
      %v2436 = vcombine.low %v2344, %v2354
      %v2437 = vcombine.high %v2344, %v2354
      %v2439 = vunpack.c.l.s4 1983009808
      %v2440 = vunpack.c.0.s8 %v2439
      %v2441 = vlaneseq
      %v2442 = vshrl.u32 %v2441, 7
      %v2443 = vsub.s32 %v2440, %v2442
      %v2444 = vrot.slane %v2436, %v2443
      %v2446 = vunpack.c.l.s4 1983009808
      %v2447 = vunpack.c.0.s8 %v2446
      %v2448 = vlaneseq
      %v2449 = vshrl.u32 %v2448, 7
      %v2450 = vsub.s32 %v2447, %v2449
      %v2451 = vrot.slane %v2437, %v2450
      %v2452 = vcombine.low %v2349, %v2359
      %v2453 = vcombine.high %v2349, %v2359
      %v2455 = vunpack.c.l.s4 1983009808
      %v2456 = vunpack.c.0.s8 %v2455
      %v2457 = vlaneseq
      %v2458 = vshrl.u32 %v2457, 7
      %v2459 = vsub.s32 %v2456, %v2458
      %v2460 = vrot.slane %v2452, %v2459
      %v2462 = vunpack.c.l.s4 1983009808
      %v2463 = vunpack.c.0.s8 %v2462
      %v2464 = vlaneseq
      %v2465 = vshrl.u32 %v2464, 7
      %v2466 = vsub.s32 %v2463, %v2465
      %v2467 = vrot.slane %v2453, %v2466
      %v2468 = vcombine.low %v2444, %v2460
      %v2469 = vcombine.high %v2444, %v2460
      %v2471 = vunpack.c.l.s4 1934713408
      %v2472 = vunpack.c.0.s8 %v2471
      %v2473 = vlaneseq
      %v2474 = vshrl.u32 %v2473, 7
      %v2475 = vsub.s32 %v2472, %v2474
      %v2476 = vrot.slane %v2468, %v2475
      %v2478 = vunpack.c.l.s4 1934713408
      %v2479 = vunpack.c.0.s8 %v2478
      %v2480 = vlaneseq
      %v2481 = vshrl.u32 %v2480, 7
      %v2482 = vsub.s32 %v2479, %v2481
      %v2483 = vrot.slane %v2469, %v2482
      %v2484 = vcombine.low %v2451, %v2467
      %v2485 = vcombine.high %v2451, %v2467
      %v2487 = vunpack.c.l.s4 1934713408
      %v2488 = vunpack.c.0.s8 %v2487
      %v2489 = vlaneseq
      %v2490 = vshrl.u32 %v2489, 7
      %v2491 = vsub.s32 %v2488, %v2490
      %v2492 = vrot.slane %v2484, %v2491
      %v2494 = vunpack.c.l.s4 1934713408
      %v2495 = vunpack.c.0.s8 %v2494
      %v2496 = vlaneseq
      %v2497 = vshrl.u32 %v2496, 7
      %v2498 = vsub.s32 %v2495, %v2497
      %v2499 = vrot.slane %v2485, %v2498
      %v2500 = vcombine.high %v2476, 0.0
      %v2501 = vcombine.high %v2483, 0.0
      %v2502 = vcombine.high %v2492, 0.0
      %v2503 = vcombine.high %v2499, 0.0
      %2505 = vrot.lane.b32.xlu0 %v2432, 16
      %v2506 = vpop.permute.xlu0 %2505
      %2509 = vrot.lane.b32.xlu0 %v2415, 32
      %v2510 = vpop.permute.xlu0 %2509
      %2513 = vrot.lane.b32.xlu0 %v2433, 48
      %v2514 = vpop.permute.xlu0 %2513
      %2517 = vrot.lane.b32.xlu0 %v2424, 64
      %v2518 = vpop.permute.xlu0 %2517
      %2521 = vrot.lane.b32.xlu0 %v2434, 80
      %v2522 = vpop.permute.xlu0 %2521
      %2525 = vrot.lane.b32.xlu0 %v2431, 96
      %v2526 = vpop.permute.xlu0 %2525
      %2529 = vrot.lane.b32.xlu0 %v2435, 112
      %v2530 = vpop.permute.xlu0 %2529
      %2533 = vrot.lane.b32.xlu0 %v2500, 16
      %v2534 = vpop.permute.xlu0 %2533
      %2537 = vrot.lane.b32.xlu0 %v2483, 32
      %v2538 = vpop.permute.xlu0 %2537
      %2541 = vrot.lane.b32.xlu0 %v2501, 48
      %v2542 = vpop.permute.xlu0 %2541
      %2545 = vrot.lane.b32.xlu0 %v2492, 64
      %v2546 = vpop.permute.xlu0 %2545
      %2549 = vrot.lane.b32.xlu0 %v2502, 80
      %v2550 = vpop.permute.xlu0 %2549
      %2553 = vrot.lane.b32.xlu0 %v2499, 96
      %v2554 = vpop.permute.xlu0 %2553
      %2557 = vrot.lane.b32.xlu0 %v2503, 112
      %v2558 = vpop.permute.xlu0 %2557
      %v2560 = vsel %vm445, %v2408, %v2506
      %v2561 = vsel %vm447, %v2560, %v2510
      %v2562 = vsel %vm449, %v2561, %v2514
      %v2563 = vsel %vm451, %v2562, %v2518
      %v2564 = vsel %vm453, %v2563, %v2522
      %v2565 = vsel %vm455, %v2564, %v2526
      %v2566 = vsel %vm457, %v2565, %v2530
      %v2567 = vsel %vm445, %v2476, %v2534
      %v2568 = vsel %vm447, %v2567, %v2538
      %v2569 = vsel %vm449, %v2568, %v2542
      %v2570 = vsel %vm451, %v2569, %v2546
      %v2571 = vsel %vm453, %v2570, %v2550
      %v2572 = vsel %vm455, %v2571, %v2554
      %v2573 = vsel %vm457, %v2572, %v2558
      %v2575 = vsel %vm709, %v2335, 0
      %v2578 = vsel %vm709, %v2336, 0
      %v2581 = vsel %vm709, %v2337, 0
      %v2584 = vsel %vm709, %v2338, 0
      %v2587 = vsel %vm722, %v2566, 0
      %v2590 = vsel %vm722, %v2573, 0
      %2592 = vmatprep.subr.mxu0 0.0
      %2593 = vmatpush1.msra.mxu0 0.0
      %2594 = vmatprep.subr.mxu0 0.0
      %2595 = vmatpush1.msra.mxu0 0.0
      %2596 = vmatprep.subr.mxu0 0.0
      %2597 = vmatpush1.msra.mxu0 0.0
      %2598 = vmatprep.subr.mxu0 0.0
      %2599 = vmatpush1.msra.mxu0 0.0
      %2600 = vmatprep.subr.mxu0 0.0
      %2601 = vmatpush1.msra.mxu0 0.0
      %2602 = vmatprep.subr.mxu0 0.0
      %2603 = vmatpush1.msra.mxu0 0.0
      %2604 = vmatprep.subr.mxu0 0.0
      %2605 = vmatpush1.msra.mxu0 0.0
      %2606 = vmatprep.subr.mxu0 0.0
      %2607 = vmatpush1.msra.mxu0 0.0
      %2608 = vmatprep.subr.mxu0 0.0
      %2609 = vmatpush1.msra.mxu0 0.0
      %2610 = vmatprep.subr.mxu0 0.0
      %2611 = vmatpush1.msra.mxu0 0.0
      %2612 = vmatprep.subr.mxu0 0.0
      %2613 = vmatpush1.msra.mxu0 0.0
      %2614 = vmatprep.subr.mxu0 0.0
      %2615 = vmatpush1.msra.mxu0 0.0
      %2616 = vmatprep.subr.mxu0 0.0
      %2617 = vmatpush1.msra.mxu0 0.0
      %2618 = vmatprep.subr.mxu0 0.0
      %2619 = vmatpush1.msra.mxu0 0.0
      %2620 = vmatprep.subr.mxu0 0.0
      %2621 = vmatpush1.msra.mxu0 0.0
      %2622 = vmatprep.subr.mxu0 %v2590
      %2623 = vmatpush1.msra.mxu0 %v2587
      %2624 = vmatprep.subr.mxu0 0.0
      %2625 = vmatpush2.msra.mxu0 0.0
      %2626 = vmatprep.subr.mxu0 0.0
      %2627 = vmatpush2.msra.mxu0 0.0
      %2628 = vmatprep.subr.mxu0 0.0
      %2629 = vmatpush2.msra.mxu0 0.0
      %2630 = vmatprep.subr.mxu0 0.0
      %2631 = vmatpush2.msra.mxu0 0.0
      %2632 = vmatprep.subr.mxu0 0.0
      %2633 = vmatpush2.msra.mxu0 0.0
      %2634 = vmatprep.subr.mxu0 0.0
      %2635 = vmatpush2.msra.mxu0 0.0
      %2636 = vmatprep.subr.mxu0 0.0
      %2637 = vmatpush2.msra.mxu0 0.0
      %2638 = vmatprep.subr.mxu0 0.0
      %2639 = vmatpush2.msra.mxu0 0.0
      %2640 = vmatprep.subr.mxu0 0.0
      %2641 = vmatpush2.msra.mxu0 0.0
      %2642 = vmatprep.subr.mxu0 0.0
      %2643 = vmatpush2.msra.mxu0 0.0
      %2644 = vmatprep.subr.mxu0 0.0
      %2645 = vmatpush2.msra.mxu0 0.0
      %2646 = vmatprep.subr.mxu0 0.0
      %2647 = vmatpush2.msra.mxu0 0.0
      %2648 = vmatprep.subr.mxu0 0.0
      %2649 = vmatpush2.msra.mxu0 0.0
      %2650 = vmatprep.subr.mxu0 0.0
      %2651 = vmatpush2.msra.mxu0 0.0
      %2652 = vmatprep.subr.mxu0 0.0
      %2653 = vmatpush2.msra.mxu0 0.0
      %2654 = vmatprep.subr.mxu0 0.0
      %2655 = vmatpush2.msra.mxu0 0.0
      %2656 = vmatprep.mubr.f32.mxu0 0.0
      %2657 = vmatmul.mubr.f32.gmra.mxu0 %v2575
      %v2658 = vpop.f32.mrf.mxu0
      %v2659 = vadd.f32 0.0, %v2658
      %v2660 = vpop.f32.mrf.mxu0
      %v2661 = vadd.f32 0.0, %v2660
      %2662 = vmatprep.mubr.f32.mxu0 0.0
      %2663 = vmatmul.mubr.f32.gmra.mxu0 %v2578
      %v2664 = vpop.f32.mrf.mxu0
      %v2665 = vadd.f32 0.0, %v2664
      %v2666 = vpop.f32.mrf.mxu0
      %v2667 = vadd.f32 0.0, %v2666
      %2668 = vmatprep.mubr.f32.mxu0 0.0
      %2669 = vmatmul.mubr.f32.gmra.mxu0 %v2581
      %v2670 = vpop.f32.mrf.mxu0
      %v2671 = vadd.f32 0.0, %v2670
      %v2672 = vpop.f32.mrf.mxu0
      %v2673 = vadd.f32 0.0, %v2672
      %2674 = vmatprep.mubr.f32.mxu0 0.0
      %2675 = vmatmul.mubr.f32.gmra.mxu0 %v2584
      %v2676 = vpop.f32.mrf.mxu0
      %v2677 = vadd.f32 0.0, %v2676
      %v2678 = vpop.f32.mrf.mxu0
      %v2679 = vadd.f32 0.0, %v2678
      %2680 = vdwg.mxu0
      %v2681 = vadd.f32 %v2326, %v2659
      %v2682 = vadd.f32 %v2327, %v2661
      %v2683 = vadd.f32 %v2328, %v2665
      %v2684 = vadd.f32 %v2329, %v2667
      %v2685 = vadd.f32 %v2330, %v2671
      %v2686 = vadd.f32 %v2331, %v2673
      %v2687 = vadd.f32 %v2332, %v2677
      %v2688 = vadd.f32 %v2333, %v2679
      %s2689 = scalar_lea.vmem %s1, 224
      %v2690 = vld [vmem:[%s2689] sm:$0xff]
      %v2691 = vld [vmem:[%s2689 + $0x8] sm:$0xff]
      %v2692 = vld [vmem:[%s2689 + $0x10] sm:$0xff]
      %v2693 = vld [vmem:[%s2689 + $0x18] sm:$0xff]
      %2694 = vrot.lane.b32.xlu0 %v2342, 127
      %v2695 = vpop.permute.xlu0 %2694
      %2696 = vrot.lane.b32.xlu0 %v2344, 127
      %v2697 = vpop.permute.xlu0 %2696
      %2698 = vrot.lane.b32.xlu0 %v2347, 127
      %v2699 = vpop.permute.xlu0 %2698
      %2700 = vrot.lane.b32.xlu0 %v2349, 127
      %v2701 = vpop.permute.xlu0 %2700
      %2702 = vrot.lane.b32.xlu0 %v2352, 127
      %v2703 = vpop.permute.xlu0 %2702
      %2704 = vrot.lane.b32.xlu0 %v2354, 127
      %v2705 = vpop.permute.xlu0 %2704
      %2706 = vrot.lane.b32.xlu0 %v2357, 127
      %v2707 = vpop.permute.xlu0 %2706
      %2708 = vrot.lane.b32.xlu0 %v2359, 127
      %v2709 = vpop.permute.xlu0 %2708
      %v2718 = vcombine.low %v2695, %v2703
      %v2719 = vcombine.high %v2695, %v2703
      %v2721 = vunpack.c.l.s4 1983009808
      %v2722 = vunpack.c.0.s8 %v2721
      %v2723 = vlaneseq
      %v2724 = vshrl.u32 %v2723, 7
      %v2725 = vsub.s32 %v2722, %v2724
      %v2726 = vrot.slane %v2718, %v2725
      %v2728 = vunpack.c.l.s4 1983009808
      %v2729 = vunpack.c.0.s8 %v2728
      %v2730 = vlaneseq
      %v2731 = vshrl.u32 %v2730, 7
      %v2732 = vsub.s32 %v2729, %v2731
      %v2733 = vrot.slane %v2719, %v2732
      %v2734 = vcombine.low %v2699, %v2707
      %v2735 = vcombine.high %v2699, %v2707
      %v2737 = vunpack.c.l.s4 1983009808
      %v2738 = vunpack.c.0.s8 %v2737
      %v2739 = vlaneseq
      %v2740 = vshrl.u32 %v2739, 7
      %v2741 = vsub.s32 %v2738, %v2740
      %v2742 = vrot.slane %v2734, %v2741
      %v2744 = vunpack.c.l.s4 1983009808
      %v2745 = vunpack.c.0.s8 %v2744
      %v2746 = vlaneseq
      %v2747 = vshrl.u32 %v2746, 7
      %v2748 = vsub.s32 %v2745, %v2747
      %v2749 = vrot.slane %v2735, %v2748
      %v2750 = vcombine.low %v2726, %v2742
      %v2751 = vcombine.high %v2726, %v2742
      %v2753 = vunpack.c.l.s4 1934713408
      %v2754 = vunpack.c.0.s8 %v2753
      %v2755 = vlaneseq
      %v2756 = vshrl.u32 %v2755, 7
      %v2757 = vsub.s32 %v2754, %v2756
      %v2758 = vrot.slane %v2750, %v2757
      %v2760 = vunpack.c.l.s4 1934713408
      %v2761 = vunpack.c.0.s8 %v2760
      %v2762 = vlaneseq
      %v2763 = vshrl.u32 %v2762, 7
      %v2764 = vsub.s32 %v2761, %v2763
      %v2765 = vrot.slane %v2751, %v2764
      %v2766 = vcombine.low %v2733, %v2749
      %v2767 = vcombine.high %v2733, %v2749
      %v2769 = vunpack.c.l.s4 1934713408
      %v2770 = vunpack.c.0.s8 %v2769
      %v2771 = vlaneseq
      %v2772 = vshrl.u32 %v2771, 7
      %v2773 = vsub.s32 %v2770, %v2772
      %v2774 = vrot.slane %v2766, %v2773
      %v2776 = vunpack.c.l.s4 1934713408
      %v2777 = vunpack.c.0.s8 %v2776
      %v2778 = vlaneseq
      %v2779 = vshrl.u32 %v2778, 7
      %v2780 = vsub.s32 %v2777, %v2779
      %v2781 = vrot.slane %v2767, %v2780
      %v2782 = vcombine.high %v2758, 0.0
      %v2783 = vcombine.high %v2765, 0.0
      %v2784 = vcombine.high %v2774, 0.0
      %v2785 = vcombine.high %v2781, 0.0
      %v2786 = vcombine.low %v2697, %v2705
      %v2787 = vcombine.high %v2697, %v2705
      %v2789 = vunpack.c.l.s4 1983009808
      %v2790 = vunpack.c.0.s8 %v2789
      %v2791 = vlaneseq
      %v2792 = vshrl.u32 %v2791, 7
      %v2793 = vsub.s32 %v2790, %v2792
      %v2794 = vrot.slane %v2786, %v2793
      %v2796 = vunpack.c.l.s4 1983009808
      %v2797 = vunpack.c.0.s8 %v2796
      %v2798 = vlaneseq
      %v2799 = vshrl.u32 %v2798, 7
      %v2800 = vsub.s32 %v2797, %v2799
      %v2801 = vrot.slane %v2787, %v2800
      %v2802 = vcombine.low %v2701, %v2709
      %v2803 = vcombine.high %v2701, %v2709
      %v2805 = vunpack.c.l.s4 1983009808
      %v2806 = vunpack.c.0.s8 %v2805
      %v2807 = vlaneseq
      %v2808 = vshrl.u32 %v2807, 7
      %v2809 = vsub.s32 %v2806, %v2808
      %v2810 = vrot.slane %v2802, %v2809
      %v2812 = vunpack.c.l.s4 1983009808
      %v2813 = vunpack.c.0.s8 %v2812
      %v2814 = vlaneseq
      %v2815 = vshrl.u32 %v2814, 7
      %v2816 = vsub.s32 %v2813, %v2815
      %v2817 = vrot.slane %v2803, %v2816
      %v2818 = vcombine.low %v2794, %v2810
      %v2819 = vcombine.high %v2794, %v2810
      %v2821 = vunpack.c.l.s4 1934713408
      %v2822 = vunpack.c.0.s8 %v2821
      %v2823 = vlaneseq
      %v2824 = vshrl.u32 %v2823, 7
      %v2825 = vsub.s32 %v2822, %v2824
      %v2826 = vrot.slane %v2818, %v2825
      %v2828 = vunpack.c.l.s4 1934713408
      %v2829 = vunpack.c.0.s8 %v2828
      %v2830 = vlaneseq
      %v2831 = vshrl.u32 %v2830, 7
      %v2832 = vsub.s32 %v2829, %v2831
      %v2833 = vrot.slane %v2819, %v2832
      %v2834 = vcombine.low %v2801, %v2817
      %v2835 = vcombine.high %v2801, %v2817
      %v2837 = vunpack.c.l.s4 1934713408
      %v2838 = vunpack.c.0.s8 %v2837
      %v2839 = vlaneseq
      %v2840 = vshrl.u32 %v2839, 7
      %v2841 = vsub.s32 %v2838, %v2840
      %v2842 = vrot.slane %v2834, %v2841
      %v2844 = vunpack.c.l.s4 1934713408
      %v2845 = vunpack.c.0.s8 %v2844
      %v2846 = vlaneseq
      %v2847 = vshrl.u32 %v2846, 7
      %v2848 = vsub.s32 %v2845, %v2847
      %v2849 = vrot.slane %v2835, %v2848
      %v2850 = vcombine.high %v2826, 0.0
      %v2851 = vcombine.high %v2833, 0.0
      %v2852 = vcombine.high %v2842, 0.0
      %v2853 = vcombine.high %v2849, 0.0
      %2855 = vrot.lane.b32.xlu0 %v2782, 16
      %v2856 = vpop.permute.xlu0 %2855
      %2859 = vrot.lane.b32.xlu0 %v2765, 32
      %v2860 = vpop.permute.xlu0 %2859
      %2863 = vrot.lane.b32.xlu0 %v2783, 48
      %v2864 = vpop.permute.xlu0 %2863
      %2867 = vrot.lane.b32.xlu0 %v2774, 64
      %v2868 = vpop.permute.xlu0 %2867
      %2871 = vrot.lane.b32.xlu0 %v2784, 80
      %v2872 = vpop.permute.xlu0 %2871
      %2875 = vrot.lane.b32.xlu0 %v2781, 96
      %v2876 = vpop.permute.xlu0 %2875
      %2879 = vrot.lane.b32.xlu0 %v2785, 112
      %v2880 = vpop.permute.xlu0 %2879
      %2883 = vrot.lane.b32.xlu0 %v2850, 16
      %v2884 = vpop.permute.xlu0 %2883
      %2887 = vrot.lane.b32.xlu0 %v2833, 32
      %v2888 = vpop.permute.xlu0 %2887
      %2891 = vrot.lane.b32.xlu0 %v2851, 48
      %v2892 = vpop.permute.xlu0 %2891
      %2895 = vrot.lane.b32.xlu0 %v2842, 64
      %v2896 = vpop.permute.xlu0 %2895
      %2899 = vrot.lane.b32.xlu0 %v2852, 80
      %v2900 = vpop.permute.xlu0 %2899
      %2903 = vrot.lane.b32.xlu0 %v2849, 96
      %v2904 = vpop.permute.xlu0 %2903
      %2907 = vrot.lane.b32.xlu0 %v2853, 112
      %v2908 = vpop.permute.xlu0 %2907
      %v2910 = vsel %vm445, %v2758, %v2856
      %v2911 = vsel %vm447, %v2910, %v2860
      %v2912 = vsel %vm449, %v2911, %v2864
      %v2913 = vsel %vm451, %v2912, %v2868
      %v2914 = vsel %vm453, %v2913, %v2872
      %v2915 = vsel %vm455, %v2914, %v2876
      %v2916 = vsel %vm457, %v2915, %v2880
      %v2917 = vsel %vm445, %v2826, %v2884
      %v2918 = vsel %vm447, %v2917, %v2888
      %v2919 = vsel %vm449, %v2918, %v2892
      %v2920 = vsel %vm451, %v2919, %v2896
      %v2921 = vsel %vm453, %v2920, %v2900
      %v2922 = vsel %vm455, %v2921, %v2904
      %v2923 = vsel %vm457, %v2922, %v2908
      %v2925 = vsel %vm709, %v2690, 0
      %v2928 = vsel %vm709, %v2691, 0
      %v2931 = vsel %vm709, %v2692, 0
      %v2934 = vsel %vm709, %v2693, 0
      %v2937 = vsel %vm722, %v2916, 0
      %v2940 = vsel %vm722, %v2923, 0
      %2942 = vmatprep.subr.mxu0 0.0
      %2943 = vmatpush1.msra.mxu0 0.0
      %2944 = vmatprep.subr.mxu0 0.0
      %2945 = vmatpush1.msra.mxu0 0.0
      %2946 = vmatprep.subr.mxu0 0.0
      %2947 = vmatpush1.msra.mxu0 0.0
      %2948 = vmatprep.subr.mxu0 0.0
      %2949 = vmatpush1.msra.mxu0 0.0
      %2950 = vmatprep.subr.mxu0 0.0
      %2951 = vmatpush1.msra.mxu0 0.0
      %2952 = vmatprep.subr.mxu0 0.0
      %2953 = vmatpush1.msra.mxu0 0.0
      %2954 = vmatprep.subr.mxu0 0.0
      %2955 = vmatpush1.msra.mxu0 0.0
      %2956 = vmatprep.subr.mxu0 0.0
      %2957 = vmatpush1.msra.mxu0 0.0
      %2958 = vmatprep.subr.mxu0 0.0
      %2959 = vmatpush1.msra.mxu0 0.0
      %2960 = vmatprep.subr.mxu0 0.0
      %2961 = vmatpush1.msra.mxu0 0.0
      %2962 = vmatprep.subr.mxu0 0.0
      %2963 = vmatpush1.msra.mxu0 0.0
      %2964 = vmatprep.subr.mxu0 0.0
      %2965 = vmatpush1.msra.mxu0 0.0
      %2966 = vmatprep.subr.mxu0 0.0
      %2967 = vmatpush1.msra.mxu0 0.0
      %2968 = vmatprep.subr.mxu0 0.0
      %2969 = vmatpush1.msra.mxu0 0.0
      %2970 = vmatprep.subr.mxu0 0.0
      %2971 = vmatpush1.msra.mxu0 0.0
      %2972 = vmatprep.subr.mxu0 %v2940
      %2973 = vmatpush1.msra.mxu0 %v2937
      %2974 = vmatprep.subr.mxu0 0.0
      %2975 = vmatpush2.msra.mxu0 0.0
      %2976 = vmatprep.subr.mxu0 0.0
      %2977 = vmatpush2.msra.mxu0 0.0
      %2978 = vmatprep.subr.mxu0 0.0
      %2979 = vmatpush2.msra.mxu0 0.0
      %2980 = vmatprep.subr.mxu0 0.0
      %2981 = vmatpush2.msra.mxu0 0.0
      %2982 = vmatprep.subr.mxu0 0.0
      %2983 = vmatpush2.msra.mxu0 0.0
      %2984 = vmatprep.subr.mxu0 0.0
      %2985 = vmatpush2.msra.mxu0 0.0
      %2986 = vmatprep.subr.mxu0 0.0
      %2987 = vmatpush2.msra.mxu0 0.0
      %2988 = vmatprep.subr.mxu0 0.0
      %2989 = vmatpush2.msra.mxu0 0.0
      %2990 = vmatprep.subr.mxu0 0.0
      %2991 = vmatpush2.msra.mxu0 0.0
      %2992 = vmatprep.subr.mxu0 0.0
      %2993 = vmatpush2.msra.mxu0 0.0
      %2994 = vmatprep.subr.mxu0 0.0
      %2995 = vmatpush2.msra.mxu0 0.0
      %2996 = vmatprep.subr.mxu0 0.0
      %2997 = vmatpush2.msra.mxu0 0.0
      %2998 = vmatprep.subr.mxu0 0.0
      %2999 = vmatpush2.msra.mxu0 0.0
      %3000 = vmatprep.subr.mxu0 0.0
      %3001 = vmatpush2.msra.mxu0 0.0
      %3002 = vmatprep.subr.mxu0 0.0
      %3003 = vmatpush2.msra.mxu0 0.0
      %3004 = vmatprep.subr.mxu0 0.0
      %3005 = vmatpush2.msra.mxu0 0.0
      %3006 = vmatprep.mubr.f32.mxu0 0.0
      %3007 = vmatmul.mubr.f32.gmra.mxu0 %v2925
      %v3008 = vpop.f32.mrf.mxu0
      %v3009 = vadd.f32 0.0, %v3008
      %v3010 = vpop.f32.mrf.mxu0
      %v3011 = vadd.f32 0.0, %v3010
      %3012 = vmatprep.mubr.f32.mxu0 0.0
      %3013 = vmatmul.mubr.f32.gmra.mxu0 %v2928
      %v3014 = vpop.f32.mrf.mxu0
      %v3015 = vadd.f32 0.0, %v3014
      %v3016 = vpop.f32.mrf.mxu0
      %v3017 = vadd.f32 0.0, %v3016
      %3018 = vmatprep.mubr.f32.mxu0 0.0
      %3019 = vmatmul.mubr.f32.gmra.mxu0 %v2931
      %v3020 = vpop.f32.mrf.mxu0
      %v3021 = vadd.f32 0.0, %v3020
      %v3022 = vpop.f32.mrf.mxu0
      %v3023 = vadd.f32 0.0, %v3022
      %3024 = vmatprep.mubr.f32.mxu0 0.0
      %3025 = vmatmul.mubr.f32.gmra.mxu0 %v2934
      %v3026 = vpop.f32.mrf.mxu0
      %v3027 = vadd.f32 0.0, %v3026
      %v3028 = vpop.f32.mrf.mxu0
      %v3029 = vadd.f32 0.0, %v3028
      %3030 = vdwg.mxu0
      %v3031 = vadd.f32 %v2681, %v3009
      %v3032 = vadd.f32 %v2682, %v3011
      %v3033 = vadd.f32 %v2683, %v3015
      %v3034 = vadd.f32 %v2684, %v3017
      %v3035 = vadd.f32 %v2685, %v3021
      %v3036 = vadd.f32 %v2686, %v3023
      %v3037 = vadd.f32 %v2687, %v3027
      %v3038 = vadd.f32 %v2688, %v3029
      %s3039 = scalar_lea.vmem %s1, 256
      %v3040 = vld [vmem:[%s3039] sm:$0xff]
      %v3041 = vld [vmem:[%s3039 + $0x8] sm:$0xff]
      %v3042 = vld [vmem:[%s3039 + $0x10] sm:$0xff]
      %v3043 = vld [vmem:[%s3039 + $0x18] sm:$0xff]
      %3044 = vrot.lane.b32.xlu0 %v2342, 126
      %v3045 = vpop.permute.xlu0 %3044
      %3046 = vrot.lane.b32.xlu0 %v2344, 126
      %v3047 = vpop.permute.xlu0 %3046
      %3048 = vrot.lane.b32.xlu0 %v2347, 126
      %v3049 = vpop.permute.xlu0 %3048
      %3050 = vrot.lane.b32.xlu0 %v2349, 126
      %v3051 = vpop.permute.xlu0 %3050
      %3052 = vrot.lane.b32.xlu0 %v2352, 126
      %v3053 = vpop.permute.xlu0 %3052
      %3054 = vrot.lane.b32.xlu0 %v2354, 126
      %v3055 = vpop.permute.xlu0 %3054
      %3056 = vrot.lane.b32.xlu0 %v2357, 126
      %v3057 = vpop.permute.xlu0 %3056
      %3058 = vrot.lane.b32.xlu0 %v2359, 126
      %v3059 = vpop.permute.xlu0 %3058
      %v3068 = vcombine.low %v3045, %v3053
      %v3069 = vcombine.high %v3045, %v3053
      %v3071 = vunpack.c.l.s4 1983009808
      %v3072 = vunpack.c.0.s8 %v3071
      %v3073 = vlaneseq
      %v3074 = vshrl.u32 %v3073, 7
      %v3075 = vsub.s32 %v3072, %v3074
      %v3076 = vrot.slane %v3068, %v3075
      %v3078 = vunpack.c.l.s4 1983009808
      %v3079 = vunpack.c.0.s8 %v3078
      %v3080 = vlaneseq
      %v3081 = vshrl.u32 %v3080, 7
      %v3082 = vsub.s32 %v3079, %v3081
      %v3083 = vrot.slane %v3069, %v3082
      %v3084 = vcombine.low %v3049, %v3057
      %v3085 = vcombine.high %v3049, %v3057
      %v3087 = vunpack.c.l.s4 1983009808
      %v3088 = vunpack.c.0.s8 %v3087
      %v3089 = vlaneseq
      %v3090 = vshrl.u32 %v3089, 7
      %v3091 = vsub.s32 %v3088, %v3090
      %v3092 = vrot.slane %v3084, %v3091
      %v3094 = vunpack.c.l.s4 1983009808
      %v3095 = vunpack.c.0.s8 %v3094
      %v3096 = vlaneseq
      %v3097 = vshrl.u32 %v3096, 7
      %v3098 = vsub.s32 %v3095, %v3097
      %v3099 = vrot.slane %v3085, %v3098
      %v3100 = vcombine.low %v3076, %v3092
      %v3101 = vcombine.high %v3076, %v3092
      %v3103 = vunpack.c.l.s4 1934713408
      %v3104 = vunpack.c.0.s8 %v3103
      %v3105 = vlaneseq
      %v3106 = vshrl.u32 %v3105, 7
      %v3107 = vsub.s32 %v3104, %v3106
      %v3108 = vrot.slane %v3100, %v3107
      %v3110 = vunpack.c.l.s4 1934713408
      %v3111 = vunpack.c.0.s8 %v3110
      %v3112 = vlaneseq
      %v3113 = vshrl.u32 %v3112, 7
      %v3114 = vsub.s32 %v3111, %v3113
      %v3115 = vrot.slane %v3101, %v3114
      %v3116 = vcombine.low %v3083, %v3099
      %v3117 = vcombine.high %v3083, %v3099
      %v3119 = vunpack.c.l.s4 1934713408
      %v3120 = vunpack.c.0.s8 %v3119
      %v3121 = vlaneseq
      %v3122 = vshrl.u32 %v3121, 7
      %v3123 = vsub.s32 %v3120, %v3122
      %v3124 = vrot.slane %v3116, %v3123
      %v3126 = vunpack.c.l.s4 1934713408
      %v3127 = vunpack.c.0.s8 %v3126
      %v3128 = vlaneseq
      %v3129 = vshrl.u32 %v3128, 7
      %v3130 = vsub.s32 %v3127, %v3129
      %v3131 = vrot.slane %v3117, %v3130
      %v3132 = vcombine.high %v3108, 0.0
      %v3133 = vcombine.high %v3115, 0.0
      %v3134 = vcombine.high %v3124, 0.0
      %v3135 = vcombine.high %v3131, 0.0
      %v3136 = vcombine.low %v3047, %v3055
      %v3137 = vcombine.high %v3047, %v3055
      %v3139 = vunpack.c.l.s4 1983009808
      %v3140 = vunpack.c.0.s8 %v3139
      %v3141 = vlaneseq
      %v3142 = vshrl.u32 %v3141, 7
      %v3143 = vsub.s32 %v3140, %v3142
      %v3144 = vrot.slane %v3136, %v3143
      %v3146 = vunpack.c.l.s4 1983009808
      %v3147 = vunpack.c.0.s8 %v3146
      %v3148 = vlaneseq
      %v3149 = vshrl.u32 %v3148, 7
      %v3150 = vsub.s32 %v3147, %v3149
      %v3151 = vrot.slane %v3137, %v3150
      %v3152 = vcombine.low %v3051, %v3059
      %v3153 = vcombine.high %v3051, %v3059
      %v3155 = vunpack.c.l.s4 1983009808
      %v3156 = vunpack.c.0.s8 %v3155
      %v3157 = vlaneseq
      %v3158 = vshrl.u32 %v3157, 7
      %v3159 = vsub.s32 %v3156, %v3158
      %v3160 = vrot.slane %v3152, %v3159
      %v3162 = vunpack.c.l.s4 1983009808
      %v3163 = vunpack.c.0.s8 %v3162
      %v3164 = vlaneseq
      %v3165 = vshrl.u32 %v3164, 7
      %v3166 = vsub.s32 %v3163, %v3165
      %v3167 = vrot.slane %v3153, %v3166
      %v3168 = vcombine.low %v3144, %v3160
      %v3169 = vcombine.high %v3144, %v3160
      %v3171 = vunpack.c.l.s4 1934713408
      %v3172 = vunpack.c.0.s8 %v3171
      %v3173 = vlaneseq
      %v3174 = vshrl.u32 %v3173, 7
      %v3175 = vsub.s32 %v3172, %v3174
      %v3176 = vrot.slane %v3168, %v3175
      %v3178 = vunpack.c.l.s4 1934713408
      %v3179 = vunpack.c.0.s8 %v3178
      %v3180 = vlaneseq
      %v3181 = vshrl.u32 %v3180, 7
      %v3182 = vsub.s32 %v3179, %v3181
      %v3183 = vrot.slane %v3169, %v3182
      %v3184 = vcombine.low %v3151, %v3167
      %v3185 = vcombine.high %v3151, %v3167
      %v3187 = vunpack.c.l.s4 1934713408
      %v3188 = vunpack.c.0.s8 %v3187
      %v3189 = vlaneseq
      %v3190 = vshrl.u32 %v3189, 7
      %v3191 = vsub.s32 %v3188, %v3190
      %v3192 = vrot.slane %v3184, %v3191
      %v3194 = vunpack.c.l.s4 1934713408
      %v3195 = vunpack.c.0.s8 %v3194
      %v3196 = vlaneseq
      %v3197 = vshrl.u32 %v3196, 7
      %v3198 = vsub.s32 %v3195, %v3197
      %v3199 = vrot.slane %v3185, %v3198
      %v3200 = vcombine.high %v3176, 0.0
      %v3201 = vcombine.high %v3183, 0.0
      %v3202 = vcombine.high %v3192, 0.0
      %v3203 = vcombine.high %v3199, 0.0
      %3205 = vrot.lane.b32.xlu0 %v3132, 16
      %v3206 = vpop.permute.xlu0 %3205
      %3209 = vrot.lane.b32.xlu0 %v3115, 32
      %v3210 = vpop.permute.xlu0 %3209
      %3213 = vrot.lane.b32.xlu0 %v3133, 48
      %v3214 = vpop.permute.xlu0 %3213
      %3217 = vrot.lane.b32.xlu0 %v3124, 64
      %v3218 = vpop.permute.xlu0 %3217
      %3221 = vrot.lane.b32.xlu0 %v3134, 80
      %v3222 = vpop.permute.xlu0 %3221
      %3225 = vrot.lane.b32.xlu0 %v3131, 96
      %v3226 = vpop.permute.xlu0 %3225
      %3229 = vrot.lane.b32.xlu0 %v3135, 112
      %v3230 = vpop.permute.xlu0 %3229
      %3233 = vrot.lane.b32.xlu0 %v3200, 16
      %v3234 = vpop.permute.xlu0 %3233
      %3237 = vrot.lane.b32.xlu0 %v3183, 32
      %v3238 = vpop.permute.xlu0 %3237
      %3241 = vrot.lane.b32.xlu0 %v3201, 48
      %v3242 = vpop.permute.xlu0 %3241
      %3245 = vrot.lane.b32.xlu0 %v3192, 64
      %v3246 = vpop.permute.xlu0 %3245
      %3249 = vrot.lane.b32.xlu0 %v3202, 80
      %v3250 = vpop.permute.xlu0 %3249
      %3253 = vrot.lane.b32.xlu0 %v3199, 96
      %v3254 = vpop.permute.xlu0 %3253
      %3257 = vrot.lane.b32.xlu0 %v3203, 112
      %v3258 = vpop.permute.xlu0 %3257
      %v3260 = vsel %vm445, %v3108, %v3206
      %v3261 = vsel %vm447, %v3260, %v3210
      %v3262 = vsel %vm449, %v3261, %v3214
      %v3263 = vsel %vm451, %v3262, %v3218
      %v3264 = vsel %vm453, %v3263, %v3222
      %v3265 = vsel %vm455, %v3264, %v3226
      %v3266 = vsel %vm457, %v3265, %v3230
      %v3267 = vsel %vm445, %v3176, %v3234
      %v3268 = vsel %vm447, %v3267, %v3238
      %v3269 = vsel %vm449, %v3268, %v3242
      %v3270 = vsel %vm451, %v3269, %v3246
      %v3271 = vsel %vm453, %v3270, %v3250
      %v3272 = vsel %vm455, %v3271, %v3254
      %v3273 = vsel %vm457, %v3272, %v3258
      %v3275 = vsel %vm709, %v3040, 0
      %v3278 = vsel %vm709, %v3041, 0
      %v3281 = vsel %vm709, %v3042, 0
      %v3284 = vsel %vm709, %v3043, 0
      %v3287 = vsel %vm722, %v3266, 0
      %v3290 = vsel %vm722, %v3273, 0
      %3292 = vmatprep.subr.mxu0 0.0
      %3293 = vmatpush1.msra.mxu0 0.0
      %3294 = vmatprep.subr.mxu0 0.0
      %3295 = vmatpush1.msra.mxu0 0.0
      %3296 = vmatprep.subr.mxu0 0.0
      %3297 = vmatpush1.msra.mxu0 0.0
      %3298 = vmatprep.subr.mxu0 0.0
      %3299 = vmatpush1.msra.mxu0 0.0
      %3300 = vmatprep.subr.mxu0 0.0
      %3301 = vmatpush1.msra.mxu0 0.0
      %3302 = vmatprep.subr.mxu0 0.0
      %3303 = vmatpush1.msra.mxu0 0.0
      %3304 = vmatprep.subr.mxu0 0.0
      %3305 = vmatpush1.msra.mxu0 0.0
      %3306 = vmatprep.subr.mxu0 0.0
      %3307 = vmatpush1.msra.mxu0 0.0
      %3308 = vmatprep.subr.mxu0 0.0
      %3309 = vmatpush1.msra.mxu0 0.0
      %3310 = vmatprep.subr.mxu0 0.0
      %3311 = vmatpush1.msra.mxu0 0.0
      %3312 = vmatprep.subr.mxu0 0.0
      %3313 = vmatpush1.msra.mxu0 0.0
      %3314 = vmatprep.subr.mxu0 0.0
      %3315 = vmatpush1.msra.mxu0 0.0
      %3316 = vmatprep.subr.mxu0 0.0
      %3317 = vmatpush1.msra.mxu0 0.0
      %3318 = vmatprep.subr.mxu0 0.0
      %3319 = vmatpush1.msra.mxu0 0.0
      %3320 = vmatprep.subr.mxu0 0.0
      %3321 = vmatpush1.msra.mxu0 0.0
      %3322 = vmatprep.subr.mxu0 %v3290
      %3323 = vmatpush1.msra.mxu0 %v3287
      %3324 = vmatprep.subr.mxu0 0.0
      %3325 = vmatpush2.msra.mxu0 0.0
      %3326 = vmatprep.subr.mxu0 0.0
      %3327 = vmatpush2.msra.mxu0 0.0
      %3328 = vmatprep.subr.mxu0 0.0
      %3329 = vmatpush2.msra.mxu0 0.0
      %3330 = vmatprep.subr.mxu0 0.0
      %3331 = vmatpush2.msra.mxu0 0.0
      %3332 = vmatprep.subr.mxu0 0.0
      %3333 = vmatpush2.msra.mxu0 0.0
      %3334 = vmatprep.subr.mxu0 0.0
      %3335 = vmatpush2.msra.mxu0 0.0
      %3336 = vmatprep.subr.mxu0 0.0
      %3337 = vmatpush2.msra.mxu0 0.0
      %3338 = vmatprep.subr.mxu0 0.0
      %3339 = vmatpush2.msra.mxu0 0.0
      %3340 = vmatprep.subr.mxu0 0.0
      %3341 = vmatpush2.msra.mxu0 0.0
      %3342 = vmatprep.subr.mxu0 0.0
      %3343 = vmatpush2.msra.mxu0 0.0
      %3344 = vmatprep.subr.mxu0 0.0
      %3345 = vmatpush2.msra.mxu0 0.0
      %3346 = vmatprep.subr.mxu0 0.0
      %3347 = vmatpush2.msra.mxu0 0.0
      %3348 = vmatprep.subr.mxu0 0.0
      %3349 = vmatpush2.msra.mxu0 0.0
      %3350 = vmatprep.subr.mxu0 0.0
      %3351 = vmatpush2.msra.mxu0 0.0
      %3352 = vmatprep.subr.mxu0 0.0
      %3353 = vmatpush2.msra.mxu0 0.0
      %3354 = vmatprep.subr.mxu0 0.0
      %3355 = vmatpush2.msra.mxu0 0.0
      %3356 = vmatprep.mubr.f32.mxu0 0.0
      %3357 = vmatmul.mubr.f32.gmra.mxu0 %v3275
      %v3358 = vpop.f32.mrf.mxu0
      %v3359 = vadd.f32 0.0, %v3358
      %v3360 = vpop.f32.mrf.mxu0
      %v3361 = vadd.f32 0.0, %v3360
      %3362 = vmatprep.mubr.f32.mxu0 0.0
      %3363 = vmatmul.mubr.f32.gmra.mxu0 %v3278
      %v3364 = vpop.f32.mrf.mxu0
      %v3365 = vadd.f32 0.0, %v3364
      %v3366 = vpop.f32.mrf.mxu0
      %v3367 = vadd.f32 0.0, %v3366
      %3368 = vmatprep.mubr.f32.mxu0 0.0
      %3369 = vmatmul.mubr.f32.gmra.mxu0 %v3281
      %v3370 = vpop.f32.mrf.mxu0
      %v3371 = vadd.f32 0.0, %v3370
      %v3372 = vpop.f32.mrf.mxu0
      %v3373 = vadd.f32 0.0, %v3372
      %3374 = vmatprep.mubr.f32.mxu0 0.0
      %3375 = vmatmul.mubr.f32.gmra.mxu0 %v3284
      %v3376 = vpop.f32.mrf.mxu0
      %v3377 = vadd.f32 0.0, %v3376
      %v3378 = vpop.f32.mrf.mxu0
      %v3379 = vadd.f32 0.0, %v3378
      %3380 = vdwg.mxu0
      %v3381 = vadd.f32 %v3031, %v3359
      %v3382 = vadd.f32 %v3032, %v3361
      %v3383 = vadd.f32 %v3033, %v3365
      %v3384 = vadd.f32 %v3034, %v3367
      %v3385 = vadd.f32 %v3035, %v3371
      %v3386 = vadd.f32 %v3036, %v3373
      %v3387 = vadd.f32 %v3037, %v3377
      %v3388 = vadd.f32 %v3038, %v3379
      %v3389 = vld [vmem:[%s2] sm:$0xff]
      %v3390 = vld [vmem:[%s2 + $0x8] sm:$0xff]
      %v3391 = vld [vmem:[%s2 + $0x10] sm:$0xff]
      %v3392 = vld [vmem:[%s2 + $0x18] sm:$0xff]
      %3394 = vset.pattern.permute.xlu0 0
      %3395 = vperm.xlu0 %3394, %v3389
      %v3396 = vpop.permute.xlu0 %3395
      %3399 = vset.pattern.permute.xlu0 0
      %3400 = vperm.xlu0 %3399, %v3390
      %v3401 = vpop.permute.xlu0 %3400
      %3404 = vset.pattern.permute.xlu0 0
      %3405 = vperm.xlu0 %3404, %v3391
      %v3406 = vpop.permute.xlu0 %3405
      %3409 = vset.pattern.permute.xlu0 0
      %3410 = vperm.xlu0 %3409, %v3392
      %v3411 = vpop.permute.xlu0 %3410
      %v3413 = vadd.f32 %v3381, %v3396
      %v3414 = vadd.f32 %v3382, %v3396
      %v3415 = vadd.f32 %v3383, %v3401
      %v3416 = vadd.f32 %v3384, %v3401
      %v3417 = vadd.f32 %v3385, %v3406
      %v3418 = vadd.f32 %v3386, %v3406
      %v3419 = vadd.f32 %v3387, %v3411
      %v3420 = vadd.f32 %v3388, %v3411
      %v3421 = vmax.f32 %v3413, 0.0
      %v3422 = vmax.f32 %v3414, 0.0
      %v3423 = vmax.f32 %v3415, 0.0
      %v3424 = vmax.f32 %v3416, 0.0
      %v3425 = vmax.f32 %v3417, 0.0
      %v3426 = vmax.f32 %v3418, 0.0
      %v3427 = vmax.f32 %v3419, 0.0
      %v3428 = vmax.f32 %v3420, 0.0
      %v3429 = vadd.f32 %v3421, 0.0
      %v3430 = vadd.f32 %v3423, 0.0
      %v3431 = vadd.f32 %v3425, 0.0
      %v3432 = vadd.f32 %v3427, 0.0
      %v3433 = vmul.f32 %v3421, %v3421
      %v3434 = vmul.f32 %v3423, %v3423
      %v3435 = vmul.f32 %v3425, %v3425
      %v3436 = vmul.f32 %v3427, %v3427
      %v3437 = vadd.f32 %v3433, 0.0
      %v3438 = vadd.f32 %v3434, 0.0
      %v3439 = vadd.f32 %v3435, 0.0
      %v3440 = vadd.f32 %v3436, 0.0
      %v3441 = vadd.f32 %v3429, %v3422
      %v3442 = vadd.f32 %v3430, %v3424
      %v3443 = vadd.f32 %v3431, %v3426
      %v3444 = vadd.f32 %v3432, %v3428
      %v3445 = vmul.f32 %v3422, %v3422
      %v3446 = vmul.f32 %v3424, %v3424
      %v3447 = vmul.f32 %v3426, %v3426
      %v3448 = vmul.f32 %v3428, %v3428
      %v3449 = vadd.f32 %v3437, %v3445
      %v3450 = vadd.f32 %v3438, %v3446
      %v3451 = vadd.f32 %v3439, %v3447
      %v3452 = vadd.f32 %v3440, %v3448
      %v3453 = vld [vmem:[%s217] sm:$0xff]
      %v3454 = vld [vmem:[%s217 + $0x8] sm:$0xff]
      %v3455 = vld [vmem:[%s217 + $0x10] sm:$0xff]
      %v3456 = vld [vmem:[%s217 + $0x18] sm:$0xff]
      %v3457 = vadd.f32 %v3453, %v3441
      %v3458 = vadd.f32 %v3454, %v3442
      %v3459 = vadd.f32 %v3455, %v3443
      %v3460 = vadd.f32 %v3456, %v3444
      %3461 = vst [vmem:[%s217] sm:$0xff] %v3457
      %3462 = vst [vmem:[%s217 + $0x8] sm:$0xff] %v3458
      %3463 = vst [vmem:[%s217 + $0x10] sm:$0xff] %v3459
      %3464 = vst [vmem:[%s217 + $0x18] sm:$0xff] %v3460
      %v3465 = vld [vmem:[%s222] sm:$0xff]
      %v3466 = vld [vmem:[%s222 + $0x8] sm:$0xff]
      %v3467 = vld [vmem:[%s222 + $0x10] sm:$0xff]
      %v3468 = vld [vmem:[%s222 + $0x18] sm:$0xff]
      %v3469 = vadd.f32 %v3465, %v3449
      %v3470 = vadd.f32 %v3466, %v3450
      %v3471 = vadd.f32 %v3467, %v3451
      %v3472 = vadd.f32 %v3468, %v3452
      %3473 = vst [vmem:[%s222] sm:$0xff] %v3469
      %3474 = vst [vmem:[%s222 + $0x8] sm:$0xff] %v3470
      %3475 = vst [vmem:[%s222 + $0x10] sm:$0xff] %v3471
      %3476 = vst [vmem:[%s222 + $0x18] sm:$0xff] %v3472
      %p3477 = scmp.lt.s32.totalorder %s20, 1
      %s3478 = scalar_select %p3477, %s20, 1
      %s3479 = smul.addr %s3478, 4
      %s3480 = smul.addr %s3479, 8
      %s3481 = scalar_lea.vmem %s3, %s3480
      %p3482 = scmp.lt.s32.totalorder %s20, 1
      %s3483 = scalar_select %p3482, %s20, 1
      %s3484 = smul.addr %s3483, 4
      %s3485 = smul.addr %s3484, 8
      %s3486 = scalar_lea.vmem %s4, %s3485
      // Predicated region
      $region37: #{conv_transpose_block.2} parent=31 // pred_check
        %p3487 = pneg %p114
      $region38: #{conv_transpose_block.2} parent=31 // pred_check_branch
        %3489 = sbr.rel (%p3487) target = $region40
      $region39: #{conv_transpose_block.2} parent=31 // pred_region
        _
      $region40: #{conv_transpose_block.2} parent=31 // pred_fallthru
        _
      // Predicated region
      $region41: #{conv_transpose_block.2} parent=31 // pred_check
        %p3490 = pneg %p140
      $region42: #{conv_transpose_block.2} parent=31 // pred_check_branch
        %3492 = sbr.rel (%p3490) target = $region44
      $region43: #{conv_transpose_block.2} parent=31 // pred_region
        _
      $region44: #{conv_transpose_block.2} parent=31 // pred_fallthru
        _
    $region32: #{conv_transpose_block.2} parent=5 // pred_fallthru
      _
    %p3493 = scmp.le.s32.totalorder 2, %s11
    // Predicated region
    $region45: #{conv_transpose_block.2} parent=5 // pred_check
      %p3494 = pneg %p3493
    $region46: #{conv_transpose_block.2} parent=5 // pred_check_branch
      %3496 = sbr.rel (%p3494) target = $region48
    $region47: #{conv_transpose_block.2} parent=5 // pred_region
      %s3497 = ssub.s32 %s11, 2
      // Predicated region
      $region49: #{conv_transpose_block.2} parent=47 // pred_check
        %p3498 = pneg %p120
      $region50: #{conv_transpose_block.2} parent=47 // pred_check_branch
        %3500 = sbr.rel (%p3498) target = $region52
      $region51: #{conv_transpose_block.2} parent=47 // pred_region
        %p3501 = scmp.lt.s32.totalorder %s22, 1
        %s3502 = scalar_select %p3501, %s22, 1
        %s3503 = smul.addr %s3502, 4
        %s3504 = smul.addr %s3503, 8
        %s3505 = scalar_lea.vmem %s3, %s3504
      $region52: #{conv_transpose_block.2} parent=47 // pred_fallthru
        _
      // Predicated region
      $region53: #{conv_transpose_block.2} parent=47 // pred_check
        %p3506 = pneg %p146
      $region54: #{conv_transpose_block.2} parent=47 // pred_check_branch
        %3508 = sbr.rel (%p3506) target = $region56
      $region55: #{conv_transpose_block.2} parent=47 // pred_region
        %p3509 = scmp.lt.s32.totalorder %s22, 1
        %s3510 = scalar_select %p3509, %s22, 1
        %s3511 = smul.addr %s3510, 4
        %s3512 = smul.addr %s3511, 8
        %s3513 = scalar_lea.vmem %s4, %s3512
      $region56: #{conv_transpose_block.2} parent=47 // pred_fallthru
        _
    $region48: #{conv_transpose_block.2} parent=5 // pred_fallthru
      _
  $region6: #{conv_transpose_block.2} parent=0 // loop_footer
    %s15 = sadd.s32 1, %s11
  $region7: #{conv_transpose_block.2} parent=0 // loop_footer_branch
    %10 = sbr.rel target = $region3
  $region8: #{conv_transpose_block.2} parent=0 // loop_exit
    _

</llo_original>
